<compile_context>
chip_gen: v5e
topology: v5e:2x2
jax: 0.10.0
libtpu: 0.0.40
codegen_flags: <defaults>
</compile_context>

<pallas_src>
import functools

import jax
import jax.numpy as jnp
from jax.experimental import pallas as pl
from jax.experimental.pallas import tpu as pltpu

BN_EPS = 1e-5
_NEG = -1e30  # additive stand-in for -inf padding in the maxpool


# --------------------------------------------------------------------------
# Pass 1: fused convolutions (ops 1-4 as one matmul) + maxpool branch,
#         plus per-tile partial BN statistics (sum / sum-of-squares).
# --------------------------------------------------------------------------
def _pass1_kernel(cin, cout, slab_ref, bias_ref, wf_ref, wpool_ref,
                  y_ref, stats_ref):
    slab = slab_ref[...]                                   # (TM, 25*cin) bf16

    # ops 1-4 in a single MXU push chain: K = 25*cin, N = 4*cout
    y14 = jnp.dot(slab, wf_ref[...],
                  preferred_element_type=jnp.float32)      # (TM, 4*cout) f32

    # op5: maxpool 3x3 (stride 1, -inf padding) over the centre 3x3 taps
    centre_taps = (6, 7, 8, 11, 12, 13, 16, 17, 18)        # (dy+1)*5 + (dx+1)
    mp = None
    for j, t in enumerate(centre_taps):
        v = slab[:, t * cin:(t + 1) * cin].astype(jnp.float32) \
            + bias_ref[:, j:j + 1]                         # -1e30 where OOB
        mp = v if mp is None else jnp.maximum(mp, v)
    y5 = jnp.dot(mp, wpool_ref[...],
                 preferred_element_type=jnp.float32)       # (TM, cout)

    y = jnp.concatenate([y14, y5], axis=-1)                # (TM, 5*cout)
    y_ref[...] = y

    # one-pass partial stats for the (global batch) BatchNorms
    s = jnp.sum(y, axis=0, keepdims=True)                  # (1, 5*cout)
    ss = jnp.sum(y * y, axis=0, keepdims=True)             # (1, 5*cout)
    row = jax.lax.broadcasted_iota(jnp.int32, (stats_ref.shape[0], 1), 0)
    stats_ref[...] = jnp.where(row == 0, s, jnp.where(row == 1, ss, 0.0))


# --------------------------------------------------------------------------
# Pass 2: BN normalize (with global stats folded into scale/shift), ReLU for
#         ops 1-3, softmax-weighted mix (softmax folded into scale/shift).
# --------------------------------------------------------------------------
def _pass2_kernel(cout, y_ref, scale_ref, shift_ref, out_ref):
    z = y_ref[...] * scale_ref[...] + shift_ref[...]       # (TM, 5*cout)
    col = jax.lax.broadcasted_iota(jnp.int32, z.shape, 1)
    # ReLU only on ops 1-3 (softmax weights > 0, so w*relu(x) == relu(w*x))
    z = jnp.where(col < 3 * cout, jnp.maximum(z, 0.0), z)
    acc = z[:, 0:cout]
    for i in range(1, 5):
        acc = acc + z[:, i * cout:(i + 1) * cout]
    out_ref[...] = acc


def _row_tile(nrows, cap=1024):
    """Largest multiple-of-8 divisor of nrows (<= cap) giving >= 2 tiles.

    Per-tile working set here is tiny (<1 MiB double-buffered even at 2048
    rows), so this comfortably fits v7x's 64 MiB VMEM as well as v5e/v6e.
    """
    start = min(cap, nrows)
    start -= start % 8
    for t in range(start, 7, -8):
        if nrows % t == 0 and nrows // t >= 2:
            return t
    return nrows


@jax.jit
def darts_cell_forward(x_nchw, params):
    N, Cin, H, W = x_nchw.shape
    Cout = params["w_pw1"].shape[1]
    nhw = N * H * W
    x = jnp.transpose(x_nchw, (0, 2, 3, 1)).astype(jnp.float32)   # NHWC

    # ---- de-duplicated 25-tap slab (5x5, zero pad 2), tap-major lanes ------
    xp = jnp.pad(x, ((0, 0), (2, 2), (2, 2), (0, 0)))
    cols = [xp[:, dy:dy + H, dx:dx + W, :].reshape(nhw, Cin)
            for dy in range(5) for dx in range(5)]
    slab = jnp.concatenate(cols, axis=-1).astype(jnp.bfloat16)    # (NHW, 100)

    # ---- additive -inf mask for maxpool's out-of-bounds 3x3 taps -----------
    hh, ww = jnp.arange(H), jnp.arange(W)
    masks = []
    for dy in (-1, 0, 1):
        for dx in (-1, 0, 1):
            vh = (hh + dy >= 0) & (hh + dy < H)
            vw = (ww + dx >= 0) & (ww + dx < W)
            masks.append(vh[:, None] & vw[None, :])
    valid = jnp.stack(masks, axis=-1)                             # (H, W, 9)
    mp_bias = jnp.where(valid, 0.0, _NEG).astype(jnp.float32)
    mp_bias = jnp.broadcast_to(mp_bias[None], (N, H, W, 9)).reshape(nhw, 9)

    # ---- block-structured fused weight for ops 1-4: (25*Cin, 4*Cout) -------
    wf = jnp.zeros((25 * Cin, 4 * Cout), jnp.float32)
    for dy in range(3):                      # op1: depthwise 3x3 * pointwise
        for dx in range(3):
            t = (dy + 1) * 5 + (dx + 1)
            blk = params["w_dw3"][dy * 3 + dx, 0, :, None] * params["w_pw1"]
            wf = wf.at[t * Cin:(t + 1) * Cin, 0:Cout].set(blk)
    for t in range(25):                      # op2: depthwise 5x5 * pointwise
        blk = params["w_dw5"][t, 0, :, None] * params["w_pw2"]
        wf = wf.at[t * Cin:(t + 1) * Cin, Cout:2 * Cout].set(blk)
    for dy in range(3):                      # op3: 3x3 conv, dilation 2
        for dx in range(3):
            t = (2 * dy) * 5 + (2 * dx)
            wf = wf.at[t * Cin:(t + 1) * Cin, 2 * Cout:3 * Cout].set(
                params["w_dil"][dy * 3 + dx])
    wf = wf.at[12 * Cin:13 * Cin, 3 * Cout:4 * Cout].set(params["w_skip"])
    wf = wf.astype(jnp.bfloat16)             # op4: 1x1 conv == centre tap

    tm = _row_tile(nhw)
    ntiles = nhw // tm
    cparams = pltpu.CompilerParams(dimension_semantics=("parallel",),
                                   vmem_limit_bytes=32 * 1024 * 1024)

    # ---- pass 1: convs + maxpool + partial BN stats ------------------------
    y_pre, stats = pl.pallas_call(
        functools.partial(_pass1_kernel, Cin, Cout),
        out_shape=(jax.ShapeDtypeStruct((nhw, 5 * Cout), jnp.float32),
                   jax.ShapeDtypeStruct((ntiles * 8, 5 * Cout), jnp.float32)),
        grid=(ntiles,),
        in_specs=[pl.BlockSpec((tm, 25 * Cin), lambda i: (i, 0)),
                  pl.BlockSpec((tm, 9), lambda i: (i, 0)),
                  pl.BlockSpec((25 * Cin, 4 * Cout), lambda i: (0, 0)),
                  pl.BlockSpec((Cin, Cout), lambda i: (0, 0))],
        out_specs=(pl.BlockSpec((tm, 5 * Cout), lambda i: (i, 0)),
                   pl.BlockSpec((8, 5 * Cout), lambda i: (i, 0))),
        compiler_params=cparams,
    )(slab, mp_bias, wf, params["w_pool"].astype(jnp.float32))

    # ---- finalize stats + fold BN affine and softmax into scale/shift ------
    st = stats.reshape(ntiles, 8, 5 * Cout)
    s_sum = jnp.sum(st[:, 0, :], axis=0)
    s_sq = jnp.sum(st[:, 1, :], axis=0)
    mean = s_sum / nhw
    var = jnp.maximum(s_sq / nhw - mean * mean, 0.0)   # biased var (train mode)
    gamma = params["bn_gamma"].reshape(-1)             # (5*Cout,)
    beta = params["bn_beta"].reshape(-1)
    bn_scale = gamma * jax.lax.rsqrt(var + BN_EPS)
    bn_shift = beta - mean * bn_scale
    sm = jax.nn.softmax(params["alpha"])               # 5 scalars, done in glue
    sm_cat = jnp.repeat(sm, Cout)
    scale = (bn_scale * sm_cat).reshape(1, 5 * Cout)
    shift = (bn_shift * sm_cat).reshape(1, 5 * Cout)

    # ---- pass 2: normalize + ReLU(ops 1-3) + weighted mix ------------------
    out = pl.pallas_call(
        functools.partial(_pass2_kernel, Cout),
        out_shape=jax.ShapeDtypeStruct((nhw, Cout), jnp.float32),
        grid=(ntiles,),
        in_specs=[pl.BlockSpec((tm, 5 * Cout), lambda i: (i, 0)),
                  pl.BlockSpec((1, 5 * Cout), lambda i: (0, 0)),
                  pl.BlockSpec((1, 5 * Cout), lambda i: (0, 0))],
        out_specs=pl.BlockSpec((tm, Cout), lambda i: (i, 0)),
        compiler_params=cparams,
    )(y_pre, scale, shift)

    return jnp.transpose(out.reshape(N, H, W, Cout), (0, 3, 1, 2))   # NCHW


# --------------------------------------------------------------------------
# Pure-JAX (XLA) reference mirroring the PyTorch module, for a sanity check.
# --------------------------------------------------------------------------
@jax.jit
def _reference_forward(x, p):
    def conv(x, w, pad, dil=1, groups=1):
        return jax.lax.conv_general_dilated(
            x, w, window_strides=(1, 1), padding=[(pad, pad), (pad, pad)],
            rhs_dilation=(dil, dil),
            dimension_numbers=("NCHW", "OIHW", "NCHW"),
            feature_group_count=groups)

    def bn(y, g, b):
        m = jnp.mean(y, axis=(0, 2, 3), keepdims=True)
        v = jnp.mean((y - m) ** 2, axis=(0, 2, 3), keepdims=True)
        return ((y - m) * jax.lax.rsqrt(v + BN_EPS) * g[None, :, None, None]
                + b[None, :, None, None])

    cin, cout = x.shape[1], p["w_pw1"].shape[1]
    w_dw3 = p["w_dw3"].reshape(3, 3, 1, cin).transpose(3, 2, 0, 1)
    w_dw5 = p["w_dw5"].reshape(5, 5, 1, cin).transpose(3, 2, 0, 1)
    w_dil = p["w_dil"].reshape(3, 3, cin, cout).transpose(3, 2, 0, 1)
    pw = lambda w: w.T[:, :, None, None]

    y1 = jax.nn.relu(bn(conv(conv(x, w_dw3, 1, groups=cin), pw(p["w_pw1"]), 0),
                        p["bn_gamma"][0], p["bn_beta"][0]))
    y2 = jax.nn.relu(bn(conv(conv(x, w_dw5, 2, groups=cin), pw(p["w_pw2"]), 0),
                        p["bn_gamma"][1], p["bn_beta"][1]))
    y3 = jax.nn.relu(bn(conv(x, w_dil, 2, dil=2),
                        p["bn_gamma"][2], p["bn_beta"][2]))
    y4 = bn(conv(x, pw(p["w_skip"]), 0), p["bn_gamma"][3], p["bn_beta"][3])
    mp = jax.lax.reduce_window(x, -jnp.inf, jax.lax.max, (1, 1, 3, 3),
                               (1, 1, 1, 1),
                               [(0, 0), (0, 0), (1, 1), (1, 1)])
    y5 = bn(conv(mp, pw(p["w_pool"]), 0), p["bn_gamma"][4], p["bn_beta"][4])
    sm = jax.nn.softmax(p["alpha"])
    return sm[0] * y1 + sm[1] * y2 + sm[2] * y3 + sm[3] * y4 + sm[4] * y5


def init_params(key, cin, cout):
    ks = jax.random.split(key, 8)
    s = 0.1
    return {
        # depthwise weights, tap-major: [dy*k+dx, 0, c] == torch_w[c, 0, dy, dx]
        "w_dw3": s * jax.random.normal(ks[0], (9, 1, cin), jnp.float32),
        "w_dw5": s * jax.random.normal(ks[1], (25, 1, cin), jnp.float32),
        # dilated 3x3: [dy*3+dx, i, o] == torch_w[o, i, dy, dx]
        "w_dil": s * jax.random.normal(ks[2], (9, cin, cout), jnp.float32),
        # 1x1 convs: [i, o] == torch_w[o, i, 0, 0]
        "w_pw1": s * jax.random.normal(ks[3], (cin, cout), jnp.float32),
        "w_pw2": s * jax.random.normal(ks[4], (cin, cout), jnp.float32),
        "w_skip": s * jax.random.normal(ks[5], (cin, cout), jnp.float32),
        "w_pool": s * jax.random.normal(ks[6], (cin, cout), jnp.float32),
        # BatchNorm affine (torch init: weight=1, bias=0), one row per BN
        "bn_gamma": jnp.ones((5, cout), jnp.float32),
        "bn_beta": jnp.zeros((5, cout), jnp.float32),
        # architecture logits (torch.randn(5))
        "alpha": jax.random.normal(ks[7], (5,), jnp.float32),
    }


if __name__ == "__main__":
    key = jax.random.PRNGKey(0)
    kx, kp = jax.random.split(key)

    N, Cin, H, W, Cout = 2, 4, 16, 16, 8
    x = jax.random.normal(kx, (N, Cin, H, W), jnp.float32)
    params = init_params(kp, Cin, Cout)

    y = jax.block_until_ready(darts_cell_forward(x, params))
    assert y.shape == (N, Cout, H, W), y.shape
    assert bool(jnp.all(jnp.isfinite(y)))

    # loose tolerance: kernel runs the big matmul in bf16 (f32 accumulation)
    y_ref = jax.block_until_ready(_reference_forward(x, params))
    err = float(jnp.max(jnp.abs(y - y_ref)))
    assert err < 0.2, f"mismatch vs reference: max abs err {err}"

    print("KERNEL_OK")
</pallas_src>

<mosaic_0001>
module attributes {stable_mosaic.version = 11 : i64} {
  func.func @_pass1_kernel(%arg0: i32, %arg1: memref<256x100xbf16, #tpu.memory_space<vmem>>, %arg2: memref<256x9xf32, #tpu.memory_space<vmem>>, %arg3: memref<100x32xbf16, #tpu.memory_space<vmem>>, %arg4: memref<4x8xf32, #tpu.memory_space<vmem>>, %arg5: memref<256x40xf32, #tpu.memory_space<vmem>>, %arg6: memref<8x40xf32, #tpu.memory_space<vmem>>) attributes {dimension_semantics = [#tpu.dimension_semantics<parallel>], iteration_bounds = array<i64: 2>, scalar_prefetch = 0 : i64, scratch_operands = 0 : i64, tpu.core_type = #tpu.core_type<tc>, window_params = [{transform_indices = @transform_0, window_bounds = array<i64: 256, 100>}, {transform_indices = @transform_1, window_bounds = array<i64: 256, 9>}, {pipeline_mode = #tpu.pipeline_mode<synchronous>, transform_indices = @transform_2, window_bounds = array<i64: 100, 32>}, {pipeline_mode = #tpu.pipeline_mode<synchronous>, transform_indices = @transform_3, window_bounds = array<i64: 4, 8>}, {transform_indices = @transform_4, window_bounds = array<i64: 256, 40>}, {transform_indices = @transform_5, window_bounds = array<i64: 8, 40>}]} {
    %c0 = arith.constant 0 : index
    %c0_0 = arith.constant 0 : index
    %0 = vector.load %arg1[%c0, %c0_0] : memref<256x100xbf16, #tpu.memory_space<vmem>>, vector<256x100xbf16>
    %c0_1 = arith.constant 0 : index
    %c0_2 = arith.constant 0 : index
    %1 = vector.load %arg3[%c0_1, %c0_2] : memref<100x32xbf16, #tpu.memory_space<vmem>>, vector<100x32xbf16>
    %cst = arith.constant dense<0.000000e+00> : vector<256x32xf32>
    %2 = tpu.matmul %0, %1, %cst {dimension_numbers = #tpu.dot_dimension_numbers<[1], [0], [0], [1], [0, 0, 1, 1], [], []>} : vector<256x100xbf16>, vector<100x32xbf16>, vector<256x32xf32> -> vector<256x32xf32>
    %3 = vector.extract_strided_slice %0 {offsets = [0, 24], sizes = [256, 4], strides = [1, 1]} : vector<256x100xbf16> to vector<256x4xbf16>
    %4 = arith.extf %3 : vector<256x4xbf16> to vector<256x4xf32>
    %c0_3 = arith.constant 0 : index
    %c0_4 = arith.constant 0 : index
    %5 = vector.load %arg2[%c0_3, %c0_4] : memref<256x9xf32, #tpu.memory_space<vmem>>, vector<256x1xf32>
    %6 = vector.broadcast %5 : vector<256x1xf32> to vector<256x4xf32>
    %7 = arith.addf %4, %6 : vector<256x4xf32>
    %8 = vector.extract_strided_slice %0 {offsets = [0, 28], sizes = [256, 4], strides = [1, 1]} : vector<256x100xbf16> to vector<256x4xbf16>
    %9 = arith.extf %8 : vector<256x4xbf16> to vector<256x4xf32>
    %c0_5 = arith.constant 0 : index
    %c1 = arith.constant 1 : index
    %10 = vector.load %arg2[%c0_5, %c1] : memref<256x9xf32, #tpu.memory_space<vmem>>, vector<256x1xf32>
    %11 = vector.broadcast %10 : vector<256x1xf32> to vector<256x4xf32>
    %12 = arith.addf %9, %11 : vector<256x4xf32>
    %13 = arith.maximumf %7, %12 : vector<256x4xf32>
    %14 = vector.extract_strided_slice %0 {offsets = [0, 32], sizes = [256, 4], strides = [1, 1]} : vector<256x100xbf16> to vector<256x4xbf16>
    %15 = arith.extf %14 : vector<256x4xbf16> to vector<256x4xf32>
    %c0_6 = arith.constant 0 : index
    %c2 = arith.constant 2 : index
    %16 = vector.load %arg2[%c0_6, %c2] : memref<256x9xf32, #tpu.memory_space<vmem>>, vector<256x1xf32>
    %17 = vector.broadcast %16 : vector<256x1xf32> to vector<256x4xf32>
    %18 = arith.addf %15, %17 : vector<256x4xf32>
    %19 = arith.maximumf %13, %18 : vector<256x4xf32>
    %20 = vector.extract_strided_slice %0 {offsets = [0, 44], sizes = [256, 4], strides = [1, 1]} : vector<256x100xbf16> to vector<256x4xbf16>
    %21 = arith.extf %20 : vector<256x4xbf16> to vector<256x4xf32>
    %c0_7 = arith.constant 0 : index
    %c3 = arith.constant 3 : index
    %22 = vector.load %arg2[%c0_7, %c3] : memref<256x9xf32, #tpu.memory_space<vmem>>, vector<256x1xf32>
    %23 = vector.broadcast %22 : vector<256x1xf32> to vector<256x4xf32>
    %24 = arith.addf %21, %23 : vector<256x4xf32>
    %25 = arith.maximumf %19, %24 : vector<256x4xf32>
    %26 = vector.extract_strided_slice %0 {offsets = [0, 48], sizes = [256, 4], strides = [1, 1]} : vector<256x100xbf16> to vector<256x4xbf16>
    %27 = arith.extf %26 : vector<256x4xbf16> to vector<256x4xf32>
    %c0_8 = arith.constant 0 : index
    %c4 = arith.constant 4 : index
    %28 = vector.load %arg2[%c0_8, %c4] : memref<256x9xf32, #tpu.memory_space<vmem>>, vector<256x1xf32>
    %29 = vector.broadcast %28 : vector<256x1xf32> to vector<256x4xf32>
    %30 = arith.addf %27, %29 : vector<256x4xf32>
    %31 = arith.maximumf %25, %30 : vector<256x4xf32>
    %32 = vector.extract_strided_slice %0 {offsets = [0, 52], sizes = [256, 4], strides = [1, 1]} : vector<256x100xbf16> to vector<256x4xbf16>
    %33 = arith.extf %32 : vector<256x4xbf16> to vector<256x4xf32>
    %c0_9 = arith.constant 0 : index
    %c5 = arith.constant 5 : index
    %34 = vector.load %arg2[%c0_9, %c5] : memref<256x9xf32, #tpu.memory_space<vmem>>, vector<256x1xf32>
    %35 = vector.broadcast %34 : vector<256x1xf32> to vector<256x4xf32>
    %36 = arith.addf %33, %35 : vector<256x4xf32>
    %37 = arith.maximumf %31, %36 : vector<256x4xf32>
    %38 = vector.extract_strided_slice %0 {offsets = [0, 64], sizes = [256, 4], strides = [1, 1]} : vector<256x100xbf16> to vector<256x4xbf16>
    %39 = arith.extf %38 : vector<256x4xbf16> to vector<256x4xf32>
    %c0_10 = arith.constant 0 : index
    %c6 = arith.constant 6 : index
    %40 = vector.load %arg2[%c0_10, %c6] : memref<256x9xf32, #tpu.memory_space<vmem>>, vector<256x1xf32>
    %41 = vector.broadcast %40 : vector<256x1xf32> to vector<256x4xf32>
    %42 = arith.addf %39, %41 : vector<256x4xf32>
    %43 = arith.maximumf %37, %42 : vector<256x4xf32>
    %44 = vector.extract_strided_slice %0 {offsets = [0, 68], sizes = [256, 4], strides = [1, 1]} : vector<256x100xbf16> to vector<256x4xbf16>
    %45 = arith.extf %44 : vector<256x4xbf16> to vector<256x4xf32>
    %c0_11 = arith.constant 0 : index
    %c7 = arith.constant 7 : index
    %46 = vector.load %arg2[%c0_11, %c7] : memref<256x9xf32, #tpu.memory_space<vmem>>, vector<256x1xf32>
    %47 = vector.broadcast %46 : vector<256x1xf32> to vector<256x4xf32>
    %48 = arith.addf %45, %47 : vector<256x4xf32>
    %49 = arith.maximumf %43, %48 : vector<256x4xf32>
    %50 = vector.extract_strided_slice %0 {offsets = [0, 72], sizes = [256, 4], strides = [1, 1]} : vector<256x100xbf16> to vector<256x4xbf16>
    %51 = arith.extf %50 : vector<256x4xbf16> to vector<256x4xf32>
    %c0_12 = arith.constant 0 : index
    %c8 = arith.constant 8 : index
    %52 = vector.load %arg2[%c0_12, %c8] : memref<256x9xf32, #tpu.memory_space<vmem>>, vector<256x1xf32>
    %53 = vector.broadcast %52 : vector<256x1xf32> to vector<256x4xf32>
    %54 = arith.addf %51, %53 : vector<256x4xf32>
    %55 = arith.maximumf %49, %54 : vector<256x4xf32>
    %c0_13 = arith.constant 0 : index
    %c0_14 = arith.constant 0 : index
    %56 = vector.load %arg4[%c0_13, %c0_14] : memref<4x8xf32, #tpu.memory_space<vmem>>, vector<4x8xf32>
    %cst_15 = arith.constant dense<0.000000e+00> : vector<256x8xf32>
    %57 = tpu.matmul %55, %56, %cst_15 {dimension_numbers = #tpu.dot_dimension_numbers<[1], [0], [0], [1], [0, 0, 1, 1], [], []>} : vector<256x4xf32>, vector<4x8xf32>, vector<256x8xf32> -> vector<256x8xf32>
    %58 = tpu.concatenate %2, %57 in 1 : vector<256x32xf32>, vector<256x8xf32> -> vector<256x40xf32>
    %c0_16 = arith.constant 0 : index
    %c0_17 = arith.constant 0 : index
    %59 = vector.load %arg5[%c0_16, %c0_17] : memref<256x40xf32, #tpu.memory_space<vmem>>, vector<256x40xf32>
    tpu.vector_store %arg5[%c0_16, %c0_17], %58 {strides = array<i32>} : memref<256x40xf32, #tpu.memory_space<vmem>>, vector<256x40xf32>,
    %cst_18 = arith.constant dense<0.000000e+00> : vector<40xf32>
    %60 = vector.multi_reduction <add>, %58, %cst_18 [0] : vector<256x40xf32> to vector<40xf32>
    %61 = vector.shape_cast %60 : vector<40xf32> to vector<1x40xf32>
    %62 = arith.mulf %58, %58 : vector<256x40xf32>
    %cst_19 = arith.constant dense<0.000000e+00> : vector<40xf32>
    %63 = vector.multi_reduction <add>, %62, %cst_19 [0] : vector<256x40xf32> to vector<40xf32>
    %64 = vector.shape_cast %63 : vector<40xf32> to vector<1x40xf32>
    %65 = tpu.iota {dimensions = array<i32: 0>} : vector<8x1xi32>
    %c0_i32 = arith.constant 0 : i32
    %66 = vector.broadcast %c0_i32 : i32 to vector<8x1xi32>
    %67 = arith.cmpi eq, %65, %66 : vector<8x1xi32>
    %c1_i32 = arith.constant 1 : i32
    %68 = vector.broadcast %c1_i32 : i32 to vector<8x1xi32>
    %69 = arith.cmpi eq, %65, %68 : vector<8x1xi32>
    %cst_20 = arith.constant 0.000000e+00 : f32
    %70 = vector.shape_cast %69 : vector<8x1xi1> to vector<8x1xi1>
    %71 = vector.broadcast %70 : vector<8x1xi1> to vector<8x40xi1>
    %72 = vector.shape_cast %64 : vector<1x40xf32> to vector<1x40xf32>
    %73 = vector.broadcast %72 : vector<1x40xf32> to vector<8x40xf32>
    %74 = vector.broadcast %cst_20 : f32 to vector<8x40xf32>
    %75 = arith.select %71, %73, %74 : vector<8x40xi1>, vector<8x40xf32>
    %76 = vector.shape_cast %67 : vector<8x1xi1> to vector<8x1xi1>
    %77 = vector.broadcast %76 : vector<8x1xi1> to vector<8x40xi1>
    %78 = vector.shape_cast %61 : vector<1x40xf32> to vector<1x40xf32>
    %79 = vector.broadcast %78 : vector<1x40xf32> to vector<8x40xf32>
    %80 = arith.select %77, %79, %75 : vector<8x40xi1>, vector<8x40xf32>
    %c0_21 = arith.constant 0 : index
    %c0_22 = arith.constant 0 : index
    %81 = vector.load %arg6[%c0_21, %c0_22] : memref<8x40xf32, #tpu.memory_space<vmem>>, vector<8x40xf32>
    tpu.vector_store %arg6[%c0_21, %c0_22], %80 {strides = array<i32>} : memref<8x40xf32, #tpu.memory_space<vmem>>, vector<8x40xf32>,
    return
  }
  func.func @transform_0(%arg0: i32) -> (i32, i32) {
    %c0_i32 = arith.constant 0 : i32
    %c0_i32_0 = arith.constant 0 : i32
    return %arg0, %c0_i32 : i32, i32
  }
  func.func @transform_1(%arg0: i32) -> (i32, i32) {
    %c0_i32 = arith.constant 0 : i32
    %c0_i32_0 = arith.constant 0 : i32
    return %arg0, %c0_i32 : i32, i32
  }
  func.func @transform_2(%arg0: i32) -> (i32, i32) {
    %c0_i32 = arith.constant 0 : i32
    %c0_i32_0 = arith.constant 0 : i32
    %c0_i32_1 = arith.constant 0 : i32
    return %c0_i32, %c0_i32_0 : i32, i32
  }
  func.func @transform_3(%arg0: i32) -> (i32, i32) {
    %c0_i32 = arith.constant 0 : i32
    %c0_i32_0 = arith.constant 0 : i32
    %c0_i32_1 = arith.constant 0 : i32
    return %c0_i32, %c0_i32_0 : i32, i32
  }
  func.func @transform_4(%arg0: i32) -> (i32, i32) {
    %c0_i32 = arith.constant 0 : i32
    %c0_i32_0 = arith.constant 0 : i32
    return %arg0, %c0_i32 : i32, i32
  }
  func.func @transform_5(%arg0: i32) -> (i32, i32) {
    %c0_i32 = arith.constant 0 : i32
    %c0_i32_0 = arith.constant 0 : i32
    return %arg0, %c0_i32 : i32, i32
  }
}

module attributes {stable_mosaic.version = 11 : i64} {
  func.func @_pass2_kernel(%arg0: i32, %arg1: memref<256x40xf32, #tpu.memory_space<vmem>>, %arg2: memref<1x40xf32, #tpu.memory_space<vmem>>, %arg3: memref<1x40xf32, #tpu.memory_space<vmem>>, %arg4: memref<256x8xf32, #tpu.memory_space<vmem>>) attributes {dimension_semantics = [#tpu.dimension_semantics<parallel>], iteration_bounds = array<i64: 2>, scalar_prefetch = 0 : i64, scratch_operands = 0 : i64, tpu.core_type = #tpu.core_type<tc>, window_params = [{transform_indices = @transform_0, window_bounds = array<i64: 256, 40>}, {pipeline_mode = #tpu.pipeline_mode<synchronous>, transform_indices = @transform_1, window_bounds = array<i64: 1, 40>}, {pipeline_mode = #tpu.pipeline_mode<synchronous>, transform_indices = @transform_2, window_bounds = array<i64: 1, 40>}, {transform_indices = @transform_3, window_bounds = array<i64: 256, 8>}]} {
    %c0 = arith.constant 0 : index
    %c0_0 = arith.constant 0 : index
    %0 = vector.load %arg1[%c0, %c0_0] : memref<256x40xf32, #tpu.memory_space<vmem>>, vector<256x40xf32>
    %c0_1 = arith.constant 0 : index
    %c0_2 = arith.constant 0 : index
    %1 = vector.load %arg2[%c0_1, %c0_2] : memref<1x40xf32, #tpu.memory_space<vmem>>, vector<1x40xf32>
    %2 = vector.broadcast %1 : vector<1x40xf32> to vector<256x40xf32>
    %3 = arith.mulf %0, %2 : vector<256x40xf32>
    %c0_3 = arith.constant 0 : index
    %c0_4 = arith.constant 0 : index
    %4 = vector.load %arg3[%c0_3, %c0_4] : memref<1x40xf32, #tpu.memory_space<vmem>>, vector<1x40xf32>
    %5 = vector.broadcast %4 : vector<1x40xf32> to vector<256x40xf32>
    %6 = arith.addf %3, %5 : vector<256x40xf32>
    %7 = tpu.iota {dimensions = array<i32: 1>} : vector<256x40xi32>
    %c24_i32 = arith.constant 24 : i32
    %8 = vector.broadcast %c24_i32 : i32 to vector<256x40xi32>
    %9 = arith.cmpi slt, %7, %8 : vector<256x40xi32>
    %cst = arith.constant 0.000000e+00 : f32
    %10 = vector.broadcast %cst : f32 to vector<256x40xf32>
    %11 = arith.maximumf %6, %10 : vector<256x40xf32>
    %12 = arith.select %9, %11, %6 : vector<256x40xi1>, vector<256x40xf32>
    %13 = vector.extract_strided_slice %12 {offsets = [0, 0], sizes = [256, 8], strides = [1, 1]} : vector<256x40xf32> to vector<256x8xf32>
    %14 = vector.extract_strided_slice %12 {offsets = [0, 8], sizes = [256, 8], strides = [1, 1]} : vector<256x40xf32> to vector<256x8xf32>
    %15 = arith.addf %13, %14 : vector<256x8xf32>
    %16 = vector.extract_strided_slice %12 {offsets = [0, 16], sizes = [256, 8], strides = [1, 1]} : vector<256x40xf32> to vector<256x8xf32>
    %17 = arith.addf %15, %16 : vector<256x8xf32>
    %18 = vector.extract_strided_slice %12 {offsets = [0, 24], sizes = [256, 8], strides = [1, 1]} : vector<256x40xf32> to vector<256x8xf32>
    %19 = arith.addf %17, %18 : vector<256x8xf32>
    %20 = vector.extract_strided_slice %12 {offsets = [0, 32], sizes = [256, 8], strides = [1, 1]} : vector<256x40xf32> to vector<256x8xf32>
    %21 = arith.addf %19, %20 : vector<256x8xf32>
    %c0_5 = arith.constant 0 : index
    %c0_6 = arith.constant 0 : index
    %22 = vector.load %arg4[%c0_5, %c0_6] : memref<256x8xf32, #tpu.memory_space<vmem>>, vector<256x8xf32>
    tpu.vector_store %arg4[%c0_5, %c0_6], %21 {strides = array<i32>} : memref<256x8xf32, #tpu.memory_space<vmem>>, vector<256x8xf32>,
    return
  }
  func.func @transform_0(%arg0: i32) -> (i32, i32) {
    %c0_i32 = arith.constant 0 : i32
    %c0_i32_0 = arith.constant 0 : i32
    return %arg0, %c0_i32 : i32, i32
  }
  func.func @transform_1(%arg0: i32) -> (i32, i32) {
    %c0_i32 = arith.constant 0 : i32
    %c0_i32_0 = arith.constant 0 : i32
    %c0_i32_1 = arith.constant 0 : i32
    return %c0_i32, %c0_i32_0 : i32, i32
  }
  func.func @transform_2(%arg0: i32) -> (i32, i32) {
    %c0_i32 = arith.constant 0 : i32
    %c0_i32_0 = arith.constant 0 : i32
    %c0_i32_1 = arith.constant 0 : i32
    return %c0_i32, %c0_i32_0 : i32, i32
  }
  func.func @transform_3(%arg0: i32) -> (i32, i32) {
    %c0_i32 = arith.constant 0 : i32
    %c0_i32_0 = arith.constant 0 : i32
    return %arg0, %c0_i32 : i32, i32
  }
}

</mosaic_0001>

<llo_original>
// kernel: darts_cell_forward.3
$region0: #{darts_cell_forward.3}
  #allocation0 [shape = 'u32[]', space=smem, size = 0x4, offset = 0x4, fixed_abs, tag = 'smem constant byte address 0x4 - core index']
  #allocation1 [shape = 'u32[72,128]{1,0:T(1,128)}', space=vmem, size = 0x9000, scoped, tag = 'internal scratch']
  %s0 = inlined_call_operand.vmem [shape: f32[512,40], index: 0, kind: input, shape index: {}]
  %s1 = inlined_call_operand.vmem [shape: f32[1,40], index: 1, kind: input, shape index: {}]
  %s2 = inlined_call_operand.vmem [shape: f32[1,40], index: 2, kind: input, shape index: {}]
  %s3 = inlined_call_operand.vmem [shape: f32[512,8], index: 3, kind: output, shape index: {}]
  %s4 = sld [smem:[#allocation0]]
  $region45: #{darts_cell_forward.3} parent=0
    _
  %s6 = ssub.s32 1, %s4
  %s7 = scalar_select 0, %s6, %s4
  loop: start=0, step=1, limit=4
  $region2: #{darts_cell_forward.3} parent=0 // loop_pre_header
    _
  $region3: #{darts_cell_forward.3} parent=0 // loop_header
    %s9 = sphi 0, %s13
    %p10 = scmp.ge.s32.totalorder %s9, 4
    %s19 = sphi 0, %s21
    %s22 = sphi 0, %s19
    %s23 = sphi 0, %s22
    %s39 = sphi 0, %s23
    %s43 = sphi 0, %s43
    %s45 = sphi 0, %s43
    %s46 = sphi 0, %s45
    %s60 = sphi 0, %s46
    %s64 = sphi 0, %s64
    %s66 = sphi 0, %s64
    %s67 = sphi 0, %s66
    %s81 = sphi 0, %s67
    %s87 = sphi 0, %s89
    %s90 = sphi 0, %s87
    %s91 = sphi 0, %s90
    %s107 = sphi 0, %s91
  $region4: #{darts_cell_forward.3} parent=0 // loop_header_branch
    %12 = sbr.rel (%p10) target = $region8
  $region5: #{darts_cell_forward.3} parent=0 // loop_body
    %s14 = ssub.s32 %s9, 1
    %s15 = ssub.s32 %s9, 2
    %s16 = sadd.s32 %s9, 1
    %s17 = ssub.s32 %s9, %s16
    %p18 = scmp.eq.s32.totalorder %s17, 0
    %s20 = sadd.s32 %s19, 1
    %s21 = scalar_select %p18, %s19, %s20
    %p24 = pneg %p18
    %p25 = scmp.eq.s32.totalorder %s9, 1
    %p26 = por %p24, %p25
    %p27 = scmp.ne.s32.totalorder %s19, %s22
    %p28 = scmp.eq.s32.totalorder %s9, 0
    %p29 = por %p27, %p28
    %p30 = scmp.ne.s32.totalorder %s19, %s22
    %p31 = scmp.eq.s32.totalorder %s14, 1
    %p32 = por %p30, %p31
    %p33 = scmp.ne.s32.totalorder %s22, %s23
    %p34 = scmp.eq.s32.totalorder %s14, 0
    %p35 = por %p33, %p34
    %p36 = scmp.ne.s32.totalorder %s22, %s23
    %p37 = scmp.eq.s32.totalorder %s15, 1
    %p38 = por %p36, %p37
    %p40 = scmp.ne.s32.totalorder %s23, %s39
    %p41 = scmp.eq.s32.totalorder %s15, 0
    %p42 = por %p40, %p41
    %s44 = sadd.s32 %s43, 1
    %p47 = scmp.eq.s32.totalorder %s9, 1
    %p48 = scmp.ne.s32.totalorder %s43, %s45
    %p49 = scmp.eq.s32.totalorder %s9, 0
    %p50 = por %p48, %p49
    %p51 = scmp.ne.s32.totalorder %s43, %s45
    %p52 = scmp.eq.s32.totalorder %s14, 1
    %p53 = por %p51, %p52
    %p54 = scmp.ne.s32.totalorder %s45, %s46
    %p55 = scmp.eq.s32.totalorder %s14, 0
    %p56 = por %p54, %p55
    %p57 = scmp.ne.s32.totalorder %s45, %s46
    %p58 = scmp.eq.s32.totalorder %s15, 1
    %p59 = por %p57, %p58
    %p61 = scmp.ne.s32.totalorder %s46, %s60
    %p62 = scmp.eq.s32.totalorder %s15, 0
    %p63 = por %p61, %p62
    %s65 = sadd.s32 %s64, 1
    %p68 = scmp.eq.s32.totalorder %s9, 1
    %p69 = scmp.ne.s32.totalorder %s64, %s66
    %p70 = scmp.eq.s32.totalorder %s9, 0
    %p71 = por %p69, %p70
    %p72 = scmp.ne.s32.totalorder %s64, %s66
    %p73 = scmp.eq.s32.totalorder %s14, 1
    %p74 = por %p72, %p73
    %p75 = scmp.ne.s32.totalorder %s66, %s67
    %p76 = scmp.eq.s32.totalorder %s14, 0
    %p77 = por %p75, %p76
    %p78 = scmp.ne.s32.totalorder %s66, %s67
    %p79 = scmp.eq.s32.totalorder %s15, 1
    %p80 = por %p78, %p79
    %p82 = scmp.ne.s32.totalorder %s67, %s81
    %p83 = scmp.eq.s32.totalorder %s15, 0
    %p84 = por %p82, %p83
    %s85 = ssub.s32 %s9, %s16
    %p86 = scmp.eq.s32.totalorder %s85, 0
    %s88 = sadd.s32 %s87, 1
    %s89 = scalar_select %p86, %s87, %s88
    %p92 = pneg %p86
    %p93 = scmp.eq.s32.totalorder %s9, 1
    %p94 = por %p92, %p93
    %p95 = scmp.ne.s32.totalorder %s87, %s90
    %p96 = scmp.eq.s32.totalorder %s9, 0
    %p97 = por %p95, %p96
    %p98 = scmp.ne.s32.totalorder %s87, %s90
    %p99 = scmp.eq.s32.totalorder %s14, 1
    %p100 = por %p98, %p99
    %p101 = scmp.ne.s32.totalorder %s90, %s91
    %p102 = scmp.eq.s32.totalorder %s14, 0
    %p103 = por %p101, %p102
    %p104 = scmp.ne.s32.totalorder %s90, %s91
    %p105 = scmp.eq.s32.totalorder %s15, 1
    %p106 = por %p104, %p105
    %p108 = scmp.ne.s32.totalorder %s91, %s107
    %p109 = scmp.eq.s32.totalorder %s15, 0
    %p110 = por %p108, %p109
    %p111 = scmp.le.s32.totalorder 1, %s9
    %p112 = scmp.lt.s32.totalorder %s9, 3
    %p113 = pnand %p111, %p112
    %p114 = pneg %p113
    // Predicated region
    $region9: #{darts_cell_forward.3} parent=5 // pred_check
      _
    $region10: #{darts_cell_forward.3} parent=5 // pred_check_branch
      %116 = sbr.rel (%p113) target = $region12
    $region11: #{darts_cell_forward.3} parent=5 // pred_region
      %s117 = ssub.s32 %s9, 1
      // Predicated region
      $region13: #{darts_cell_forward.3} parent=11 // pred_check
        %p118 = pneg %p56
      $region14: #{darts_cell_forward.3} parent=11 // pred_check_branch
        %120 = sbr.rel (%p118) target = $region16
      $region15: #{darts_cell_forward.3} parent=11 // pred_region
        _
      $region16: #{darts_cell_forward.3} parent=11 // pred_fallthru
        _
      // Predicated region
      $region17: #{darts_cell_forward.3} parent=11 // pred_check
        %p121 = pneg %p77
      $region18: #{darts_cell_forward.3} parent=11 // pred_check_branch
        %123 = sbr.rel (%p121) target = $region20
      $region19: #{darts_cell_forward.3} parent=11 // pred_region
        _
      $region20: #{darts_cell_forward.3} parent=11 // pred_fallthru
        _
    $region12: #{darts_cell_forward.3} parent=5 // pred_fallthru
      _
    %p124 = scmp.lt.s32.totalorder %s9, 2
    // Predicated region
    $region21: #{darts_cell_forward.3} parent=5 // pred_check
      %p125 = pneg %p124
    $region22: #{darts_cell_forward.3} parent=5 // pred_check_branch
      %127 = sbr.rel (%p125) target = $region24
    $region23: #{darts_cell_forward.3} parent=5 // pred_region
      // Predicated region
      $region25: #{darts_cell_forward.3} parent=23 // pred_check
        %p128 = pneg %p29
      $region26: #{darts_cell_forward.3} parent=23 // pred_check_branch
        %130 = sbr.rel (%p128) target = $region28
      $region27: #{darts_cell_forward.3} parent=23 // pred_region
        %s131 = smul.u32 32, %s9
        %p132 = scmp.lt.s32.totalorder %s131, 63
        %s133 = scalar_select %p132, %s131, 63
        %s134 = smul.addr %s133, 8
        %s135 = scalar_lea.vmem %s0, %s134
        %s136 = smul.u32 32, %s9
      $region28: #{darts_cell_forward.3} parent=23 // pred_fallthru
        _
    $region24: #{darts_cell_forward.3} parent=5 // pred_fallthru
      _
    %p137 = scmp.le.s32.totalorder 1, %s9
    %p138 = scmp.lt.s32.totalorder %s9, 3
    %p139 = pnand %p137, %p138
    %p140 = pneg %p139
    // Predicated region
    $region29: #{darts_cell_forward.3} parent=5 // pred_check
      _
    $region30: #{darts_cell_forward.3} parent=5 // pred_check_branch
      %142 = sbr.rel (%p139) target = $region32
    $region31: #{darts_cell_forward.3} parent=5 // pred_region
      %s143 = ssub.s32 %s9, 1
      %s144 = smul.u32 32, %s14
      %p145 = scmp.lt.s32.totalorder %s144, 63
      %s146 = scalar_select %p145, %s144, 63
      %s147 = smul.addr %s146, 8
      %s148 = scalar_lea.vmem %s0, %s147
      %p149 = pneg %p35
      %p150 = pneg %p32
      %p151 = pneg %p56
      %p152 = pneg %p53
      %p153 = pneg %p77
      %p154 = pneg %p74
      %p155 = pneg %p103
      %p156 = pneg %p100
      %s157 = smul.u32 32, %s14
      %p158 = scmp.lt.s32.totalorder %s157, 63
      %s159 = scalar_select %p158, %s157, 63
      %s160 = smul.addr %s159, 8
      %s161 = scalar_lea.vmem %s3, %s160
      %s162 = smul.u32 32, %s14
      %p163 = scmp.lt.s32.totalorder %s162, 63
      %s164 = scalar_select %p163, %s162, 63
      %s165 = smul.addr %s164, 8
      %s166 = scalar_lea.vmem %s0, %s165
      %s167 = smul.u32 32, %s14
      %s168 = smul.u32 32, %s14
      %p169 = scmp.lt.s32.totalorder %s168, 63
      %s170 = scalar_select %p169, %s168, 63
      %s171 = smul.addr %s170, 8
      %s172 = scalar_lea.vmem %s3, %s171
      %s173 = smul.u32 32, %s14
      %v174 = vld [vmem:[%s166] sm:$0xff]
      %v175 = vld [vmem:[%s166 + $0x8] sm:$0xff]
      %v176 = vld [vmem:[%s166 + $0x10] sm:$0xff]
      %v177 = vld [vmem:[%s166 + $0x18] sm:$0xff]
      %v178 = vld [vmem:[%s166 + $0x20] sm:$0xff]
      %v179 = vld [vmem:[%s166 + $0x28] sm:$0xff]
      %v180 = vld [vmem:[%s166 + $0x30] sm:$0xff]
      %v181 = vld [vmem:[%s166 + $0x38] sm:$0xff]
      %v182 = vld [vmem:[%s166 + $0x40] sm:$0xff]
      %v183 = vld [vmem:[%s166 + $0x48] sm:$0xff]
      %v184 = vld [vmem:[%s166 + $0x50] sm:$0xff]
      %v185 = vld [vmem:[%s166 + $0x58] sm:$0xff]
      %v186 = vld [vmem:[%s166 + $0x60] sm:$0xff]
      %v187 = vld [vmem:[%s166 + $0x68] sm:$0xff]
      %v188 = vld [vmem:[%s166 + $0x70] sm:$0xff]
      %v189 = vld [vmem:[%s166 + $0x78] sm:$0xff]
      %v190 = vld [vmem:[%s166 + $0x80] sm:$0xff]
      %v191 = vld [vmem:[%s166 + $0x88] sm:$0xff]
      %v192 = vld [vmem:[%s166 + $0x90] sm:$0xff]
      %v193 = vld [vmem:[%s166 + $0x98] sm:$0xff]
      %v194 = vld [vmem:[%s166 + $0xa0] sm:$0xff]
      %v195 = vld [vmem:[%s166 + $0xa8] sm:$0xff]
      %v196 = vld [vmem:[%s166 + $0xb0] sm:$0xff]
      %v197 = vld [vmem:[%s166 + $0xb8] sm:$0xff]
      %v198 = vld [vmem:[%s166 + $0xc0] sm:$0xff]
      %v199 = vld [vmem:[%s166 + $0xc8] sm:$0xff]
      %v200 = vld [vmem:[%s166 + $0xd0] sm:$0xff]
      %v201 = vld [vmem:[%s166 + $0xd8] sm:$0xff]
      %v202 = vld [vmem:[%s166 + $0xe0] sm:$0xff]
      %v203 = vld [vmem:[%s166 + $0xe8] sm:$0xff]
      %v204 = vld [vmem:[%s166 + $0xf0] sm:$0xff]
      %v205 = vld [vmem:[%s166 + $0xf8] sm:$0xff]
      %v206 = vld [vmem:[%s1] sm:$0x1]
      %v208 = vperm.slane %v206, 0
      %v210 = vmul.f32 %v174, %v208
      %v211 = vmul.f32 %v175, %v208
      %v212 = vmul.f32 %v176, %v208
      %v213 = vmul.f32 %v177, %v208
      %v214 = vmul.f32 %v178, %v208
      %v215 = vmul.f32 %v179, %v208
      %v216 = vmul.f32 %v180, %v208
      %v217 = vmul.f32 %v181, %v208
      %v218 = vmul.f32 %v182, %v208
      %v219 = vmul.f32 %v183, %v208
      %v220 = vmul.f32 %v184, %v208
      %v221 = vmul.f32 %v185, %v208
      %v222 = vmul.f32 %v186, %v208
      %v223 = vmul.f32 %v187, %v208
      %v224 = vmul.f32 %v188, %v208
      %v225 = vmul.f32 %v189, %v208
      %v226 = vmul.f32 %v190, %v208
      %v227 = vmul.f32 %v191, %v208
      %v228 = vmul.f32 %v192, %v208
      %v229 = vmul.f32 %v193, %v208
      %v230 = vmul.f32 %v194, %v208
      %v231 = vmul.f32 %v195, %v208
      %v232 = vmul.f32 %v196, %v208
      %v233 = vmul.f32 %v197, %v208
      %v234 = vmul.f32 %v198, %v208
      %v235 = vmul.f32 %v199, %v208
      %v236 = vmul.f32 %v200, %v208
      %v237 = vmul.f32 %v201, %v208
      %v238 = vmul.f32 %v202, %v208
      %v239 = vmul.f32 %v203, %v208
      %v240 = vmul.f32 %v204, %v208
      %v241 = vmul.f32 %v205, %v208
      %v242 = vld [vmem:[%s2] sm:$0x1]
      %v244 = vperm.slane %v242, 0
      %v246 = vadd.f32 %v210, %v244
      %v247 = vadd.f32 %v211, %v244
      %v248 = vadd.f32 %v212, %v244
      %v249 = vadd.f32 %v213, %v244
      %v250 = vadd.f32 %v214, %v244
      %v251 = vadd.f32 %v215, %v244
      %v252 = vadd.f32 %v216, %v244
      %v253 = vadd.f32 %v217, %v244
      %v254 = vadd.f32 %v218, %v244
      %v255 = vadd.f32 %v219, %v244
      %v256 = vadd.f32 %v220, %v244
      %v257 = vadd.f32 %v221, %v244
      %v258 = vadd.f32 %v222, %v244
      %v259 = vadd.f32 %v223, %v244
      %v260 = vadd.f32 %v224, %v244
      %v261 = vadd.f32 %v225, %v244
      %v262 = vadd.f32 %v226, %v244
      %v263 = vadd.f32 %v227, %v244
      %v264 = vadd.f32 %v228, %v244
      %v265 = vadd.f32 %v229, %v244
      %v266 = vadd.f32 %v230, %v244
      %v267 = vadd.f32 %v231, %v244
      %v268 = vadd.f32 %v232, %v244
      %v269 = vadd.f32 %v233, %v244
      %v270 = vadd.f32 %v234, %v244
      %v271 = vadd.f32 %v235, %v244
      %v272 = vadd.f32 %v236, %v244
      %v273 = vadd.f32 %v237, %v244
      %v274 = vadd.f32 %v238, %v244
      %v275 = vadd.f32 %v239, %v244
      %v276 = vadd.f32 %v240, %v244
      %v277 = vadd.f32 %v241, %v244
      %v278 = vlaneseq
      %v279 = vand.u32 %v278, 127
      %vm280 = vcmp.lt.s32.totalorder %v279, 24
      %v281 = vmax.f32 %v246, 0.0
      %v282 = vmax.f32 %v247, 0.0
      %v283 = vmax.f32 %v248, 0.0
      %v284 = vmax.f32 %v249, 0.0
      %v285 = vmax.f32 %v250, 0.0
      %v286 = vmax.f32 %v251, 0.0
      %v287 = vmax.f32 %v252, 0.0
      %v288 = vmax.f32 %v253, 0.0
      %v289 = vmax.f32 %v254, 0.0
      %v290 = vmax.f32 %v255, 0.0
      %v291 = vmax.f32 %v256, 0.0
      %v292 = vmax.f32 %v257, 0.0
      %v293 = vmax.f32 %v258, 0.0
      %v294 = vmax.f32 %v259, 0.0
      %v295 = vmax.f32 %v260, 0.0
      %v296 = vmax.f32 %v261, 0.0
      %v297 = vmax.f32 %v262, 0.0
      %v298 = vmax.f32 %v263, 0.0
      %v299 = vmax.f32 %v264, 0.0
      %v300 = vmax.f32 %v265, 0.0
      %v301 = vmax.f32 %v266, 0.0
      %v302 = vmax.f32 %v267, 0.0
      %v303 = vmax.f32 %v268, 0.0
      %v304 = vmax.f32 %v269, 0.0
      %v305 = vmax.f32 %v270, 0.0
      %v306 = vmax.f32 %v271, 0.0
      %v307 = vmax.f32 %v272, 0.0
      %v308 = vmax.f32 %v273, 0.0
      %v309 = vmax.f32 %v274, 0.0
      %v310 = vmax.f32 %v275, 0.0
      %v311 = vmax.f32 %v276, 0.0
      %v312 = vmax.f32 %v277, 0.0
      %v313 = vsel %vm280, %v281, %v246
      %v314 = vsel %vm280, %v282, %v247
      %v315 = vsel %vm280, %v283, %v248
      %v316 = vsel %vm280, %v284, %v249
      %v317 = vsel %vm280, %v285, %v250
      %v318 = vsel %vm280, %v286, %v251
      %v319 = vsel %vm280, %v287, %v252
      %v320 = vsel %vm280, %v288, %v253
      %v321 = vsel %vm280, %v289, %v254
      %v322 = vsel %vm280, %v290, %v255
      %v323 = vsel %vm280, %v291, %v256
      %v324 = vsel %vm280, %v292, %v257
      %v325 = vsel %vm280, %v293, %v258
      %v326 = vsel %vm280, %v294, %v259
      %v327 = vsel %vm280, %v295, %v260
      %v328 = vsel %vm280, %v296, %v261
      %v329 = vsel %vm280, %v297, %v262
      %v330 = vsel %vm280, %v298, %v263
      %v331 = vsel %vm280, %v299, %v264
      %v332 = vsel %vm280, %v300, %v265
      %v333 = vsel %vm280, %v301, %v266
      %v334 = vsel %vm280, %v302, %v267
      %v335 = vsel %vm280, %v303, %v268
      %v336 = vsel %vm280, %v304, %v269
      %v337 = vsel %vm280, %v305, %v270
      %v338 = vsel %vm280, %v306, %v271
      %v339 = vsel %vm280, %v307, %v272
      %v340 = vsel %vm280, %v308, %v273
      %v341 = vsel %vm280, %v309, %v274
      %v342 = vsel %vm280, %v310, %v275
      %v343 = vsel %vm280, %v311, %v276
      %v344 = vsel %vm280, %v312, %v277
      %377 = vrot.lane.b32.xlu0 %v313, 120
      %v378 = vpop.permute.xlu0 %377
      %379 = vrot.lane.b32.xlu0 %v314, 120
      %v380 = vpop.permute.xlu0 %379
      %381 = vrot.lane.b32.xlu0 %v315, 120
      %v382 = vpop.permute.xlu0 %381
      %383 = vrot.lane.b32.xlu0 %v316, 120
      %v384 = vpop.permute.xlu0 %383
      %385 = vrot.lane.b32.xlu0 %v317, 120
      %v386 = vpop.permute.xlu0 %385
      %387 = vrot.lane.b32.xlu0 %v318, 120
      %v388 = vpop.permute.xlu0 %387
      %389 = vrot.lane.b32.xlu0 %v319, 120
      %v390 = vpop.permute.xlu0 %389
      %391 = vrot.lane.b32.xlu0 %v320, 120
      %v392 = vpop.permute.xlu0 %391
      %393 = vrot.lane.b32.xlu0 %v321, 120
      %v394 = vpop.permute.xlu0 %393
      %395 = vrot.lane.b32.xlu0 %v322, 120
      %v396 = vpop.permute.xlu0 %395
      %397 = vrot.lane.b32.xlu0 %v323, 120
      %v398 = vpop.permute.xlu0 %397
      %399 = vrot.lane.b32.xlu0 %v324, 120
      %v400 = vpop.permute.xlu0 %399
      %401 = vrot.lane.b32.xlu0 %v325, 120
      %v402 = vpop.permute.xlu0 %401
      %403 = vrot.lane.b32.xlu0 %v326, 120
      %v404 = vpop.permute.xlu0 %403
      %405 = vrot.lane.b32.xlu0 %v327, 120
      %v406 = vpop.permute.xlu0 %405
      %407 = vrot.lane.b32.xlu0 %v328, 120
      %v408 = vpop.permute.xlu0 %407
      %409 = vrot.lane.b32.xlu0 %v329, 120
      %v410 = vpop.permute.xlu0 %409
      %411 = vrot.lane.b32.xlu0 %v330, 120
      %v412 = vpop.permute.xlu0 %411
      %413 = vrot.lane.b32.xlu0 %v331, 120
      %v414 = vpop.permute.xlu0 %413
      %415 = vrot.lane.b32.xlu0 %v332, 120
      %v416 = vpop.permute.xlu0 %415
      %417 = vrot.lane.b32.xlu0 %v333, 120
      %v418 = vpop.permute.xlu0 %417
      %419 = vrot.lane.b32.xlu0 %v334, 120
      %v420 = vpop.permute.xlu0 %419
      %421 = vrot.lane.b32.xlu0 %v335, 120
      %v422 = vpop.permute.xlu0 %421
      %423 = vrot.lane.b32.xlu0 %v336, 120
      %v424 = vpop.permute.xlu0 %423
      %425 = vrot.lane.b32.xlu0 %v337, 120
      %v426 = vpop.permute.xlu0 %425
      %427 = vrot.lane.b32.xlu0 %v338, 120
      %v428 = vpop.permute.xlu0 %427
      %429 = vrot.lane.b32.xlu0 %v339, 120
      %v430 = vpop.permute.xlu0 %429
      %431 = vrot.lane.b32.xlu0 %v340, 120
      %v432 = vpop.permute.xlu0 %431
      %433 = vrot.lane.b32.xlu0 %v341, 120
      %v434 = vpop.permute.xlu0 %433
      %435 = vrot.lane.b32.xlu0 %v342, 120
      %v436 = vpop.permute.xlu0 %435
      %437 = vrot.lane.b32.xlu0 %v343, 120
      %v438 = vpop.permute.xlu0 %437
      %439 = vrot.lane.b32.xlu0 %v344, 120
      %v440 = vpop.permute.xlu0 %439
      %v473 = vadd.f32 %v313, %v378
      %v474 = vadd.f32 %v314, %v380
      %v475 = vadd.f32 %v315, %v382
      %v476 = vadd.f32 %v316, %v384
      %v477 = vadd.f32 %v317, %v386
      %v478 = vadd.f32 %v318, %v388
      %v479 = vadd.f32 %v319, %v390
      %v480 = vadd.f32 %v320, %v392
      %v481 = vadd.f32 %v321, %v394
      %v482 = vadd.f32 %v322, %v396
      %v483 = vadd.f32 %v323, %v398
      %v484 = vadd.f32 %v324, %v400
      %v485 = vadd.f32 %v325, %v402
      %v486 = vadd.f32 %v326, %v404
      %v487 = vadd.f32 %v327, %v406
      %v488 = vadd.f32 %v328, %v408
      %v489 = vadd.f32 %v329, %v410
      %v490 = vadd.f32 %v330, %v412
      %v491 = vadd.f32 %v331, %v414
      %v492 = vadd.f32 %v332, %v416
      %v493 = vadd.f32 %v333, %v418
      %v494 = vadd.f32 %v334, %v420
      %v495 = vadd.f32 %v335, %v422
      %v496 = vadd.f32 %v336, %v424
      %v497 = vadd.f32 %v337, %v426
      %v498 = vadd.f32 %v338, %v428
      %v499 = vadd.f32 %v339, %v430
      %v500 = vadd.f32 %v340, %v432
      %v501 = vadd.f32 %v341, %v434
      %v502 = vadd.f32 %v342, %v436
      %v503 = vadd.f32 %v343, %v438
      %v504 = vadd.f32 %v344, %v440
      %505 = vrot.lane.b32.xlu0 %v313, 112
      %v506 = vpop.permute.xlu0 %505
      %507 = vrot.lane.b32.xlu0 %v314, 112
      %v508 = vpop.permute.xlu0 %507
      %509 = vrot.lane.b32.xlu0 %v315, 112
      %v510 = vpop.permute.xlu0 %509
      %511 = vrot.lane.b32.xlu0 %v316, 112
      %v512 = vpop.permute.xlu0 %511
      %513 = vrot.lane.b32.xlu0 %v317, 112
      %v514 = vpop.permute.xlu0 %513
      %515 = vrot.lane.b32.xlu0 %v318, 112
      %v516 = vpop.permute.xlu0 %515
      %517 = vrot.lane.b32.xlu0 %v319, 112
      %v518 = vpop.permute.xlu0 %517
      %519 = vrot.lane.b32.xlu0 %v320, 112
      %v520 = vpop.permute.xlu0 %519
      %521 = vrot.lane.b32.xlu0 %v321, 112
      %v522 = vpop.permute.xlu0 %521
      %523 = vrot.lane.b32.xlu0 %v322, 112
      %v524 = vpop.permute.xlu0 %523
      %525 = vrot.lane.b32.xlu0 %v323, 112
      %v526 = vpop.permute.xlu0 %525
      %527 = vrot.lane.b32.xlu0 %v324, 112
      %v528 = vpop.permute.xlu0 %527
      %529 = vrot.lane.b32.xlu0 %v325, 112
      %v530 = vpop.permute.xlu0 %529
      %531 = vrot.lane.b32.xlu0 %v326, 112
      %v532 = vpop.permute.xlu0 %531
      %533 = vrot.lane.b32.xlu0 %v327, 112
      %v534 = vpop.permute.xlu0 %533
      %535 = vrot.lane.b32.xlu0 %v328, 112
      %v536 = vpop.permute.xlu0 %535
      %537 = vrot.lane.b32.xlu0 %v329, 112
      %v538 = vpop.permute.xlu0 %537
      %539 = vrot.lane.b32.xlu0 %v330, 112
      %v540 = vpop.permute.xlu0 %539
      %541 = vrot.lane.b32.xlu0 %v331, 112
      %v542 = vpop.permute.xlu0 %541
      %543 = vrot.lane.b32.xlu0 %v332, 112
      %v544 = vpop.permute.xlu0 %543
      %545 = vrot.lane.b32.xlu0 %v333, 112
      %v546 = vpop.permute.xlu0 %545
      %547 = vrot.lane.b32.xlu0 %v334, 112
      %v548 = vpop.permute.xlu0 %547
      %549 = vrot.lane.b32.xlu0 %v335, 112
      %v550 = vpop.permute.xlu0 %549
      %551 = vrot.lane.b32.xlu0 %v336, 112
      %v552 = vpop.permute.xlu0 %551
      %553 = vrot.lane.b32.xlu0 %v337, 112
      %v554 = vpop.permute.xlu0 %553
      %555 = vrot.lane.b32.xlu0 %v338, 112
      %v556 = vpop.permute.xlu0 %555
      %557 = vrot.lane.b32.xlu0 %v339, 112
      %v558 = vpop.permute.xlu0 %557
      %559 = vrot.lane.b32.xlu0 %v340, 112
      %v560 = vpop.permute.xlu0 %559
      %561 = vrot.lane.b32.xlu0 %v341, 112
      %v562 = vpop.permute.xlu0 %561
      %563 = vrot.lane.b32.xlu0 %v342, 112
      %v564 = vpop.permute.xlu0 %563
      %565 = vrot.lane.b32.xlu0 %v343, 112
      %v566 = vpop.permute.xlu0 %565
      %567 = vrot.lane.b32.xlu0 %v344, 112
      %v568 = vpop.permute.xlu0 %567
      %v601 = vadd.f32 %v473, %v506
      %v602 = vadd.f32 %v474, %v508
      %v603 = vadd.f32 %v475, %v510
      %v604 = vadd.f32 %v476, %v512
      %v605 = vadd.f32 %v477, %v514
      %v606 = vadd.f32 %v478, %v516
      %v607 = vadd.f32 %v479, %v518
      %v608 = vadd.f32 %v480, %v520
      %v609 = vadd.f32 %v481, %v522
      %v610 = vadd.f32 %v482, %v524
      %v611 = vadd.f32 %v483, %v526
      %v612 = vadd.f32 %v484, %v528
      %v613 = vadd.f32 %v485, %v530
      %v614 = vadd.f32 %v486, %v532
      %v615 = vadd.f32 %v487, %v534
      %v616 = vadd.f32 %v488, %v536
      %v617 = vadd.f32 %v489, %v538
      %v618 = vadd.f32 %v490, %v540
      %v619 = vadd.f32 %v491, %v542
      %v620 = vadd.f32 %v492, %v544
      %v621 = vadd.f32 %v493, %v546
      %v622 = vadd.f32 %v494, %v548
      %v623 = vadd.f32 %v495, %v550
      %v624 = vadd.f32 %v496, %v552
      %v625 = vadd.f32 %v497, %v554
      %v626 = vadd.f32 %v498, %v556
      %v627 = vadd.f32 %v499, %v558
      %v628 = vadd.f32 %v500, %v560
      %v629 = vadd.f32 %v501, %v562
      %v630 = vadd.f32 %v502, %v564
      %v631 = vadd.f32 %v503, %v566
      %v632 = vadd.f32 %v504, %v568
      %633 = vrot.lane.b32.xlu0 %v313, 104
      %v634 = vpop.permute.xlu0 %633
      %635 = vrot.lane.b32.xlu0 %v314, 104
      %v636 = vpop.permute.xlu0 %635
      %637 = vrot.lane.b32.xlu0 %v315, 104
      %v638 = vpop.permute.xlu0 %637
      %639 = vrot.lane.b32.xlu0 %v316, 104
      %v640 = vpop.permute.xlu0 %639
      %641 = vrot.lane.b32.xlu0 %v317, 104
      %v642 = vpop.permute.xlu0 %641
      %643 = vrot.lane.b32.xlu0 %v318, 104
      %v644 = vpop.permute.xlu0 %643
      %645 = vrot.lane.b32.xlu0 %v319, 104
      %v646 = vpop.permute.xlu0 %645
      %647 = vrot.lane.b32.xlu0 %v320, 104
      %v648 = vpop.permute.xlu0 %647
      %649 = vrot.lane.b32.xlu0 %v321, 104
      %v650 = vpop.permute.xlu0 %649
      %651 = vrot.lane.b32.xlu0 %v322, 104
      %v652 = vpop.permute.xlu0 %651
      %653 = vrot.lane.b32.xlu0 %v323, 104
      %v654 = vpop.permute.xlu0 %653
      %655 = vrot.lane.b32.xlu0 %v324, 104
      %v656 = vpop.permute.xlu0 %655
      %657 = vrot.lane.b32.xlu0 %v325, 104
      %v658 = vpop.permute.xlu0 %657
      %659 = vrot.lane.b32.xlu0 %v326, 104
      %v660 = vpop.permute.xlu0 %659
      %661 = vrot.lane.b32.xlu0 %v327, 104
      %v662 = vpop.permute.xlu0 %661
      %663 = vrot.lane.b32.xlu0 %v328, 104
      %v664 = vpop.permute.xlu0 %663
      %665 = vrot.lane.b32.xlu0 %v329, 104
      %v666 = vpop.permute.xlu0 %665
      %667 = vrot.lane.b32.xlu0 %v330, 104
      %v668 = vpop.permute.xlu0 %667
      %669 = vrot.lane.b32.xlu0 %v331, 104
      %v670 = vpop.permute.xlu0 %669
      %671 = vrot.lane.b32.xlu0 %v332, 104
      %v672 = vpop.permute.xlu0 %671
      %673 = vrot.lane.b32.xlu0 %v333, 104
      %v674 = vpop.permute.xlu0 %673
      %675 = vrot.lane.b32.xlu0 %v334, 104
      %v676 = vpop.permute.xlu0 %675
      %677 = vrot.lane.b32.xlu0 %v335, 104
      %v678 = vpop.permute.xlu0 %677
      %679 = vrot.lane.b32.xlu0 %v336, 104
      %v680 = vpop.permute.xlu0 %679
      %681 = vrot.lane.b32.xlu0 %v337, 104
      %v682 = vpop.permute.xlu0 %681
      %683 = vrot.lane.b32.xlu0 %v338, 104
      %v684 = vpop.permute.xlu0 %683
      %685 = vrot.lane.b32.xlu0 %v339, 104
      %v686 = vpop.permute.xlu0 %685
      %687 = vrot.lane.b32.xlu0 %v340, 104
      %v688 = vpop.permute.xlu0 %687
      %689 = vrot.lane.b32.xlu0 %v341, 104
      %v690 = vpop.permute.xlu0 %689
      %691 = vrot.lane.b32.xlu0 %v342, 104
      %v692 = vpop.permute.xlu0 %691
      %693 = vrot.lane.b32.xlu0 %v343, 104
      %v694 = vpop.permute.xlu0 %693
      %695 = vrot.lane.b32.xlu0 %v344, 104
      %v696 = vpop.permute.xlu0 %695
      %v729 = vadd.f32 %v601, %v634
      %v730 = vadd.f32 %v602, %v636
      %v731 = vadd.f32 %v603, %v638
      %v732 = vadd.f32 %v604, %v640
      %v733 = vadd.f32 %v605, %v642
      %v734 = vadd.f32 %v606, %v644
      %v735 = vadd.f32 %v607, %v646
      %v736 = vadd.f32 %v608, %v648
      %v737 = vadd.f32 %v609, %v650
      %v738 = vadd.f32 %v610, %v652
      %v739 = vadd.f32 %v611, %v654
      %v740 = vadd.f32 %v612, %v656
      %v741 = vadd.f32 %v613, %v658
      %v742 = vadd.f32 %v614, %v660
      %v743 = vadd.f32 %v615, %v662
      %v744 = vadd.f32 %v616, %v664
      %v745 = vadd.f32 %v617, %v666
      %v746 = vadd.f32 %v618, %v668
      %v747 = vadd.f32 %v619, %v670
      %v748 = vadd.f32 %v620, %v672
      %v749 = vadd.f32 %v621, %v674
      %v750 = vadd.f32 %v622, %v676
      %v751 = vadd.f32 %v623, %v678
      %v752 = vadd.f32 %v624, %v680
      %v753 = vadd.f32 %v625, %v682
      %v754 = vadd.f32 %v626, %v684
      %v755 = vadd.f32 %v627, %v686
      %v756 = vadd.f32 %v628, %v688
      %v757 = vadd.f32 %v629, %v690
      %v758 = vadd.f32 %v630, %v692
      %v759 = vadd.f32 %v631, %v694
      %v760 = vadd.f32 %v632, %v696
      %761 = vrot.lane.b32.xlu0 %v313, 96
      %v762 = vpop.permute.xlu0 %761
      %763 = vrot.lane.b32.xlu0 %v314, 96
      %v764 = vpop.permute.xlu0 %763
      %765 = vrot.lane.b32.xlu0 %v315, 96
      %v766 = vpop.permute.xlu0 %765
      %767 = vrot.lane.b32.xlu0 %v316, 96
      %v768 = vpop.permute.xlu0 %767
      %769 = vrot.lane.b32.xlu0 %v317, 96
      %v770 = vpop.permute.xlu0 %769
      %771 = vrot.lane.b32.xlu0 %v318, 96
      %v772 = vpop.permute.xlu0 %771
      %773 = vrot.lane.b32.xlu0 %v319, 96
      %v774 = vpop.permute.xlu0 %773
      %775 = vrot.lane.b32.xlu0 %v320, 96
      %v776 = vpop.permute.xlu0 %775
      %777 = vrot.lane.b32.xlu0 %v321, 96
      %v778 = vpop.permute.xlu0 %777
      %779 = vrot.lane.b32.xlu0 %v322, 96
      %v780 = vpop.permute.xlu0 %779
      %781 = vrot.lane.b32.xlu0 %v323, 96
      %v782 = vpop.permute.xlu0 %781
      %783 = vrot.lane.b32.xlu0 %v324, 96
      %v784 = vpop.permute.xlu0 %783
      %785 = vrot.lane.b32.xlu0 %v325, 96
      %v786 = vpop.permute.xlu0 %785
      %787 = vrot.lane.b32.xlu0 %v326, 96
      %v788 = vpop.permute.xlu0 %787
      %789 = vrot.lane.b32.xlu0 %v327, 96
      %v790 = vpop.permute.xlu0 %789
      %791 = vrot.lane.b32.xlu0 %v328, 96
      %v792 = vpop.permute.xlu0 %791
      %793 = vrot.lane.b32.xlu0 %v329, 96
      %v794 = vpop.permute.xlu0 %793
      %795 = vrot.lane.b32.xlu0 %v330, 96
      %v796 = vpop.permute.xlu0 %795
      %797 = vrot.lane.b32.xlu0 %v331, 96
      %v798 = vpop.permute.xlu0 %797
      %799 = vrot.lane.b32.xlu0 %v332, 96
      %v800 = vpop.permute.xlu0 %799
      %801 = vrot.lane.b32.xlu0 %v333, 96
      %v802 = vpop.permute.xlu0 %801
      %803 = vrot.lane.b32.xlu0 %v334, 96
      %v804 = vpop.permute.xlu0 %803
      %805 = vrot.lane.b32.xlu0 %v335, 96
      %v806 = vpop.permute.xlu0 %805
      %807 = vrot.lane.b32.xlu0 %v336, 96
      %v808 = vpop.permute.xlu0 %807
      %809 = vrot.lane.b32.xlu0 %v337, 96
      %v810 = vpop.permute.xlu0 %809
      %811 = vrot.lane.b32.xlu0 %v338, 96
      %v812 = vpop.permute.xlu0 %811
      %813 = vrot.lane.b32.xlu0 %v339, 96
      %v814 = vpop.permute.xlu0 %813
      %815 = vrot.lane.b32.xlu0 %v340, 96
      %v816 = vpop.permute.xlu0 %815
      %817 = vrot.lane.b32.xlu0 %v341, 96
      %v818 = vpop.permute.xlu0 %817
      %819 = vrot.lane.b32.xlu0 %v342, 96
      %v820 = vpop.permute.xlu0 %819
      %821 = vrot.lane.b32.xlu0 %v343, 96
      %v822 = vpop.permute.xlu0 %821
      %823 = vrot.lane.b32.xlu0 %v344, 96
      %v824 = vpop.permute.xlu0 %823
      %v857 = vadd.f32 %v729, %v762
      %v858 = vadd.f32 %v730, %v764
      %v859 = vadd.f32 %v731, %v766
      %v860 = vadd.f32 %v732, %v768
      %v861 = vadd.f32 %v733, %v770
      %v862 = vadd.f32 %v734, %v772
      %v863 = vadd.f32 %v735, %v774
      %v864 = vadd.f32 %v736, %v776
      %v865 = vadd.f32 %v737, %v778
      %v866 = vadd.f32 %v738, %v780
      %v867 = vadd.f32 %v739, %v782
      %v868 = vadd.f32 %v740, %v784
      %v869 = vadd.f32 %v741, %v786
      %v870 = vadd.f32 %v742, %v788
      %v871 = vadd.f32 %v743, %v790
      %v872 = vadd.f32 %v744, %v792
      %v873 = vadd.f32 %v745, %v794
      %v874 = vadd.f32 %v746, %v796
      %v875 = vadd.f32 %v747, %v798
      %v876 = vadd.f32 %v748, %v800
      %v877 = vadd.f32 %v749, %v802
      %v878 = vadd.f32 %v750, %v804
      %v879 = vadd.f32 %v751, %v806
      %v880 = vadd.f32 %v752, %v808
      %v881 = vadd.f32 %v753, %v810
      %v882 = vadd.f32 %v754, %v812
      %v883 = vadd.f32 %v755, %v814
      %v884 = vadd.f32 %v756, %v816
      %v885 = vadd.f32 %v757, %v818
      %v886 = vadd.f32 %v758, %v820
      %v887 = vadd.f32 %v759, %v822
      %v888 = vadd.f32 %v760, %v824
      %vm889 = vcmask 64512
      %890 = vst.msk [vmem:[%s172] sm:$0xff] %vm889, %v857
      %891 = vst.msk [vmem:[%s172 + $0x8] sm:$0xff] %vm889, %v858
      %892 = vst.msk [vmem:[%s172 + $0x10] sm:$0xff] %vm889, %v859
      %893 = vst.msk [vmem:[%s172 + $0x18] sm:$0xff] %vm889, %v860
      %894 = vst.msk [vmem:[%s172 + $0x20] sm:$0xff] %vm889, %v861
      %895 = vst.msk [vmem:[%s172 + $0x28] sm:$0xff] %vm889, %v862
      %896 = vst.msk [vmem:[%s172 + $0x30] sm:$0xff] %vm889, %v863
      %897 = vst.msk [vmem:[%s172 + $0x38] sm:$0xff] %vm889, %v864
      %898 = vst.msk [vmem:[%s172 + $0x40] sm:$0xff] %vm889, %v865
      %899 = vst.msk [vmem:[%s172 + $0x48] sm:$0xff] %vm889, %v866
      %900 = vst.msk [vmem:[%s172 + $0x50] sm:$0xff] %vm889, %v867
      %901 = vst.msk [vmem:[%s172 + $0x58] sm:$0xff] %vm889, %v868
      %902 = vst.msk [vmem:[%s172 + $0x60] sm:$0xff] %vm889, %v869
      %903 = vst.msk [vmem:[%s172 + $0x68] sm:$0xff] %vm889, %v870
      %904 = vst.msk [vmem:[%s172 + $0x70] sm:$0xff] %vm889, %v871
      %905 = vst.msk [vmem:[%s172 + $0x78] sm:$0xff] %vm889, %v872
      %906 = vst.msk [vmem:[%s172 + $0x80] sm:$0xff] %vm889, %v873
      %907 = vst.msk [vmem:[%s172 + $0x88] sm:$0xff] %vm889, %v874
      %908 = vst.msk [vmem:[%s172 + $0x90] sm:$0xff] %vm889, %v875
      %909 = vst.msk [vmem:[%s172 + $0x98] sm:$0xff] %vm889, %v876
      %910 = vst.msk [vmem:[%s172 + $0xa0] sm:$0xff] %vm889, %v877
      %911 = vst.msk [vmem:[%s172 + $0xa8] sm:$0xff] %vm889, %v878
      %912 = vst.msk [vmem:[%s172 + $0xb0] sm:$0xff] %vm889, %v879
      %913 = vst.msk [vmem:[%s172 + $0xb8] sm:$0xff] %vm889, %v880
      %914 = vst.msk [vmem:[%s172 + $0xc0] sm:$0xff] %vm889, %v881
      %915 = vst.msk [vmem:[%s172 + $0xc8] sm:$0xff] %vm889, %v882
      %916 = vst.msk [vmem:[%s172 + $0xd0] sm:$0xff] %vm889, %v883
      %917 = vst.msk [vmem:[%s172 + $0xd8] sm:$0xff] %vm889, %v884
      %918 = vst.msk [vmem:[%s172 + $0xe0] sm:$0xff] %vm889, %v885
      %919 = vst.msk [vmem:[%s172 + $0xe8] sm:$0xff] %vm889, %v886
      %920 = vst.msk [vmem:[%s172 + $0xf0] sm:$0xff] %vm889, %v887
      %921 = vst.msk [vmem:[%s172 + $0xf8] sm:$0xff] %vm889, %v888
      %s922 = smul.u32 32, %s14
      %p923 = scmp.lt.s32.totalorder %s922, 63
      %s924 = scalar_select %p923, %s922, 63
      %s925 = smul.addr %s924, 8
      %s926 = scalar_lea.vmem %s3, %s925
      // Predicated region
      $region33: #{darts_cell_forward.3} parent=31 // pred_check
        %p927 = pneg %p100
      $region34: #{darts_cell_forward.3} parent=31 // pred_check_branch
        %929 = sbr.rel (%p927) target = $region36
      $region35: #{darts_cell_forward.3} parent=31 // pred_region
        %s930 = smul.u32 32, %s14
      $region36: #{darts_cell_forward.3} parent=31 // pred_fallthru
        _
    $region32: #{darts_cell_forward.3} parent=5 // pred_fallthru
      _
    %p931 = scmp.le.s32.totalorder 2, %s9
    // Predicated region
    $region37: #{darts_cell_forward.3} parent=5 // pred_check
      %p932 = pneg %p931
    $region38: #{darts_cell_forward.3} parent=5 // pred_check_branch
      %934 = sbr.rel (%p932) target = $region40
    $region39: #{darts_cell_forward.3} parent=5 // pred_region
      %s935 = ssub.s32 %s9, 2
      // Predicated region
      $region41: #{darts_cell_forward.3} parent=39 // pred_check
        %p936 = pneg %p106
      $region42: #{darts_cell_forward.3} parent=39 // pred_check_branch
        %938 = sbr.rel (%p936) target = $region44
      $region43: #{darts_cell_forward.3} parent=39 // pred_region
        %s939 = smul.u32 32, %s15
        %p940 = scmp.lt.s32.totalorder %s939, 63
        %s941 = scalar_select %p940, %s939, 63
        %s942 = smul.addr %s941, 8
        %s943 = scalar_lea.vmem %s3, %s942
      $region44: #{darts_cell_forward.3} parent=39 // pred_fallthru
        _
    $region40: #{darts_cell_forward.3} parent=5 // pred_fallthru
      _
  $region6: #{darts_cell_forward.3} parent=0 // loop_footer
    %s13 = sadd.s32 1, %s9
  $region7: #{darts_cell_forward.3} parent=0 // loop_footer_branch
    %8 = sbr.rel target = $region3
  $region8: #{darts_cell_forward.3} parent=0 // loop_exit
    _

// kernel: darts_cell_forward.2
$region0: #{darts_cell_forward.2}
  #allocation0 [shape = 'u32[]', space=smem, size = 0x4, offset = 0x4, fixed_abs, tag = 'smem constant byte address 0x4 - core index']
  #allocation1 [shape = 'u32[72,128]{1,0:T(1,128)}', space=vmem, size = 0x9000, scoped, tag = 'internal scratch']
  %s0 = inlined_call_operand.vmem [shape: bf16[512,100], index: 0, kind: input, shape index: {}]
  %s1 = inlined_call_operand.vmem [shape: f32[512,9], index: 1, kind: input, shape index: {}]
  %s2 = inlined_call_operand.vmem [shape: bf16[100,32], index: 2, kind: input, shape index: {}]
  %s3 = inlined_call_operand.vmem [shape: f32[4,8], index: 3, kind: input, shape index: {}]
  %s4 = inlined_call_operand.vmem [shape: f32[512,40], index: 4, kind: output, shape index: {0}]
  %s5 = inlined_call_operand.vmem [shape: f32[16,40], index: 5, kind: output, shape index: {1}]
  %6 = xla_tuple %s4, %s5
  %s7 = sld [smem:[#allocation0]]
  $region57: #{darts_cell_forward.2} parent=0
    _
  %s9 = ssub.s32 1, %s7
  %s10 = scalar_select 0, %s9, %s7
  loop: start=0, step=1, limit=4
  $region2: #{darts_cell_forward.2} parent=0 // loop_pre_header
    _
  $region3: #{darts_cell_forward.2} parent=0 // loop_header
    %s12 = sphi 0, %s16
    %p13 = scmp.ge.s32.totalorder %s12, 4
    %s22 = sphi 0, %s24
    %s25 = sphi 0, %s22
    %s26 = sphi 0, %s25
    %s42 = sphi 0, %s26
    %s48 = sphi 0, %s50
    %s51 = sphi 0, %s48
    %s52 = sphi 0, %s51
    %s68 = sphi 0, %s52
    %s72 = sphi 0, %s72
    %s74 = sphi 0, %s72
    %s75 = sphi 0, %s74
    %s89 = sphi 0, %s75
    %s93 = sphi 0, %s93
    %s95 = sphi 0, %s93
    %s96 = sphi 0, %s95
    %s110 = sphi 0, %s96
    %s116 = sphi 0, %s118
    %s119 = sphi 0, %s116
    %s120 = sphi 0, %s119
    %s136 = sphi 0, %s120
    %s142 = sphi 0, %s144
    %s145 = sphi 0, %s142
    %s146 = sphi 0, %s145
    %s162 = sphi 0, %s146
  $region4: #{darts_cell_forward.2} parent=0 // loop_header_branch
    %15 = sbr.rel (%p13) target = $region8
  $region5: #{darts_cell_forward.2} parent=0 // loop_body
    %s17 = ssub.s32 %s12, 1
    %s18 = ssub.s32 %s12, 2
    %s19 = sadd.s32 %s12, 1
    %s20 = ssub.s32 %s12, %s19
    %p21 = scmp.eq.s32.totalorder %s20, 0
    %s23 = sadd.s32 %s22, 1
    %s24 = scalar_select %p21, %s22, %s23
    %p27 = pneg %p21
    %p28 = scmp.eq.s32.totalorder %s12, 1
    %p29 = por %p27, %p28
    %p30 = scmp.ne.s32.totalorder %s22, %s25
    %p31 = scmp.eq.s32.totalorder %s12, 0
    %p32 = por %p30, %p31
    %p33 = scmp.ne.s32.totalorder %s22, %s25
    %p34 = scmp.eq.s32.totalorder %s17, 1
    %p35 = por %p33, %p34
    %p36 = scmp.ne.s32.totalorder %s25, %s26
    %p37 = scmp.eq.s32.totalorder %s17, 0
    %p38 = por %p36, %p37
    %p39 = scmp.ne.s32.totalorder %s25, %s26
    %p40 = scmp.eq.s32.totalorder %s18, 1
    %p41 = por %p39, %p40
    %p43 = scmp.ne.s32.totalorder %s26, %s42
    %p44 = scmp.eq.s32.totalorder %s18, 0
    %p45 = por %p43, %p44
    %s46 = ssub.s32 %s12, %s19
    %p47 = scmp.eq.s32.totalorder %s46, 0
    %s49 = sadd.s32 %s48, 1
    %s50 = scalar_select %p47, %s48, %s49
    %p53 = pneg %p47
    %p54 = scmp.eq.s32.totalorder %s12, 1
    %p55 = por %p53, %p54
    %p56 = scmp.ne.s32.totalorder %s48, %s51
    %p57 = scmp.eq.s32.totalorder %s12, 0
    %p58 = por %p56, %p57
    %p59 = scmp.ne.s32.totalorder %s48, %s51
    %p60 = scmp.eq.s32.totalorder %s17, 1
    %p61 = por %p59, %p60
    %p62 = scmp.ne.s32.totalorder %s51, %s52
    %p63 = scmp.eq.s32.totalorder %s17, 0
    %p64 = por %p62, %p63
    %p65 = scmp.ne.s32.totalorder %s51, %s52
    %p66 = scmp.eq.s32.totalorder %s18, 1
    %p67 = por %p65, %p66
    %p69 = scmp.ne.s32.totalorder %s52, %s68
    %p70 = scmp.eq.s32.totalorder %s18, 0
    %p71 = por %p69, %p70
    %s73 = sadd.s32 %s72, 1
    %p76 = scmp.eq.s32.totalorder %s12, 1
    %p77 = scmp.ne.s32.totalorder %s72, %s74
    %p78 = scmp.eq.s32.totalorder %s12, 0
    %p79 = por %p77, %p78
    %p80 = scmp.ne.s32.totalorder %s72, %s74
    %p81 = scmp.eq.s32.totalorder %s17, 1
    %p82 = por %p80, %p81
    %p83 = scmp.ne.s32.totalorder %s74, %s75
    %p84 = scmp.eq.s32.totalorder %s17, 0
    %p85 = por %p83, %p84
    %p86 = scmp.ne.s32.totalorder %s74, %s75
    %p87 = scmp.eq.s32.totalorder %s18, 1
    %p88 = por %p86, %p87
    %p90 = scmp.ne.s32.totalorder %s75, %s89
    %p91 = scmp.eq.s32.totalorder %s18, 0
    %p92 = por %p90, %p91
    %s94 = sadd.s32 %s93, 1
    %p97 = scmp.eq.s32.totalorder %s12, 1
    %p98 = scmp.ne.s32.totalorder %s93, %s95
    %p99 = scmp.eq.s32.totalorder %s12, 0
    %p100 = por %p98, %p99
    %p101 = scmp.ne.s32.totalorder %s93, %s95
    %p102 = scmp.eq.s32.totalorder %s17, 1
    %p103 = por %p101, %p102
    %p104 = scmp.ne.s32.totalorder %s95, %s96
    %p105 = scmp.eq.s32.totalorder %s17, 0
    %p106 = por %p104, %p105
    %p107 = scmp.ne.s32.totalorder %s95, %s96
    %p108 = scmp.eq.s32.totalorder %s18, 1
    %p109 = por %p107, %p108
    %p111 = scmp.ne.s32.totalorder %s96, %s110
    %p112 = scmp.eq.s32.totalorder %s18, 0
    %p113 = por %p111, %p112
    %s114 = ssub.s32 %s12, %s19
    %p115 = scmp.eq.s32.totalorder %s114, 0
    %s117 = sadd.s32 %s116, 1
    %s118 = scalar_select %p115, %s116, %s117
    %p121 = pneg %p115
    %p122 = scmp.eq.s32.totalorder %s12, 1
    %p123 = por %p121, %p122
    %p124 = scmp.ne.s32.totalorder %s116, %s119
    %p125 = scmp.eq.s32.totalorder %s12, 0
    %p126 = por %p124, %p125
    %p127 = scmp.ne.s32.totalorder %s116, %s119
    %p128 = scmp.eq.s32.totalorder %s17, 1
    %p129 = por %p127, %p128
    %p130 = scmp.ne.s32.totalorder %s119, %s120
    %p131 = scmp.eq.s32.totalorder %s17, 0
    %p132 = por %p130, %p131
    %p133 = scmp.ne.s32.totalorder %s119, %s120
    %p134 = scmp.eq.s32.totalorder %s18, 1
    %p135 = por %p133, %p134
    %p137 = scmp.ne.s32.totalorder %s120, %s136
    %p138 = scmp.eq.s32.totalorder %s18, 0
    %p139 = por %p137, %p138
    %s140 = ssub.s32 %s12, %s19
    %p141 = scmp.eq.s32.totalorder %s140, 0
    %s143 = sadd.s32 %s142, 1
    %s144 = scalar_select %p141, %s142, %s143
    %p147 = pneg %p141
    %p148 = scmp.eq.s32.totalorder %s12, 1
    %p149 = por %p147, %p148
    %p150 = scmp.ne.s32.totalorder %s142, %s145
    %p151 = scmp.eq.s32.totalorder %s12, 0
    %p152 = por %p150, %p151
    %p153 = scmp.ne.s32.totalorder %s142, %s145
    %p154 = scmp.eq.s32.totalorder %s17, 1
    %p155 = por %p153, %p154
    %p156 = scmp.ne.s32.totalorder %s145, %s146
    %p157 = scmp.eq.s32.totalorder %s17, 0
    %p158 = por %p156, %p157
    %p159 = scmp.ne.s32.totalorder %s145, %s146
    %p160 = scmp.eq.s32.totalorder %s18, 1
    %p161 = por %p159, %p160
    %p163 = scmp.ne.s32.totalorder %s146, %s162
    %p164 = scmp.eq.s32.totalorder %s18, 0
    %p165 = por %p163, %p164
    %p166 = scmp.le.s32.totalorder 1, %s12
    %p167 = scmp.lt.s32.totalorder %s12, 3
    %p168 = pnand %p166, %p167
    %p169 = pneg %p168
    // Predicated region
    $region9: #{darts_cell_forward.2} parent=5 // pred_check
      _
    $region10: #{darts_cell_forward.2} parent=5 // pred_check_branch
      %171 = sbr.rel (%p168) target = $region12
    $region11: #{darts_cell_forward.2} parent=5 // pred_region
      %s172 = ssub.s32 %s12, 1
      // Predicated region
      $region13: #{darts_cell_forward.2} parent=11 // pred_check
        %p173 = pneg %p85
      $region14: #{darts_cell_forward.2} parent=11 // pred_check_branch
        %175 = sbr.rel (%p173) target = $region16
      $region15: #{darts_cell_forward.2} parent=11 // pred_region
        _
      $region16: #{darts_cell_forward.2} parent=11 // pred_fallthru
        _
      // Predicated region
      $region17: #{darts_cell_forward.2} parent=11 // pred_check
        %p176 = pneg %p106
      $region18: #{darts_cell_forward.2} parent=11 // pred_check_branch
        %178 = sbr.rel (%p176) target = $region20
      $region19: #{darts_cell_forward.2} parent=11 // pred_region
        _
      $region20: #{darts_cell_forward.2} parent=11 // pred_fallthru
        _
    $region12: #{darts_cell_forward.2} parent=5 // pred_fallthru
      _
    %p179 = scmp.lt.s32.totalorder %s12, 2
    // Predicated region
    $region21: #{darts_cell_forward.2} parent=5 // pred_check
      %p180 = pneg %p179
    $region22: #{darts_cell_forward.2} parent=5 // pred_check_branch
      %182 = sbr.rel (%p180) target = $region24
    $region23: #{darts_cell_forward.2} parent=5 // pred_region
      // Predicated region
      $region25: #{darts_cell_forward.2} parent=23 // pred_check
        %p183 = pneg %p32
      $region26: #{darts_cell_forward.2} parent=23 // pred_check_branch
        %185 = sbr.rel (%p183) target = $region28
      $region27: #{darts_cell_forward.2} parent=23 // pred_region
        %s186 = smul.u32 32, %s12
        %p187 = scmp.lt.s32.totalorder %s186, 63
        %s188 = scalar_select %p187, %s186, 63
        %s189 = smul.addr %s188, 4
        %s190 = scalar_lea.vmem %s0, %s189
        %s191 = smul.u32 32, %s12
      $region28: #{darts_cell_forward.2} parent=23 // pred_fallthru
        _
      // Predicated region
      $region29: #{darts_cell_forward.2} parent=23 // pred_check
        %p192 = pneg %p58
      $region30: #{darts_cell_forward.2} parent=23 // pred_check_branch
        %194 = sbr.rel (%p192) target = $region32
      $region31: #{darts_cell_forward.2} parent=23 // pred_region
        %s195 = smul.u32 32, %s12
        %p196 = scmp.lt.s32.totalorder %s195, 63
        %s197 = scalar_select %p196, %s195, 63
        %s198 = smul.addr %s197, 8
        %s199 = scalar_lea.vmem %s1, %s198
        %s200 = smul.u32 32, %s12
      $region32: #{darts_cell_forward.2} parent=23 // pred_fallthru
        _
    $region24: #{darts_cell_forward.2} parent=5 // pred_fallthru
      _
    %p201 = scmp.le.s32.totalorder 1, %s12
    %p202 = scmp.lt.s32.totalorder %s12, 3
    %p203 = pnand %p201, %p202
    %p204 = pneg %p203
    // Predicated region
    $region33: #{darts_cell_forward.2} parent=5 // pred_check
      _
    $region34: #{darts_cell_forward.2} parent=5 // pred_check_branch
      %206 = sbr.rel (%p203) target = $region36
    $region35: #{darts_cell_forward.2} parent=5 // pred_region
      %s207 = ssub.s32 %s12, 1
      %s208 = smul.u32 32, %s17
      %p209 = scmp.lt.s32.totalorder %s208, 63
      %s210 = scalar_select %p209, %s208, 63
      %s211 = smul.addr %s210, 4
      %s212 = scalar_lea.vmem %s0, %s211
      %p213 = pneg %p38
      %p214 = pneg %p35
      %s215 = smul.u32 32, %s17
      %p216 = scmp.lt.s32.totalorder %s215, 63
      %s217 = scalar_select %p216, %s215, 63
      %s218 = smul.addr %s217, 8
      %s219 = scalar_lea.vmem %s1, %s218
      %p220 = pneg %p64
      %p221 = pneg %p61
      %p222 = pneg %p85
      %p223 = pneg %p82
      %p224 = pneg %p106
      %p225 = pneg %p103
      %p226 = pneg %p132
      %p227 = pneg %p129
      %s228 = smul.u32 32, %s17
      %p229 = scmp.lt.s32.totalorder %s228, 63
      %s230 = scalar_select %p229, %s228, 63
      %s231 = smul.addr %s230, 8
      %s232 = scalar_lea.vmem %s4, %s231
      %p233 = pneg %p158
      %p234 = pneg %p155
      %p235 = scmp.lt.s32.totalorder %s17, 1
      %s236 = scalar_select %p235, %s17, 1
      %s237 = smul.addr %s236, 8
      %s238 = scalar_lea.vmem %s5, %s237
      %s239 = smul.u32 32, %s17
      %p240 = scmp.lt.s32.totalorder %s239, 63
      %s241 = scalar_select %p240, %s239, 63
      %s242 = smul.addr %s241, 4
      %s243 = scalar_lea.vmem %s0, %s242
      %s244 = smul.u32 32, %s17
      %s245 = smul.u32 32, %s17
      %p246 = scmp.lt.s32.totalorder %s245, 63
      %s247 = scalar_select %p246, %s245, 63
      %s248 = smul.addr %s247, 8
      %s249 = scalar_lea.vmem %s1, %s248
      %s250 = smul.u32 32, %s17
      %s251 = smul.u32 32, %s17
      %p252 = scmp.lt.s32.totalorder %s251, 63
      %s253 = scalar_select %p252, %s251, 63
      %s254 = smul.addr %s253, 8
      %s255 = scalar_lea.vmem %s4, %s254
      %s256 = smul.u32 32, %s17
      %p257 = scmp.lt.s32.totalorder %s17, 1
      %s258 = scalar_select %p257, %s17, 1
      %s259 = smul.addr %s258, 8
      %s260 = scalar_lea.vmem %s5, %s259
      %v262 = vld [vmem:[%s243] sm:$0xf]
      %v263 = vld [vmem:[%s243 + $0x4] sm:$0xf]
      %v264 = vld [vmem:[%s243 + $0x8] sm:$0xf]
      %v265 = vld [vmem:[%s243 + $0xc] sm:$0xf]
      %v266 = vld [vmem:[%s243 + $0x10] sm:$0xf]
      %v267 = vld [vmem:[%s243 + $0x14] sm:$0xf]
      %v268 = vld [vmem:[%s243 + $0x18] sm:$0xf]
      %v269 = vld [vmem:[%s243 + $0x1c] sm:$0xf]
      %v270 = vld [vmem:[%s243 + $0x20] sm:$0xf]
      %v271 = vld [vmem:[%s243 + $0x24] sm:$0xf]
      %v272 = vld [vmem:[%s243 + $0x28] sm:$0xf]
      %v273 = vld [vmem:[%s243 + $0x2c] sm:$0xf]
      %v274 = vld [vmem:[%s243 + $0x30] sm:$0xf]
      %v275 = vld [vmem:[%s243 + $0x34] sm:$0xf]
      %v276 = vld [vmem:[%s243 + $0x38] sm:$0xf]
      %v277 = vld [vmem:[%s243 + $0x3c] sm:$0xf]
      %v278 = vld [vmem:[%s243 + $0x40] sm:$0xf]
      %v279 = vld [vmem:[%s243 + $0x44] sm:$0xf]
      %v280 = vld [vmem:[%s243 + $0x48] sm:$0xf]
      %v281 = vld [vmem:[%s243 + $0x4c] sm:$0xf]
      %v282 = vld [vmem:[%s243 + $0x50] sm:$0xf]
      %v283 = vld [vmem:[%s243 + $0x54] sm:$0xf]
      %v284 = vld [vmem:[%s243 + $0x58] sm:$0xf]
      %v285 = vld [vmem:[%s243 + $0x5c] sm:$0xf]
      %v286 = vld [vmem:[%s243 + $0x60] sm:$0xf]
      %v287 = vld [vmem:[%s243 + $0x64] sm:$0xf]
      %v288 = vld [vmem:[%s243 + $0x68] sm:$0xf]
      %v289 = vld [vmem:[%s243 + $0x6c] sm:$0xf]
      %v290 = vld [vmem:[%s243 + $0x70] sm:$0xf]
      %v291 = vld [vmem:[%s243 + $0x74] sm:$0xf]
      %v292 = vld [vmem:[%s243 + $0x78] sm:$0xf]
      %v293 = vld [vmem:[%s243 + $0x7c] sm:$0xf]
      %v294 = vld [vmem:[%s2] sm:$0xf]
      %v295 = vld [vmem:[%s2 + $0x4] sm:$0xf]
      %v296 = vld [vmem:[%s2 + $0x8] sm:$0xf]
      %v297 = vld [vmem:[%s2 + $0xc] sm:$0xf]
      %v298 = vld [vmem:[%s2 + $0x10] sm:$0xf]
      %v299 = vld [vmem:[%s2 + $0x14] sm:$0xf]
      %v300 = vld [vmem:[%s2 + $0x18] sm:$0xf]
      %v301 = vld [vmem:[%s2 + $0x1c] sm:$0xf]
      %v302 = vld [vmem:[%s2 + $0x20] sm:$0xf]
      %v303 = vld [vmem:[%s2 + $0x24] sm:$0xf]
      %v304 = vld [vmem:[%s2 + $0x28] sm:$0xf]
      %v305 = vld [vmem:[%s2 + $0x2c] sm:$0xf]
      %v306 = vld [vmem:[%s2 + $0x30] sm:$0x3]
      %v339 = vunpack.c.l.b16 %v262
      %v340 = vunpack.c.l.b16 %v263
      %v341 = vunpack.c.l.b16 %v264
      %v342 = vunpack.c.l.b16 %v265
      %v343 = vunpack.c.l.b16 %v266
      %v344 = vunpack.c.l.b16 %v267
      %v345 = vunpack.c.l.b16 %v268
      %v346 = vunpack.c.l.b16 %v269
      %v347 = vunpack.c.l.b16 %v270
      %v348 = vunpack.c.l.b16 %v271
      %v349 = vunpack.c.l.b16 %v272
      %v350 = vunpack.c.l.b16 %v273
      %v351 = vunpack.c.l.b16 %v274
      %v352 = vunpack.c.l.b16 %v275
      %v353 = vunpack.c.l.b16 %v276
      %v354 = vunpack.c.l.b16 %v277
      %v355 = vunpack.c.l.b16 %v278
      %v356 = vunpack.c.l.b16 %v279
      %v357 = vunpack.c.l.b16 %v280
      %v358 = vunpack.c.l.b16 %v281
      %v359 = vunpack.c.l.b16 %v282
      %v360 = vunpack.c.l.b16 %v283
      %v361 = vunpack.c.l.b16 %v284
      %v362 = vunpack.c.l.b16 %v285
      %v363 = vunpack.c.l.b16 %v286
      %v364 = vunpack.c.l.b16 %v287
      %v365 = vunpack.c.l.b16 %v288
      %v366 = vunpack.c.l.b16 %v289
      %v367 = vunpack.c.l.b16 %v290
      %v368 = vunpack.c.l.b16 %v291
      %v369 = vunpack.c.l.b16 %v292
      %v370 = vunpack.c.l.b16 %v293
      %v371 = vpack.c.b16 %v340, %v339
      %v372 = vpack.c.b16 %v342, %v341
      %v373 = vpack.c.b16 %v344, %v343
      %v374 = vpack.c.b16 %v346, %v345
      %v375 = vpack.c.b16 %v348, %v347
      %v376 = vpack.c.b16 %v350, %v349
      %v377 = vpack.c.b16 %v352, %v351
      %v378 = vpack.c.b16 %v354, %v353
      %v379 = vpack.c.b16 %v356, %v355
      %v380 = vpack.c.b16 %v358, %v357
      %v381 = vpack.c.b16 %v360, %v359
      %v382 = vpack.c.b16 %v362, %v361
      %v383 = vpack.c.b16 %v364, %v363
      %v384 = vpack.c.b16 %v366, %v365
      %v385 = vpack.c.b16 %v368, %v367
      %v386 = vpack.c.b16 %v370, %v369
      %v400 = vunpack.c.l.b16 %v294
      %v401 = vunpack.c.l.b16 %v295
      %v402 = vunpack.c.l.b16 %v296
      %v403 = vunpack.c.l.b16 %v297
      %v404 = vunpack.c.l.b16 %v298
      %v405 = vunpack.c.l.b16 %v299
      %v406 = vunpack.c.l.b16 %v300
      %v407 = vunpack.c.l.b16 %v301
      %v408 = vunpack.c.l.b16 %v302
      %v409 = vunpack.c.l.b16 %v303
      %v410 = vunpack.c.l.b16 %v304
      %v411 = vunpack.c.l.b16 %v305
      %v412 = vunpack.c.l.b16 %v306
      %v413 = vpack.c.b16 %v401, %v400
      %v414 = vpack.c.b16 %v403, %v402
      %v415 = vpack.c.b16 %v405, %v404
      %v416 = vpack.c.b16 %v407, %v406
      %v417 = vpack.c.b16 %v409, %v408
      %v418 = vpack.c.b16 %v411, %v410
      %v419 = vpack.c.b16 %v412, %v412
      %vm426 = vcmask 818176
      %v428 = vsel %vm426, %v371, 0
      %v431 = vsel %vm426, %v372, 0
      %v434 = vsel %vm426, %v373, 0
      %v437 = vsel %vm426, %v374, 0
      %v440 = vsel %vm426, %v375, 0
      %v443 = vsel %vm426, %v376, 0
      %v446 = vsel %vm426, %v377, 0
      %v449 = vsel %vm426, %v378, 0
      %v452 = vsel %vm426, %v379, 0
      %v455 = vsel %vm426, %v380, 0
      %v458 = vsel %vm426, %v381, 0
      %v461 = vsel %vm426, %v382, 0
      %v464 = vsel %vm426, %v383, 0
      %v467 = vsel %vm426, %v384, 0
      %v470 = vsel %vm426, %v385, 0
      %v473 = vsel %vm426, %v386, 0
      %vm475 = vcmask 1041408
      %v477 = vsel %vm475, %v419, 0
      %479 = vmatpush.bf16.msra.mxu0 0
      %480 = vmatpush.bf16.msra.mxu0 %v477
      %481 = vmatpush.bf16.msra.mxu0 %v418
      %482 = vmatpush.bf16.msra.mxu0 %v417
      %483 = vmatpush.bf16.msra.mxu0 %v416
      %484 = vmatpush.bf16.msra.mxu0 %v415
      %485 = vmatpush.bf16.msra.mxu0 %v414
      %486 = vmatpush.bf16.msra.mxu0 %v413
      %487 = vmatmul.bf16.gmra.mxu0 %v428
      %v488 = vpop.f32.mrf.mxu0
      %v489 = vadd.f32 0.0, %v488
      %v490 = vpop.f32.mrf.mxu0
      %v491 = vadd.f32 0.0, %v490
      %492 = vmatmul.bf16.gmra.mxu0 %v431
      %v493 = vpop.f32.mrf.mxu0
      %v494 = vadd.f32 0.0, %v493
      %v495 = vpop.f32.mrf.mxu0
      %v496 = vadd.f32 0.0, %v495
      %497 = vmatmul.bf16.gmra.mxu0 %v434
      %v498 = vpop.f32.mrf.mxu0
      %v499 = vadd.f32 0.0, %v498
      %v500 = vpop.f32.mrf.mxu0
      %v501 = vadd.f32 0.0, %v500
      %502 = vmatmul.bf16.gmra.mxu0 %v437
      %v503 = vpop.f32.mrf.mxu0
      %v504 = vadd.f32 0.0, %v503
      %v505 = vpop.f32.mrf.mxu0
      %v506 = vadd.f32 0.0, %v505
      %507 = vmatmul.bf16.gmra.mxu0 %v440
      %v508 = vpop.f32.mrf.mxu0
      %v509 = vadd.f32 0.0, %v508
      %v510 = vpop.f32.mrf.mxu0
      %v511 = vadd.f32 0.0, %v510
      %512 = vmatmul.bf16.gmra.mxu0 %v443
      %v513 = vpop.f32.mrf.mxu0
      %v514 = vadd.f32 0.0, %v513
      %v515 = vpop.f32.mrf.mxu0
      %v516 = vadd.f32 0.0, %v515
      %517 = vmatmul.bf16.gmra.mxu0 %v446
      %v518 = vpop.f32.mrf.mxu0
      %v519 = vadd.f32 0.0, %v518
      %v520 = vpop.f32.mrf.mxu0
      %v521 = vadd.f32 0.0, %v520
      %522 = vmatmul.bf16.gmra.mxu0 %v449
      %v523 = vpop.f32.mrf.mxu0
      %v524 = vadd.f32 0.0, %v523
      %v525 = vpop.f32.mrf.mxu0
      %v526 = vadd.f32 0.0, %v525
      %527 = vmatmul.bf16.gmra.mxu0 %v452
      %v528 = vpop.f32.mrf.mxu0
      %v529 = vadd.f32 0.0, %v528
      %v530 = vpop.f32.mrf.mxu0
      %v531 = vadd.f32 0.0, %v530
      %532 = vmatmul.bf16.gmra.mxu0 %v455
      %v533 = vpop.f32.mrf.mxu0
      %v534 = vadd.f32 0.0, %v533
      %v535 = vpop.f32.mrf.mxu0
      %v536 = vadd.f32 0.0, %v535
      %537 = vmatmul.bf16.gmra.mxu0 %v458
      %v538 = vpop.f32.mrf.mxu0
      %v539 = vadd.f32 0.0, %v538
      %v540 = vpop.f32.mrf.mxu0
      %v541 = vadd.f32 0.0, %v540
      %542 = vmatmul.bf16.gmra.mxu0 %v461
      %v543 = vpop.f32.mrf.mxu0
      %v544 = vadd.f32 0.0, %v543
      %v545 = vpop.f32.mrf.mxu0
      %v546 = vadd.f32 0.0, %v545
      %547 = vmatmul.bf16.gmra.mxu0 %v464
      %v548 = vpop.f32.mrf.mxu0
      %v549 = vadd.f32 0.0, %v548
      %v550 = vpop.f32.mrf.mxu0
      %v551 = vadd.f32 0.0, %v550
      %552 = vmatmul.bf16.gmra.mxu0 %v467
      %v553 = vpop.f32.mrf.mxu0
      %v554 = vadd.f32 0.0, %v553
      %v555 = vpop.f32.mrf.mxu0
      %v556 = vadd.f32 0.0, %v555
      %557 = vmatmul.bf16.gmra.mxu0 %v470
      %v558 = vpop.f32.mrf.mxu0
      %v559 = vadd.f32 0.0, %v558
      %v560 = vpop.f32.mrf.mxu0
      %v561 = vadd.f32 0.0, %v560
      %562 = vmatmul.bf16.gmra.mxu0 %v473
      %v563 = vpop.f32.mrf.mxu0
      %v564 = vadd.f32 0.0, %v563
      %v565 = vpop.f32.mrf.mxu0
      %v566 = vadd.f32 0.0, %v565
      %567 = vdwg.mxu0
      %v568 = vunpack.c.l.bf16 %v262
      %v569 = vunpack.c.l.bf16 %v263
      %v570 = vunpack.c.l.bf16 %v264
      %v571 = vunpack.c.l.bf16 %v265
      %v572 = vunpack.c.l.bf16 %v266
      %v573 = vunpack.c.l.bf16 %v267
      %v574 = vunpack.c.l.bf16 %v268
      %v575 = vunpack.c.l.bf16 %v269
      %v576 = vunpack.c.l.bf16 %v270
      %v577 = vunpack.c.l.bf16 %v271
      %v578 = vunpack.c.l.bf16 %v272
      %v579 = vunpack.c.l.bf16 %v273
      %v580 = vunpack.c.l.bf16 %v274
      %v581 = vunpack.c.l.bf16 %v275
      %v582 = vunpack.c.l.bf16 %v276
      %v583 = vunpack.c.l.bf16 %v277
      %v584 = vunpack.c.l.bf16 %v278
      %v585 = vunpack.c.l.bf16 %v279
      %v586 = vunpack.c.l.bf16 %v280
      %v587 = vunpack.c.l.bf16 %v281
      %v588 = vunpack.c.l.bf16 %v282
      %v589 = vunpack.c.l.bf16 %v283
      %v590 = vunpack.c.l.bf16 %v284
      %v591 = vunpack.c.l.bf16 %v285
      %v592 = vunpack.c.l.bf16 %v286
      %v593 = vunpack.c.l.bf16 %v287
      %v594 = vunpack.c.l.bf16 %v288
      %v595 = vunpack.c.l.bf16 %v289
      %v596 = vunpack.c.l.bf16 %v290
      %v597 = vunpack.c.l.bf16 %v291
      %v598 = vunpack.c.l.bf16 %v292
      %v599 = vunpack.c.l.bf16 %v293
      %v600 = vld [vmem:[%s249] sm:$0xff]
      %v601 = vld [vmem:[%s249 + $0x8] sm:$0xff]
      %v602 = vld [vmem:[%s249 + $0x10] sm:$0xff]
      %v603 = vld [vmem:[%s249 + $0x18] sm:$0xff]
      %v604 = vld [vmem:[%s249 + $0x20] sm:$0xff]
      %v605 = vld [vmem:[%s249 + $0x28] sm:$0xff]
      %v606 = vld [vmem:[%s249 + $0x30] sm:$0xff]
      %v607 = vld [vmem:[%s249 + $0x38] sm:$0xff]
      %v608 = vld [vmem:[%s249 + $0x40] sm:$0xff]
      %v609 = vld [vmem:[%s249 + $0x48] sm:$0xff]
      %v610 = vld [vmem:[%s249 + $0x50] sm:$0xff]
      %v611 = vld [vmem:[%s249 + $0x58] sm:$0xff]
      %v612 = vld [vmem:[%s249 + $0x60] sm:$0xff]
      %v613 = vld [vmem:[%s249 + $0x68] sm:$0xff]
      %v614 = vld [vmem:[%s249 + $0x70] sm:$0xff]
      %v615 = vld [vmem:[%s249 + $0x78] sm:$0xff]
      %v616 = vld [vmem:[%s249 + $0x80] sm:$0xff]
      %v617 = vld [vmem:[%s249 + $0x88] sm:$0xff]
      %v618 = vld [vmem:[%s249 + $0x90] sm:$0xff]
      %v619 = vld [vmem:[%s249 + $0x98] sm:$0xff]
      %v620 = vld [vmem:[%s249 + $0xa0] sm:$0xff]
      %v621 = vld [vmem:[%s249 + $0xa8] sm:$0xff]
      %v622 = vld [vmem:[%s249 + $0xb0] sm:$0xff]
      %v623 = vld [vmem:[%s249 + $0xb8] sm:$0xff]
      %v624 = vld [vmem:[%s249 + $0xc0] sm:$0xff]
      %v625 = vld [vmem:[%s249 + $0xc8] sm:$0xff]
      %v626 = vld [vmem:[%s249 + $0xd0] sm:$0xff]
      %v627 = vld [vmem:[%s249 + $0xd8] sm:$0xff]
      %v628 = vld [vmem:[%s249 + $0xe0] sm:$0xff]
      %v629 = vld [vmem:[%s249 + $0xe8] sm:$0xff]
      %v630 = vld [vmem:[%s249 + $0xf0] sm:$0xff]
      %v631 = vld [vmem:[%s249 + $0xf8] sm:$0xff]
      %633 = vset.pattern.permute.xlu0 0
      %634 = vperm.xlu0 %633, %v600
      %v635 = vpop.permute.xlu0 %634
      %638 = vset.pattern.permute.xlu0 0
      %639 = vperm.xlu0 %638, %v601
      %v640 = vpop.permute.xlu0 %639
      %643 = vset.pattern.permute.xlu0 0
      %644 = vperm.xlu0 %643, %v602
      %v645 = vpop.permute.xlu0 %644
      %648 = vset.pattern.permute.xlu0 0
      %649 = vperm.xlu0 %648, %v603
      %v650 = vpop.permute.xlu0 %649
      %653 = vset.pattern.permute.xlu0 0
      %654 = vperm.xlu0 %653, %v604
      %v655 = vpop.permute.xlu0 %654
      %658 = vset.pattern.permute.xlu0 0
      %659 = vperm.xlu0 %658, %v605
      %v660 = vpop.permute.xlu0 %659
      %663 = vset.pattern.permute.xlu0 0
      %664 = vperm.xlu0 %663, %v606
      %v665 = vpop.permute.xlu0 %664
      %668 = vset.pattern.permute.xlu0 0
      %669 = vperm.xlu0 %668, %v607
      %v670 = vpop.permute.xlu0 %669
      %673 = vset.pattern.permute.xlu0 0
      %674 = vperm.xlu0 %673, %v608
      %v675 = vpop.permute.xlu0 %674
      %678 = vset.pattern.permute.xlu0 0
      %679 = vperm.xlu0 %678, %v609
      %v680 = vpop.permute.xlu0 %679
      %683 = vset.pattern.permute.xlu0 0
      %684 = vperm.xlu0 %683, %v610
      %v685 = vpop.permute.xlu0 %684
      %688 = vset.pattern.permute.xlu0 0
      %689 = vperm.xlu0 %688, %v611
      %v690 = vpop.permute.xlu0 %689
      %693 = vset.pattern.permute.xlu0 0
      %694 = vperm.xlu0 %693, %v612
      %v695 = vpop.permute.xlu0 %694
      %698 = vset.pattern.permute.xlu0 0
      %699 = vperm.xlu0 %698, %v613
      %v700 = vpop.permute.xlu0 %699
      %703 = vset.pattern.permute.xlu0 0
      %704 = vperm.xlu0 %703, %v614
      %v705 = vpop.permute.xlu0 %704
      %708 = vset.pattern.permute.xlu0 0
      %709 = vperm.xlu0 %708, %v615
      %v710 = vpop.permute.xlu0 %709
      %713 = vset.pattern.permute.xlu0 0
      %714 = vperm.xlu0 %713, %v616
      %v715 = vpop.permute.xlu0 %714
      %718 = vset.pattern.permute.xlu0 0
      %719 = vperm.xlu0 %718, %v617
      %v720 = vpop.permute.xlu0 %719
      %723 = vset.pattern.permute.xlu0 0
      %724 = vperm.xlu0 %723, %v618
      %v725 = vpop.permute.xlu0 %724
      %728 = vset.pattern.permute.xlu0 0
      %729 = vperm.xlu0 %728, %v619
      %v730 = vpop.permute.xlu0 %729
      %733 = vset.pattern.permute.xlu0 0
      %734 = vperm.xlu0 %733, %v620
      %v735 = vpop.permute.xlu0 %734
      %738 = vset.pattern.permute.xlu0 0
      %739 = vperm.xlu0 %738, %v621
      %v740 = vpop.permute.xlu0 %739
      %743 = vset.pattern.permute.xlu0 0
      %744 = vperm.xlu0 %743, %v622
      %v745 = vpop.permute.xlu0 %744
      %748 = vset.pattern.permute.xlu0 0
      %749 = vperm.xlu0 %748, %v623
      %v750 = vpop.permute.xlu0 %749
      %753 = vset.pattern.permute.xlu0 0
      %754 = vperm.xlu0 %753, %v624
      %v755 = vpop.permute.xlu0 %754
      %758 = vset.pattern.permute.xlu0 0
      %759 = vperm.xlu0 %758, %v625
      %v760 = vpop.permute.xlu0 %759
      %763 = vset.pattern.permute.xlu0 0
      %764 = vperm.xlu0 %763, %v626
      %v765 = vpop.permute.xlu0 %764
      %768 = vset.pattern.permute.xlu0 0
      %769 = vperm.xlu0 %768, %v627
      %v770 = vpop.permute.xlu0 %769
      %773 = vset.pattern.permute.xlu0 0
      %774 = vperm.xlu0 %773, %v628
      %v775 = vpop.permute.xlu0 %774
      %778 = vset.pattern.permute.xlu0 0
      %779 = vperm.xlu0 %778, %v629
      %v780 = vpop.permute.xlu0 %779
      %783 = vset.pattern.permute.xlu0 0
      %784 = vperm.xlu0 %783, %v630
      %v785 = vpop.permute.xlu0 %784
      %788 = vset.pattern.permute.xlu0 0
      %789 = vperm.xlu0 %788, %v631
      %v790 = vpop.permute.xlu0 %789
      %v792 = vadd.f32 %v568, %v635
      %v793 = vadd.f32 %v569, %v640
      %v794 = vadd.f32 %v570, %v645
      %v795 = vadd.f32 %v571, %v650
      %v796 = vadd.f32 %v572, %v655
      %v797 = vadd.f32 %v573, %v660
      %v798 = vadd.f32 %v574, %v665
      %v799 = vadd.f32 %v575, %v670
      %v800 = vadd.f32 %v576, %v675
      %v801 = vadd.f32 %v577, %v680
      %v802 = vadd.f32 %v578, %v685
      %v803 = vadd.f32 %v579, %v690
      %v804 = vadd.f32 %v580, %v695
      %v805 = vadd.f32 %v581, %v700
      %v806 = vadd.f32 %v582, %v705
      %v807 = vadd.f32 %v583, %v710
      %v808 = vadd.f32 %v584, %v715
      %v809 = vadd.f32 %v585, %v720
      %v810 = vadd.f32 %v586, %v725
      %v811 = vadd.f32 %v587, %v730
      %v812 = vadd.f32 %v588, %v735
      %v813 = vadd.f32 %v589, %v740
      %v814 = vadd.f32 %v590, %v745
      %v815 = vadd.f32 %v591, %v750
      %v816 = vadd.f32 %v592, %v755
      %v817 = vadd.f32 %v593, %v760
      %v818 = vadd.f32 %v594, %v765
      %v819 = vadd.f32 %v595, %v770
      %v820 = vadd.f32 %v596, %v775
      %v821 = vadd.f32 %v597, %v780
      %v822 = vadd.f32 %v598, %v785
      %v823 = vadd.f32 %v599, %v790
      %824 = vset.pattern.permute.xlu0 1
      %825 = vperm.xlu0 %824, %v600
      %v826 = vpop.permute.xlu0 %825
      %828 = vset.pattern.permute.xlu0 1
      %829 = vperm.xlu0 %828, %v601
      %v830 = vpop.permute.xlu0 %829
      %832 = vset.pattern.permute.xlu0 1
      %833 = vperm.xlu0 %832, %v602
      %v834 = vpop.permute.xlu0 %833
      %836 = vset.pattern.permute.xlu0 1
      %837 = vperm.xlu0 %836, %v603
      %v838 = vpop.permute.xlu0 %837
      %840 = vset.pattern.permute.xlu0 1
      %841 = vperm.xlu0 %840, %v604
      %v842 = vpop.permute.xlu0 %841
      %844 = vset.pattern.permute.xlu0 1
      %845 = vperm.xlu0 %844, %v605
      %v846 = vpop.permute.xlu0 %845
      %848 = vset.pattern.permute.xlu0 1
      %849 = vperm.xlu0 %848, %v606
      %v850 = vpop.permute.xlu0 %849
      %852 = vset.pattern.permute.xlu0 1
      %853 = vperm.xlu0 %852, %v607
      %v854 = vpop.permute.xlu0 %853
      %856 = vset.pattern.permute.xlu0 1
      %857 = vperm.xlu0 %856, %v608
      %v858 = vpop.permute.xlu0 %857
      %860 = vset.pattern.permute.xlu0 1
      %861 = vperm.xlu0 %860, %v609
      %v862 = vpop.permute.xlu0 %861
      %864 = vset.pattern.permute.xlu0 1
      %865 = vperm.xlu0 %864, %v610
      %v866 = vpop.permute.xlu0 %865
      %868 = vset.pattern.permute.xlu0 1
      %869 = vperm.xlu0 %868, %v611
      %v870 = vpop.permute.xlu0 %869
      %872 = vset.pattern.permute.xlu0 1
      %873 = vperm.xlu0 %872, %v612
      %v874 = vpop.permute.xlu0 %873
      %876 = vset.pattern.permute.xlu0 1
      %877 = vperm.xlu0 %876, %v613
      %v878 = vpop.permute.xlu0 %877
      %880 = vset.pattern.permute.xlu0 1
      %881 = vperm.xlu0 %880, %v614
      %v882 = vpop.permute.xlu0 %881
      %884 = vset.pattern.permute.xlu0 1
      %885 = vperm.xlu0 %884, %v615
      %v886 = vpop.permute.xlu0 %885
      %888 = vset.pattern.permute.xlu0 1
      %889 = vperm.xlu0 %888, %v616
      %v890 = vpop.permute.xlu0 %889
      %892 = vset.pattern.permute.xlu0 1
      %893 = vperm.xlu0 %892, %v617
      %v894 = vpop.permute.xlu0 %893
      %896 = vset.pattern.permute.xlu0 1
      %897 = vperm.xlu0 %896, %v618
      %v898 = vpop.permute.xlu0 %897
      %900 = vset.pattern.permute.xlu0 1
      %901 = vperm.xlu0 %900, %v619
      %v902 = vpop.permute.xlu0 %901
      %904 = vset.pattern.permute.xlu0 1
      %905 = vperm.xlu0 %904, %v620
      %v906 = vpop.permute.xlu0 %905
      %908 = vset.pattern.permute.xlu0 1
      %909 = vperm.xlu0 %908, %v621
      %v910 = vpop.permute.xlu0 %909
      %912 = vset.pattern.permute.xlu0 1
      %913 = vperm.xlu0 %912, %v622
      %v914 = vpop.permute.xlu0 %913
      %916 = vset.pattern.permute.xlu0 1
      %917 = vperm.xlu0 %916, %v623
      %v918 = vpop.permute.xlu0 %917
      %920 = vset.pattern.permute.xlu0 1
      %921 = vperm.xlu0 %920, %v624
      %v922 = vpop.permute.xlu0 %921
      %924 = vset.pattern.permute.xlu0 1
      %925 = vperm.xlu0 %924, %v625
      %v926 = vpop.permute.xlu0 %925
      %928 = vset.pattern.permute.xlu0 1
      %929 = vperm.xlu0 %928, %v626
      %v930 = vpop.permute.xlu0 %929
      %932 = vset.pattern.permute.xlu0 1
      %933 = vperm.xlu0 %932, %v627
      %v934 = vpop.permute.xlu0 %933
      %936 = vset.pattern.permute.xlu0 1
      %937 = vperm.xlu0 %936, %v628
      %v938 = vpop.permute.xlu0 %937
      %940 = vset.pattern.permute.xlu0 1
      %941 = vperm.xlu0 %940, %v629
      %v942 = vpop.permute.xlu0 %941
      %944 = vset.pattern.permute.xlu0 1
      %945 = vperm.xlu0 %944, %v630
      %v946 = vpop.permute.xlu0 %945
      %948 = vset.pattern.permute.xlu0 1
      %949 = vperm.xlu0 %948, %v631
      %v950 = vpop.permute.xlu0 %949
      %v952 = vadd.f32 %v568, %v826
      %v953 = vadd.f32 %v569, %v830
      %v954 = vadd.f32 %v570, %v834
      %v955 = vadd.f32 %v571, %v838
      %v956 = vadd.f32 %v572, %v842
      %v957 = vadd.f32 %v573, %v846
      %v958 = vadd.f32 %v574, %v850
      %v959 = vadd.f32 %v575, %v854
      %v960 = vadd.f32 %v576, %v858
      %v961 = vadd.f32 %v577, %v862
      %v962 = vadd.f32 %v578, %v866
      %v963 = vadd.f32 %v579, %v870
      %v964 = vadd.f32 %v580, %v874
      %v965 = vadd.f32 %v581, %v878
      %v966 = vadd.f32 %v582, %v882
      %v967 = vadd.f32 %v583, %v886
      %v968 = vadd.f32 %v584, %v890
      %v969 = vadd.f32 %v585, %v894
      %v970 = vadd.f32 %v586, %v898
      %v971 = vadd.f32 %v587, %v902
      %v972 = vadd.f32 %v588, %v906
      %v973 = vadd.f32 %v589, %v910
      %v974 = vadd.f32 %v590, %v914
      %v975 = vadd.f32 %v591, %v918
      %v976 = vadd.f32 %v592, %v922
      %v977 = vadd.f32 %v593, %v926
      %v978 = vadd.f32 %v594, %v930
      %v979 = vadd.f32 %v595, %v934
      %v980 = vadd.f32 %v596, %v938
      %v981 = vadd.f32 %v597, %v942
      %v982 = vadd.f32 %v598, %v946
      %v983 = vadd.f32 %v599, %v950
      %1016 = vrot.lane.b32.xlu0 %v952, 124
      %v1017 = vpop.permute.xlu0 %1016
      %1018 = vrot.lane.b32.xlu0 %v953, 124
      %v1019 = vpop.permute.xlu0 %1018
      %1020 = vrot.lane.b32.xlu0 %v954, 124
      %v1021 = vpop.permute.xlu0 %1020
      %1022 = vrot.lane.b32.xlu0 %v955, 124
      %v1023 = vpop.permute.xlu0 %1022
      %1024 = vrot.lane.b32.xlu0 %v956, 124
      %v1025 = vpop.permute.xlu0 %1024
      %1026 = vrot.lane.b32.xlu0 %v957, 124
      %v1027 = vpop.permute.xlu0 %1026
      %1028 = vrot.lane.b32.xlu0 %v958, 124
      %v1029 = vpop.permute.xlu0 %1028
      %1030 = vrot.lane.b32.xlu0 %v959, 124
      %v1031 = vpop.permute.xlu0 %1030
      %1032 = vrot.lane.b32.xlu0 %v960, 124
      %v1033 = vpop.permute.xlu0 %1032
      %1034 = vrot.lane.b32.xlu0 %v961, 124
      %v1035 = vpop.permute.xlu0 %1034
      %1036 = vrot.lane.b32.xlu0 %v962, 124
      %v1037 = vpop.permute.xlu0 %1036
      %1038 = vrot.lane.b32.xlu0 %v963, 124
      %v1039 = vpop.permute.xlu0 %1038
      %1040 = vrot.lane.b32.xlu0 %v964, 124
      %v1041 = vpop.permute.xlu0 %1040
      %1042 = vrot.lane.b32.xlu0 %v965, 124
      %v1043 = vpop.permute.xlu0 %1042
      %1044 = vrot.lane.b32.xlu0 %v966, 124
      %v1045 = vpop.permute.xlu0 %1044
      %1046 = vrot.lane.b32.xlu0 %v967, 124
      %v1047 = vpop.permute.xlu0 %1046
      %1048 = vrot.lane.b32.xlu0 %v968, 124
      %v1049 = vpop.permute.xlu0 %1048
      %1050 = vrot.lane.b32.xlu0 %v969, 124
      %v1051 = vpop.permute.xlu0 %1050
      %1052 = vrot.lane.b32.xlu0 %v970, 124
      %v1053 = vpop.permute.xlu0 %1052
      %1054 = vrot.lane.b32.xlu0 %v971, 124
      %v1055 = vpop.permute.xlu0 %1054
      %1056 = vrot.lane.b32.xlu0 %v972, 124
      %v1057 = vpop.permute.xlu0 %1056
      %1058 = vrot.lane.b32.xlu0 %v973, 124
      %v1059 = vpop.permute.xlu0 %1058
      %1060 = vrot.lane.b32.xlu0 %v974, 124
      %v1061 = vpop.permute.xlu0 %1060
      %1062 = vrot.lane.b32.xlu0 %v975, 124
      %v1063 = vpop.permute.xlu0 %1062
      %1064 = vrot.lane.b32.xlu0 %v976, 124
      %v1065 = vpop.permute.xlu0 %1064
      %1066 = vrot.lane.b32.xlu0 %v977, 124
      %v1067 = vpop.permute.xlu0 %1066
      %1068 = vrot.lane.b32.xlu0 %v978, 124
      %v1069 = vpop.permute.xlu0 %1068
      %1070 = vrot.lane.b32.xlu0 %v979, 124
      %v1071 = vpop.permute.xlu0 %1070
      %1072 = vrot.lane.b32.xlu0 %v980, 124
      %v1073 = vpop.permute.xlu0 %1072
      %1074 = vrot.lane.b32.xlu0 %v981, 124
      %v1075 = vpop.permute.xlu0 %1074
      %1076 = vrot.lane.b32.xlu0 %v982, 124
      %v1077 = vpop.permute.xlu0 %1076
      %1078 = vrot.lane.b32.xlu0 %v983, 124
      %v1079 = vpop.permute.xlu0 %1078
      %v1112 = vmax.f32 %v792, %v1017
      %v1113 = vmax.f32 %v793, %v1019
      %v1114 = vmax.f32 %v794, %v1021
      %v1115 = vmax.f32 %v795, %v1023
      %v1116 = vmax.f32 %v796, %v1025
      %v1117 = vmax.f32 %v797, %v1027
      %v1118 = vmax.f32 %v798, %v1029
      %v1119 = vmax.f32 %v799, %v1031
      %v1120 = vmax.f32 %v800, %v1033
      %v1121 = vmax.f32 %v801, %v1035
      %v1122 = vmax.f32 %v802, %v1037
      %v1123 = vmax.f32 %v803, %v1039
      %v1124 = vmax.f32 %v804, %v1041
      %v1125 = vmax.f32 %v805, %v1043
      %v1126 = vmax.f32 %v806, %v1045
      %v1127 = vmax.f32 %v807, %v1047
      %v1128 = vmax.f32 %v808, %v1049
      %v1129 = vmax.f32 %v809, %v1051
      %v1130 = vmax.f32 %v810, %v1053
      %v1131 = vmax.f32 %v811, %v1055
      %v1132 = vmax.f32 %v812, %v1057
      %v1133 = vmax.f32 %v813, %v1059
      %v1134 = vmax.f32 %v814, %v1061
      %v1135 = vmax.f32 %v815, %v1063
      %v1136 = vmax.f32 %v816, %v1065
      %v1137 = vmax.f32 %v817, %v1067
      %v1138 = vmax.f32 %v818, %v1069
      %v1139 = vmax.f32 %v819, %v1071
      %v1140 = vmax.f32 %v820, %v1073
      %v1141 = vmax.f32 %v821, %v1075
      %v1142 = vmax.f32 %v822, %v1077
      %v1143 = vmax.f32 %v823, %v1079
      %1144 = vset.pattern.permute.xlu0 2
      %1145 = vperm.xlu0 %1144, %v600
      %v1146 = vpop.permute.xlu0 %1145
      %1148 = vset.pattern.permute.xlu0 2
      %1149 = vperm.xlu0 %1148, %v601
      %v1150 = vpop.permute.xlu0 %1149
      %1152 = vset.pattern.permute.xlu0 2
      %1153 = vperm.xlu0 %1152, %v602
      %v1154 = vpop.permute.xlu0 %1153
      %1156 = vset.pattern.permute.xlu0 2
      %1157 = vperm.xlu0 %1156, %v603
      %v1158 = vpop.permute.xlu0 %1157
      %1160 = vset.pattern.permute.xlu0 2
      %1161 = vperm.xlu0 %1160, %v604
      %v1162 = vpop.permute.xlu0 %1161
      %1164 = vset.pattern.permute.xlu0 2
      %1165 = vperm.xlu0 %1164, %v605
      %v1166 = vpop.permute.xlu0 %1165
      %1168 = vset.pattern.permute.xlu0 2
      %1169 = vperm.xlu0 %1168, %v606
      %v1170 = vpop.permute.xlu0 %1169
      %1172 = vset.pattern.permute.xlu0 2
      %1173 = vperm.xlu0 %1172, %v607
      %v1174 = vpop.permute.xlu0 %1173
      %1176 = vset.pattern.permute.xlu0 2
      %1177 = vperm.xlu0 %1176, %v608
      %v1178 = vpop.permute.xlu0 %1177
      %1180 = vset.pattern.permute.xlu0 2
      %1181 = vperm.xlu0 %1180, %v609
      %v1182 = vpop.permute.xlu0 %1181
      %1184 = vset.pattern.permute.xlu0 2
      %1185 = vperm.xlu0 %1184, %v610
      %v1186 = vpop.permute.xlu0 %1185
      %1188 = vset.pattern.permute.xlu0 2
      %1189 = vperm.xlu0 %1188, %v611
      %v1190 = vpop.permute.xlu0 %1189
      %1192 = vset.pattern.permute.xlu0 2
      %1193 = vperm.xlu0 %1192, %v612
      %v1194 = vpop.permute.xlu0 %1193
      %1196 = vset.pattern.permute.xlu0 2
      %1197 = vperm.xlu0 %1196, %v613
      %v1198 = vpop.permute.xlu0 %1197
      %1200 = vset.pattern.permute.xlu0 2
      %1201 = vperm.xlu0 %1200, %v614
      %v1202 = vpop.permute.xlu0 %1201
      %1204 = vset.pattern.permute.xlu0 2
      %1205 = vperm.xlu0 %1204, %v615
      %v1206 = vpop.permute.xlu0 %1205
      %1208 = vset.pattern.permute.xlu0 2
      %1209 = vperm.xlu0 %1208, %v616
      %v1210 = vpop.permute.xlu0 %1209
      %1212 = vset.pattern.permute.xlu0 2
      %1213 = vperm.xlu0 %1212, %v617
      %v1214 = vpop.permute.xlu0 %1213
      %1216 = vset.pattern.permute.xlu0 2
      %1217 = vperm.xlu0 %1216, %v618
      %v1218 = vpop.permute.xlu0 %1217
      %1220 = vset.pattern.permute.xlu0 2
      %1221 = vperm.xlu0 %1220, %v619
      %v1222 = vpop.permute.xlu0 %1221
      %1224 = vset.pattern.permute.xlu0 2
      %1225 = vperm.xlu0 %1224, %v620
      %v1226 = vpop.permute.xlu0 %1225
      %1228 = vset.pattern.permute.xlu0 2
      %1229 = vperm.xlu0 %1228, %v621
      %v1230 = vpop.permute.xlu0 %1229
      %1232 = vset.pattern.permute.xlu0 2
      %1233 = vperm.xlu0 %1232, %v622
      %v1234 = vpop.permute.xlu0 %1233
      %1236 = vset.pattern.permute.xlu0 2
      %1237 = vperm.xlu0 %1236, %v623
      %v1238 = vpop.permute.xlu0 %1237
      %1240 = vset.pattern.permute.xlu0 2
      %1241 = vperm.xlu0 %1240, %v624
      %v1242 = vpop.permute.xlu0 %1241
      %1244 = vset.pattern.permute.xlu0 2
      %1245 = vperm.xlu0 %1244, %v625
      %v1246 = vpop.permute.xlu0 %1245
      %1248 = vset.pattern.permute.xlu0 2
      %1249 = vperm.xlu0 %1248, %v626
      %v1250 = vpop.permute.xlu0 %1249
      %1252 = vset.pattern.permute.xlu0 2
      %1253 = vperm.xlu0 %1252, %v627
      %v1254 = vpop.permute.xlu0 %1253
      %1256 = vset.pattern.permute.xlu0 2
      %1257 = vperm.xlu0 %1256, %v628
      %v1258 = vpop.permute.xlu0 %1257
      %1260 = vset.pattern.permute.xlu0 2
      %1261 = vperm.xlu0 %1260, %v629
      %v1262 = vpop.permute.xlu0 %1261
      %1264 = vset.pattern.permute.xlu0 2
      %1265 = vperm.xlu0 %1264, %v630
      %v1266 = vpop.permute.xlu0 %1265
      %1268 = vset.pattern.permute.xlu0 2
      %1269 = vperm.xlu0 %1268, %v631
      %v1270 = vpop.permute.xlu0 %1269
      %v1272 = vadd.f32 %v568, %v1146
      %v1273 = vadd.f32 %v569, %v1150
      %v1274 = vadd.f32 %v570, %v1154
      %v1275 = vadd.f32 %v571, %v1158
      %v1276 = vadd.f32 %v572, %v1162
      %v1277 = vadd.f32 %v573, %v1166
      %v1278 = vadd.f32 %v574, %v1170
      %v1279 = vadd.f32 %v575, %v1174
      %v1280 = vadd.f32 %v576, %v1178
      %v1281 = vadd.f32 %v577, %v1182
      %v1282 = vadd.f32 %v578, %v1186
      %v1283 = vadd.f32 %v579, %v1190
      %v1284 = vadd.f32 %v580, %v1194
      %v1285 = vadd.f32 %v581, %v1198
      %v1286 = vadd.f32 %v582, %v1202
      %v1287 = vadd.f32 %v583, %v1206
      %v1288 = vadd.f32 %v584, %v1210
      %v1289 = vadd.f32 %v585, %v1214
      %v1290 = vadd.f32 %v586, %v1218
      %v1291 = vadd.f32 %v587, %v1222
      %v1292 = vadd.f32 %v588, %v1226
      %v1293 = vadd.f32 %v589, %v1230
      %v1294 = vadd.f32 %v590, %v1234
      %v1295 = vadd.f32 %v591, %v1238
      %v1296 = vadd.f32 %v592, %v1242
      %v1297 = vadd.f32 %v593, %v1246
      %v1298 = vadd.f32 %v594, %v1250
      %v1299 = vadd.f32 %v595, %v1254
      %v1300 = vadd.f32 %v596, %v1258
      %v1301 = vadd.f32 %v597, %v1262
      %v1302 = vadd.f32 %v598, %v1266
      %v1303 = vadd.f32 %v599, %v1270
      %1336 = vrot.lane.b32.xlu0 %v1272, 120
      %v1337 = vpop.permute.xlu0 %1336
      %1338 = vrot.lane.b32.xlu0 %v1273, 120
      %v1339 = vpop.permute.xlu0 %1338
      %1340 = vrot.lane.b32.xlu0 %v1274, 120
      %v1341 = vpop.permute.xlu0 %1340
      %1342 = vrot.lane.b32.xlu0 %v1275, 120
      %v1343 = vpop.permute.xlu0 %1342
      %1344 = vrot.lane.b32.xlu0 %v1276, 120
      %v1345 = vpop.permute.xlu0 %1344
      %1346 = vrot.lane.b32.xlu0 %v1277, 120
      %v1347 = vpop.permute.xlu0 %1346
      %1348 = vrot.lane.b32.xlu0 %v1278, 120
      %v1349 = vpop.permute.xlu0 %1348
      %1350 = vrot.lane.b32.xlu0 %v1279, 120
      %v1351 = vpop.permute.xlu0 %1350
      %1352 = vrot.lane.b32.xlu0 %v1280, 120
      %v1353 = vpop.permute.xlu0 %1352
      %1354 = vrot.lane.b32.xlu0 %v1281, 120
      %v1355 = vpop.permute.xlu0 %1354
      %1356 = vrot.lane.b32.xlu0 %v1282, 120
      %v1357 = vpop.permute.xlu0 %1356
      %1358 = vrot.lane.b32.xlu0 %v1283, 120
      %v1359 = vpop.permute.xlu0 %1358
      %1360 = vrot.lane.b32.xlu0 %v1284, 120
      %v1361 = vpop.permute.xlu0 %1360
      %1362 = vrot.lane.b32.xlu0 %v1285, 120
      %v1363 = vpop.permute.xlu0 %1362
      %1364 = vrot.lane.b32.xlu0 %v1286, 120
      %v1365 = vpop.permute.xlu0 %1364
      %1366 = vrot.lane.b32.xlu0 %v1287, 120
      %v1367 = vpop.permute.xlu0 %1366
      %1368 = vrot.lane.b32.xlu0 %v1288, 120
      %v1369 = vpop.permute.xlu0 %1368
      %1370 = vrot.lane.b32.xlu0 %v1289, 120
      %v1371 = vpop.permute.xlu0 %1370
      %1372 = vrot.lane.b32.xlu0 %v1290, 120
      %v1373 = vpop.permute.xlu0 %1372
      %1374 = vrot.lane.b32.xlu0 %v1291, 120
      %v1375 = vpop.permute.xlu0 %1374
      %1376 = vrot.lane.b32.xlu0 %v1292, 120
      %v1377 = vpop.permute.xlu0 %1376
      %1378 = vrot.lane.b32.xlu0 %v1293, 120
      %v1379 = vpop.permute.xlu0 %1378
      %1380 = vrot.lane.b32.xlu0 %v1294, 120
      %v1381 = vpop.permute.xlu0 %1380
      %1382 = vrot.lane.b32.xlu0 %v1295, 120
      %v1383 = vpop.permute.xlu0 %1382
      %1384 = vrot.lane.b32.xlu0 %v1296, 120
      %v1385 = vpop.permute.xlu0 %1384
      %1386 = vrot.lane.b32.xlu0 %v1297, 120
      %v1387 = vpop.permute.xlu0 %1386
      %1388 = vrot.lane.b32.xlu0 %v1298, 120
      %v1389 = vpop.permute.xlu0 %1388
      %1390 = vrot.lane.b32.xlu0 %v1299, 120
      %v1391 = vpop.permute.xlu0 %1390
      %1392 = vrot.lane.b32.xlu0 %v1300, 120
      %v1393 = vpop.permute.xlu0 %1392
      %1394 = vrot.lane.b32.xlu0 %v1301, 120
      %v1395 = vpop.permute.xlu0 %1394
      %1396 = vrot.lane.b32.xlu0 %v1302, 120
      %v1397 = vpop.permute.xlu0 %1396
      %1398 = vrot.lane.b32.xlu0 %v1303, 120
      %v1399 = vpop.permute.xlu0 %1398
      %v1432 = vmax.f32 %v1112, %v1337
      %v1433 = vmax.f32 %v1113, %v1339
      %v1434 = vmax.f32 %v1114, %v1341
      %v1435 = vmax.f32 %v1115, %v1343
      %v1436 = vmax.f32 %v1116, %v1345
      %v1437 = vmax.f32 %v1117, %v1347
      %v1438 = vmax.f32 %v1118, %v1349
      %v1439 = vmax.f32 %v1119, %v1351
      %v1440 = vmax.f32 %v1120, %v1353
      %v1441 = vmax.f32 %v1121, %v1355
      %v1442 = vmax.f32 %v1122, %v1357
      %v1443 = vmax.f32 %v1123, %v1359
      %v1444 = vmax.f32 %v1124, %v1361
      %v1445 = vmax.f32 %v1125, %v1363
      %v1446 = vmax.f32 %v1126, %v1365
      %v1447 = vmax.f32 %v1127, %v1367
      %v1448 = vmax.f32 %v1128, %v1369
      %v1449 = vmax.f32 %v1129, %v1371
      %v1450 = vmax.f32 %v1130, %v1373
      %v1451 = vmax.f32 %v1131, %v1375
      %v1452 = vmax.f32 %v1132, %v1377
      %v1453 = vmax.f32 %v1133, %v1379
      %v1454 = vmax.f32 %v1134, %v1381
      %v1455 = vmax.f32 %v1135, %v1383
      %v1456 = vmax.f32 %v1136, %v1385
      %v1457 = vmax.f32 %v1137, %v1387
      %v1458 = vmax.f32 %v1138, %v1389
      %v1459 = vmax.f32 %v1139, %v1391
      %v1460 = vmax.f32 %v1140, %v1393
      %v1461 = vmax.f32 %v1141, %v1395
      %v1462 = vmax.f32 %v1142, %v1397
      %v1463 = vmax.f32 %v1143, %v1399
      %1464 = vset.pattern.permute.xlu0 3
      %1465 = vperm.xlu0 %1464, %v600
      %v1466 = vpop.permute.xlu0 %1465
      %1468 = vset.pattern.permute.xlu0 3
      %1469 = vperm.xlu0 %1468, %v601
      %v1470 = vpop.permute.xlu0 %1469
      %1472 = vset.pattern.permute.xlu0 3
      %1473 = vperm.xlu0 %1472, %v602
      %v1474 = vpop.permute.xlu0 %1473
      %1476 = vset.pattern.permute.xlu0 3
      %1477 = vperm.xlu0 %1476, %v603
      %v1478 = vpop.permute.xlu0 %1477
      %1480 = vset.pattern.permute.xlu0 3
      %1481 = vperm.xlu0 %1480, %v604
      %v1482 = vpop.permute.xlu0 %1481
      %1484 = vset.pattern.permute.xlu0 3
      %1485 = vperm.xlu0 %1484, %v605
      %v1486 = vpop.permute.xlu0 %1485
      %1488 = vset.pattern.permute.xlu0 3
      %1489 = vperm.xlu0 %1488, %v606
      %v1490 = vpop.permute.xlu0 %1489
      %1492 = vset.pattern.permute.xlu0 3
      %1493 = vperm.xlu0 %1492, %v607
      %v1494 = vpop.permute.xlu0 %1493
      %1496 = vset.pattern.permute.xlu0 3
      %1497 = vperm.xlu0 %1496, %v608
      %v1498 = vpop.permute.xlu0 %1497
      %1500 = vset.pattern.permute.xlu0 3
      %1501 = vperm.xlu0 %1500, %v609
      %v1502 = vpop.permute.xlu0 %1501
      %1504 = vset.pattern.permute.xlu0 3
      %1505 = vperm.xlu0 %1504, %v610
      %v1506 = vpop.permute.xlu0 %1505
      %1508 = vset.pattern.permute.xlu0 3
      %1509 = vperm.xlu0 %1508, %v611
      %v1510 = vpop.permute.xlu0 %1509
      %1512 = vset.pattern.permute.xlu0 3
      %1513 = vperm.xlu0 %1512, %v612
      %v1514 = vpop.permute.xlu0 %1513
      %1516 = vset.pattern.permute.xlu0 3
      %1517 = vperm.xlu0 %1516, %v613
      %v1518 = vpop.permute.xlu0 %1517
      %1520 = vset.pattern.permute.xlu0 3
      %1521 = vperm.xlu0 %1520, %v614
      %v1522 = vpop.permute.xlu0 %1521
      %1524 = vset.pattern.permute.xlu0 3
      %1525 = vperm.xlu0 %1524, %v615
      %v1526 = vpop.permute.xlu0 %1525
      %1528 = vset.pattern.permute.xlu0 3
      %1529 = vperm.xlu0 %1528, %v616
      %v1530 = vpop.permute.xlu0 %1529
      %1532 = vset.pattern.permute.xlu0 3
      %1533 = vperm.xlu0 %1532, %v617
      %v1534 = vpop.permute.xlu0 %1533
      %1536 = vset.pattern.permute.xlu0 3
      %1537 = vperm.xlu0 %1536, %v618
      %v1538 = vpop.permute.xlu0 %1537
      %1540 = vset.pattern.permute.xlu0 3
      %1541 = vperm.xlu0 %1540, %v619
      %v1542 = vpop.permute.xlu0 %1541
      %1544 = vset.pattern.permute.xlu0 3
      %1545 = vperm.xlu0 %1544, %v620
      %v1546 = vpop.permute.xlu0 %1545
      %1548 = vset.pattern.permute.xlu0 3
      %1549 = vperm.xlu0 %1548, %v621
      %v1550 = vpop.permute.xlu0 %1549
      %1552 = vset.pattern.permute.xlu0 3
      %1553 = vperm.xlu0 %1552, %v622
      %v1554 = vpop.permute.xlu0 %1553
      %1556 = vset.pattern.permute.xlu0 3
      %1557 = vperm.xlu0 %1556, %v623
      %v1558 = vpop.permute.xlu0 %1557
      %1560 = vset.pattern.permute.xlu0 3
      %1561 = vperm.xlu0 %1560, %v624
      %v1562 = vpop.permute.xlu0 %1561
      %1564 = vset.pattern.permute.xlu0 3
      %1565 = vperm.xlu0 %1564, %v625
      %v1566 = vpop.permute.xlu0 %1565
      %1568 = vset.pattern.permute.xlu0 3
      %1569 = vperm.xlu0 %1568, %v626
      %v1570 = vpop.permute.xlu0 %1569
      %1572 = vset.pattern.permute.xlu0 3
      %1573 = vperm.xlu0 %1572, %v627
      %v1574 = vpop.permute.xlu0 %1573
      %1576 = vset.pattern.permute.xlu0 3
      %1577 = vperm.xlu0 %1576, %v628
      %v1578 = vpop.permute.xlu0 %1577
      %1580 = vset.pattern.permute.xlu0 3
      %1581 = vperm.xlu0 %1580, %v629
      %v1582 = vpop.permute.xlu0 %1581
      %1584 = vset.pattern.permute.xlu0 3
      %1585 = vperm.xlu0 %1584, %v630
      %v1586 = vpop.permute.xlu0 %1585
      %1588 = vset.pattern.permute.xlu0 3
      %1589 = vperm.xlu0 %1588, %v631
      %v1590 = vpop.permute.xlu0 %1589
      %v1592 = vadd.f32 %v568, %v1466
      %v1593 = vadd.f32 %v569, %v1470
      %v1594 = vadd.f32 %v570, %v1474
      %v1595 = vadd.f32 %v571, %v1478
      %v1596 = vadd.f32 %v572, %v1482
      %v1597 = vadd.f32 %v573, %v1486
      %v1598 = vadd.f32 %v574, %v1490
      %v1599 = vadd.f32 %v575, %v1494
      %v1600 = vadd.f32 %v576, %v1498
      %v1601 = vadd.f32 %v577, %v1502
      %v1602 = vadd.f32 %v578, %v1506
      %v1603 = vadd.f32 %v579, %v1510
      %v1604 = vadd.f32 %v580, %v1514
      %v1605 = vadd.f32 %v581, %v1518
      %v1606 = vadd.f32 %v582, %v1522
      %v1607 = vadd.f32 %v583, %v1526
      %v1608 = vadd.f32 %v584, %v1530
      %v1609 = vadd.f32 %v585, %v1534
      %v1610 = vadd.f32 %v586, %v1538
      %v1611 = vadd.f32 %v587, %v1542
      %v1612 = vadd.f32 %v588, %v1546
      %v1613 = vadd.f32 %v589, %v1550
      %v1614 = vadd.f32 %v590, %v1554
      %v1615 = vadd.f32 %v591, %v1558
      %v1616 = vadd.f32 %v592, %v1562
      %v1617 = vadd.f32 %v593, %v1566
      %v1618 = vadd.f32 %v594, %v1570
      %v1619 = vadd.f32 %v595, %v1574
      %v1620 = vadd.f32 %v596, %v1578
      %v1621 = vadd.f32 %v597, %v1582
      %v1622 = vadd.f32 %v598, %v1586
      %v1623 = vadd.f32 %v599, %v1590
      %1656 = vrot.lane.b32.xlu0 %v1592, 108
      %v1657 = vpop.permute.xlu0 %1656
      %1658 = vrot.lane.b32.xlu0 %v1593, 108
      %v1659 = vpop.permute.xlu0 %1658
      %1660 = vrot.lane.b32.xlu0 %v1594, 108
      %v1661 = vpop.permute.xlu0 %1660
      %1662 = vrot.lane.b32.xlu0 %v1595, 108
      %v1663 = vpop.permute.xlu0 %1662
      %1664 = vrot.lane.b32.xlu0 %v1596, 108
      %v1665 = vpop.permute.xlu0 %1664
      %1666 = vrot.lane.b32.xlu0 %v1597, 108
      %v1667 = vpop.permute.xlu0 %1666
      %1668 = vrot.lane.b32.xlu0 %v1598, 108
      %v1669 = vpop.permute.xlu0 %1668
      %1670 = vrot.lane.b32.xlu0 %v1599, 108
      %v1671 = vpop.permute.xlu0 %1670
      %1672 = vrot.lane.b32.xlu0 %v1600, 108
      %v1673 = vpop.permute.xlu0 %1672
      %1674 = vrot.lane.b32.xlu0 %v1601, 108
      %v1675 = vpop.permute.xlu0 %1674
      %1676 = vrot.lane.b32.xlu0 %v1602, 108
      %v1677 = vpop.permute.xlu0 %1676
      %1678 = vrot.lane.b32.xlu0 %v1603, 108
      %v1679 = vpop.permute.xlu0 %1678
      %1680 = vrot.lane.b32.xlu0 %v1604, 108
      %v1681 = vpop.permute.xlu0 %1680
      %1682 = vrot.lane.b32.xlu0 %v1605, 108
      %v1683 = vpop.permute.xlu0 %1682
      %1684 = vrot.lane.b32.xlu0 %v1606, 108
      %v1685 = vpop.permute.xlu0 %1684
      %1686 = vrot.lane.b32.xlu0 %v1607, 108
      %v1687 = vpop.permute.xlu0 %1686
      %1688 = vrot.lane.b32.xlu0 %v1608, 108
      %v1689 = vpop.permute.xlu0 %1688
      %1690 = vrot.lane.b32.xlu0 %v1609, 108
      %v1691 = vpop.permute.xlu0 %1690
      %1692 = vrot.lane.b32.xlu0 %v1610, 108
      %v1693 = vpop.permute.xlu0 %1692
      %1694 = vrot.lane.b32.xlu0 %v1611, 108
      %v1695 = vpop.permute.xlu0 %1694
      %1696 = vrot.lane.b32.xlu0 %v1612, 108
      %v1697 = vpop.permute.xlu0 %1696
      %1698 = vrot.lane.b32.xlu0 %v1613, 108
      %v1699 = vpop.permute.xlu0 %1698
      %1700 = vrot.lane.b32.xlu0 %v1614, 108
      %v1701 = vpop.permute.xlu0 %1700
      %1702 = vrot.lane.b32.xlu0 %v1615, 108
      %v1703 = vpop.permute.xlu0 %1702
      %1704 = vrot.lane.b32.xlu0 %v1616, 108
      %v1705 = vpop.permute.xlu0 %1704
      %1706 = vrot.lane.b32.xlu0 %v1617, 108
      %v1707 = vpop.permute.xlu0 %1706
      %1708 = vrot.lane.b32.xlu0 %v1618, 108
      %v1709 = vpop.permute.xlu0 %1708
      %1710 = vrot.lane.b32.xlu0 %v1619, 108
      %v1711 = vpop.permute.xlu0 %1710
      %1712 = vrot.lane.b32.xlu0 %v1620, 108
      %v1713 = vpop.permute.xlu0 %1712
      %1714 = vrot.lane.b32.xlu0 %v1621, 108
      %v1715 = vpop.permute.xlu0 %1714
      %1716 = vrot.lane.b32.xlu0 %v1622, 108
      %v1717 = vpop.permute.xlu0 %1716
      %1718 = vrot.lane.b32.xlu0 %v1623, 108
      %v1719 = vpop.permute.xlu0 %1718
      %v1752 = vmax.f32 %v1432, %v1657
      %v1753 = vmax.f32 %v1433, %v1659
      %v1754 = vmax.f32 %v1434, %v1661
      %v1755 = vmax.f32 %v1435, %v1663
      %v1756 = vmax.f32 %v1436, %v1665
      %v1757 = vmax.f32 %v1437, %v1667
      %v1758 = vmax.f32 %v1438, %v1669
      %v1759 = vmax.f32 %v1439, %v1671
      %v1760 = vmax.f32 %v1440, %v1673
      %v1761 = vmax.f32 %v1441, %v1675
      %v1762 = vmax.f32 %v1442, %v1677
      %v1763 = vmax.f32 %v1443, %v1679
      %v1764 = vmax.f32 %v1444, %v1681
      %v1765 = vmax.f32 %v1445, %v1683
      %v1766 = vmax.f32 %v1446, %v1685
      %v1767 = vmax.f32 %v1447, %v1687
      %v1768 = vmax.f32 %v1448, %v1689
      %v1769 = vmax.f32 %v1449, %v1691
      %v1770 = vmax.f32 %v1450, %v1693
      %v1771 = vmax.f32 %v1451, %v1695
      %v1772 = vmax.f32 %v1452, %v1697
      %v1773 = vmax.f32 %v1453, %v1699
      %v1774 = vmax.f32 %v1454, %v1701
      %v1775 = vmax.f32 %v1455, %v1703
      %v1776 = vmax.f32 %v1456, %v1705
      %v1777 = vmax.f32 %v1457, %v1707
      %v1778 = vmax.f32 %v1458, %v1709
      %v1779 = vmax.f32 %v1459, %v1711
      %v1780 = vmax.f32 %v1460, %v1713
      %v1781 = vmax.f32 %v1461, %v1715
      %v1782 = vmax.f32 %v1462, %v1717
      %v1783 = vmax.f32 %v1463, %v1719
      %1784 = vset.pattern.permute.xlu0 4
      %1785 = vperm.xlu0 %1784, %v600
      %v1786 = vpop.permute.xlu0 %1785
      %1788 = vset.pattern.permute.xlu0 4
      %1789 = vperm.xlu0 %1788, %v601
      %v1790 = vpop.permute.xlu0 %1789
      %1792 = vset.pattern.permute.xlu0 4
      %1793 = vperm.xlu0 %1792, %v602
      %v1794 = vpop.permute.xlu0 %1793
      %1796 = vset.pattern.permute.xlu0 4
      %1797 = vperm.xlu0 %1796, %v603
      %v1798 = vpop.permute.xlu0 %1797
      %1800 = vset.pattern.permute.xlu0 4
      %1801 = vperm.xlu0 %1800, %v604
      %v1802 = vpop.permute.xlu0 %1801
      %1804 = vset.pattern.permute.xlu0 4
      %1805 = vperm.xlu0 %1804, %v605
      %v1806 = vpop.permute.xlu0 %1805
      %1808 = vset.pattern.permute.xlu0 4
      %1809 = vperm.xlu0 %1808, %v606
      %v1810 = vpop.permute.xlu0 %1809
      %1812 = vset.pattern.permute.xlu0 4
      %1813 = vperm.xlu0 %1812, %v607
      %v1814 = vpop.permute.xlu0 %1813
      %1816 = vset.pattern.permute.xlu0 4
      %1817 = vperm.xlu0 %1816, %v608
      %v1818 = vpop.permute.xlu0 %1817
      %1820 = vset.pattern.permute.xlu0 4
      %1821 = vperm.xlu0 %1820, %v609
      %v1822 = vpop.permute.xlu0 %1821
      %1824 = vset.pattern.permute.xlu0 4
      %1825 = vperm.xlu0 %1824, %v610
      %v1826 = vpop.permute.xlu0 %1825
      %1828 = vset.pattern.permute.xlu0 4
      %1829 = vperm.xlu0 %1828, %v611
      %v1830 = vpop.permute.xlu0 %1829
      %1832 = vset.pattern.permute.xlu0 4
      %1833 = vperm.xlu0 %1832, %v612
      %v1834 = vpop.permute.xlu0 %1833
      %1836 = vset.pattern.permute.xlu0 4
      %1837 = vperm.xlu0 %1836, %v613
      %v1838 = vpop.permute.xlu0 %1837
      %1840 = vset.pattern.permute.xlu0 4
      %1841 = vperm.xlu0 %1840, %v614
      %v1842 = vpop.permute.xlu0 %1841
      %1844 = vset.pattern.permute.xlu0 4
      %1845 = vperm.xlu0 %1844, %v615
      %v1846 = vpop.permute.xlu0 %1845
      %1848 = vset.pattern.permute.xlu0 4
      %1849 = vperm.xlu0 %1848, %v616
      %v1850 = vpop.permute.xlu0 %1849
      %1852 = vset.pattern.permute.xlu0 4
      %1853 = vperm.xlu0 %1852, %v617
      %v1854 = vpop.permute.xlu0 %1853
      %1856 = vset.pattern.permute.xlu0 4
      %1857 = vperm.xlu0 %1856, %v618
      %v1858 = vpop.permute.xlu0 %1857
      %1860 = vset.pattern.permute.xlu0 4
      %1861 = vperm.xlu0 %1860, %v619
      %v1862 = vpop.permute.xlu0 %1861
      %1864 = vset.pattern.permute.xlu0 4
      %1865 = vperm.xlu0 %1864, %v620
      %v1866 = vpop.permute.xlu0 %1865
      %1868 = vset.pattern.permute.xlu0 4
      %1869 = vperm.xlu0 %1868, %v621
      %v1870 = vpop.permute.xlu0 %1869
      %1872 = vset.pattern.permute.xlu0 4
      %1873 = vperm.xlu0 %1872, %v622
      %v1874 = vpop.permute.xlu0 %1873
      %1876 = vset.pattern.permute.xlu0 4
      %1877 = vperm.xlu0 %1876, %v623
      %v1878 = vpop.permute.xlu0 %1877
      %1880 = vset.pattern.permute.xlu0 4
      %1881 = vperm.xlu0 %1880, %v624
      %v1882 = vpop.permute.xlu0 %1881
      %1884 = vset.pattern.permute.xlu0 4
      %1885 = vperm.xlu0 %1884, %v625
      %v1886 = vpop.permute.xlu0 %1885
      %1888 = vset.pattern.permute.xlu0 4
      %1889 = vperm.xlu0 %1888, %v626
      %v1890 = vpop.permute.xlu0 %1889
      %1892 = vset.pattern.permute.xlu0 4
      %1893 = vperm.xlu0 %1892, %v627
      %v1894 = vpop.permute.xlu0 %1893
      %1896 = vset.pattern.permute.xlu0 4
      %1897 = vperm.xlu0 %1896, %v628
      %v1898 = vpop.permute.xlu0 %1897
      %1900 = vset.pattern.permute.xlu0 4
      %1901 = vperm.xlu0 %1900, %v629
      %v1902 = vpop.permute.xlu0 %1901
      %1904 = vset.pattern.permute.xlu0 4
      %1905 = vperm.xlu0 %1904, %v630
      %v1906 = vpop.permute.xlu0 %1905
      %1908 = vset.pattern.permute.xlu0 4
      %1909 = vperm.xlu0 %1908, %v631
      %v1910 = vpop.permute.xlu0 %1909
      %v1912 = vadd.f32 %v568, %v1786
      %v1913 = vadd.f32 %v569, %v1790
      %v1914 = vadd.f32 %v570, %v1794
      %v1915 = vadd.f32 %v571, %v1798
      %v1916 = vadd.f32 %v572, %v1802
      %v1917 = vadd.f32 %v573, %v1806
      %v1918 = vadd.f32 %v574, %v1810
      %v1919 = vadd.f32 %v575, %v1814
      %v1920 = vadd.f32 %v576, %v1818
      %v1921 = vadd.f32 %v577, %v1822
      %v1922 = vadd.f32 %v578, %v1826
      %v1923 = vadd.f32 %v579, %v1830
      %v1924 = vadd.f32 %v580, %v1834
      %v1925 = vadd.f32 %v581, %v1838
      %v1926 = vadd.f32 %v582, %v1842
      %v1927 = vadd.f32 %v583, %v1846
      %v1928 = vadd.f32 %v584, %v1850
      %v1929 = vadd.f32 %v585, %v1854
      %v1930 = vadd.f32 %v586, %v1858
      %v1931 = vadd.f32 %v587, %v1862
      %v1932 = vadd.f32 %v588, %v1866
      %v1933 = vadd.f32 %v589, %v1870
      %v1934 = vadd.f32 %v590, %v1874
      %v1935 = vadd.f32 %v591, %v1878
      %v1936 = vadd.f32 %v592, %v1882
      %v1937 = vadd.f32 %v593, %v1886
      %v1938 = vadd.f32 %v594, %v1890
      %v1939 = vadd.f32 %v595, %v1894
      %v1940 = vadd.f32 %v596, %v1898
      %v1941 = vadd.f32 %v597, %v1902
      %v1942 = vadd.f32 %v598, %v1906
      %v1943 = vadd.f32 %v599, %v1910
      %1976 = vrot.lane.b32.xlu0 %v1912, 104
      %v1977 = vpop.permute.xlu0 %1976
      %1978 = vrot.lane.b32.xlu0 %v1913, 104
      %v1979 = vpop.permute.xlu0 %1978
      %1980 = vrot.lane.b32.xlu0 %v1914, 104
      %v1981 = vpop.permute.xlu0 %1980
      %1982 = vrot.lane.b32.xlu0 %v1915, 104
      %v1983 = vpop.permute.xlu0 %1982
      %1984 = vrot.lane.b32.xlu0 %v1916, 104
      %v1985 = vpop.permute.xlu0 %1984
      %1986 = vrot.lane.b32.xlu0 %v1917, 104
      %v1987 = vpop.permute.xlu0 %1986
      %1988 = vrot.lane.b32.xlu0 %v1918, 104
      %v1989 = vpop.permute.xlu0 %1988
      %1990 = vrot.lane.b32.xlu0 %v1919, 104
      %v1991 = vpop.permute.xlu0 %1990
      %1992 = vrot.lane.b32.xlu0 %v1920, 104
      %v1993 = vpop.permute.xlu0 %1992
      %1994 = vrot.lane.b32.xlu0 %v1921, 104
      %v1995 = vpop.permute.xlu0 %1994
      %1996 = vrot.lane.b32.xlu0 %v1922, 104
      %v1997 = vpop.permute.xlu0 %1996
      %1998 = vrot.lane.b32.xlu0 %v1923, 104
      %v1999 = vpop.permute.xlu0 %1998
      %2000 = vrot.lane.b32.xlu0 %v1924, 104
      %v2001 = vpop.permute.xlu0 %2000
      %2002 = vrot.lane.b32.xlu0 %v1925, 104
      %v2003 = vpop.permute.xlu0 %2002
      %2004 = vrot.lane.b32.xlu0 %v1926, 104
      %v2005 = vpop.permute.xlu0 %2004
      %2006 = vrot.lane.b32.xlu0 %v1927, 104
      %v2007 = vpop.permute.xlu0 %2006
      %2008 = vrot.lane.b32.xlu0 %v1928, 104
      %v2009 = vpop.permute.xlu0 %2008
      %2010 = vrot.lane.b32.xlu0 %v1929, 104
      %v2011 = vpop.permute.xlu0 %2010
      %2012 = vrot.lane.b32.xlu0 %v1930, 104
      %v2013 = vpop.permute.xlu0 %2012
      %2014 = vrot.lane.b32.xlu0 %v1931, 104
      %v2015 = vpop.permute.xlu0 %2014
      %2016 = vrot.lane.b32.xlu0 %v1932, 104
      %v2017 = vpop.permute.xlu0 %2016
      %2018 = vrot.lane.b32.xlu0 %v1933, 104
      %v2019 = vpop.permute.xlu0 %2018
      %2020 = vrot.lane.b32.xlu0 %v1934, 104
      %v2021 = vpop.permute.xlu0 %2020
      %2022 = vrot.lane.b32.xlu0 %v1935, 104
      %v2023 = vpop.permute.xlu0 %2022
      %2024 = vrot.lane.b32.xlu0 %v1936, 104
      %v2025 = vpop.permute.xlu0 %2024
      %2026 = vrot.lane.b32.xlu0 %v1937, 104
      %v2027 = vpop.permute.xlu0 %2026
      %2028 = vrot.lane.b32.xlu0 %v1938, 104
      %v2029 = vpop.permute.xlu0 %2028
      %2030 = vrot.lane.b32.xlu0 %v1939, 104
      %v2031 = vpop.permute.xlu0 %2030
      %2032 = vrot.lane.b32.xlu0 %v1940, 104
      %v2033 = vpop.permute.xlu0 %2032
      %2034 = vrot.lane.b32.xlu0 %v1941, 104
      %v2035 = vpop.permute.xlu0 %2034
      %2036 = vrot.lane.b32.xlu0 %v1942, 104
      %v2037 = vpop.permute.xlu0 %2036
      %2038 = vrot.lane.b32.xlu0 %v1943, 104
      %v2039 = vpop.permute.xlu0 %2038
      %v2072 = vmax.f32 %v1752, %v1977
      %v2073 = vmax.f32 %v1753, %v1979
      %v2074 = vmax.f32 %v1754, %v1981
      %v2075 = vmax.f32 %v1755, %v1983
      %v2076 = vmax.f32 %v1756, %v1985
      %v2077 = vmax.f32 %v1757, %v1987
      %v2078 = vmax.f32 %v1758, %v1989
      %v2079 = vmax.f32 %v1759, %v1991
      %v2080 = vmax.f32 %v1760, %v1993
      %v2081 = vmax.f32 %v1761, %v1995
      %v2082 = vmax.f32 %v1762, %v1997
      %v2083 = vmax.f32 %v1763, %v1999
      %v2084 = vmax.f32 %v1764, %v2001
      %v2085 = vmax.f32 %v1765, %v2003
      %v2086 = vmax.f32 %v1766, %v2005
      %v2087 = vmax.f32 %v1767, %v2007
      %v2088 = vmax.f32 %v1768, %v2009
      %v2089 = vmax.f32 %v1769, %v2011
      %v2090 = vmax.f32 %v1770, %v2013
      %v2091 = vmax.f32 %v1771, %v2015
      %v2092 = vmax.f32 %v1772, %v2017
      %v2093 = vmax.f32 %v1773, %v2019
      %v2094 = vmax.f32 %v1774, %v2021
      %v2095 = vmax.f32 %v1775, %v2023
      %v2096 = vmax.f32 %v1776, %v2025
      %v2097 = vmax.f32 %v1777, %v2027
      %v2098 = vmax.f32 %v1778, %v2029
      %v2099 = vmax.f32 %v1779, %v2031
      %v2100 = vmax.f32 %v1780, %v2033
      %v2101 = vmax.f32 %v1781, %v2035
      %v2102 = vmax.f32 %v1782, %v2037
      %v2103 = vmax.f32 %v1783, %v2039
      %2104 = vset.pattern.permute.xlu0 5
      %2105 = vperm.xlu0 %2104, %v600
      %v2106 = vpop.permute.xlu0 %2105
      %2108 = vset.pattern.permute.xlu0 5
      %2109 = vperm.xlu0 %2108, %v601
      %v2110 = vpop.permute.xlu0 %2109
      %2112 = vset.pattern.permute.xlu0 5
      %2113 = vperm.xlu0 %2112, %v602
      %v2114 = vpop.permute.xlu0 %2113
      %2116 = vset.pattern.permute.xlu0 5
      %2117 = vperm.xlu0 %2116, %v603
      %v2118 = vpop.permute.xlu0 %2117
      %2120 = vset.pattern.permute.xlu0 5
      %2121 = vperm.xlu0 %2120, %v604
      %v2122 = vpop.permute.xlu0 %2121
      %2124 = vset.pattern.permute.xlu0 5
      %2125 = vperm.xlu0 %2124, %v605
      %v2126 = vpop.permute.xlu0 %2125
      %2128 = vset.pattern.permute.xlu0 5
      %2129 = vperm.xlu0 %2128, %v606
      %v2130 = vpop.permute.xlu0 %2129
      %2132 = vset.pattern.permute.xlu0 5
      %2133 = vperm.xlu0 %2132, %v607
      %v2134 = vpop.permute.xlu0 %2133
      %2136 = vset.pattern.permute.xlu0 5
      %2137 = vperm.xlu0 %2136, %v608
      %v2138 = vpop.permute.xlu0 %2137
      %2140 = vset.pattern.permute.xlu0 5
      %2141 = vperm.xlu0 %2140, %v609
      %v2142 = vpop.permute.xlu0 %2141
      %2144 = vset.pattern.permute.xlu0 5
      %2145 = vperm.xlu0 %2144, %v610
      %v2146 = vpop.permute.xlu0 %2145
      %2148 = vset.pattern.permute.xlu0 5
      %2149 = vperm.xlu0 %2148, %v611
      %v2150 = vpop.permute.xlu0 %2149
      %2152 = vset.pattern.permute.xlu0 5
      %2153 = vperm.xlu0 %2152, %v612
      %v2154 = vpop.permute.xlu0 %2153
      %2156 = vset.pattern.permute.xlu0 5
      %2157 = vperm.xlu0 %2156, %v613
      %v2158 = vpop.permute.xlu0 %2157
      %2160 = vset.pattern.permute.xlu0 5
      %2161 = vperm.xlu0 %2160, %v614
      %v2162 = vpop.permute.xlu0 %2161
      %2164 = vset.pattern.permute.xlu0 5
      %2165 = vperm.xlu0 %2164, %v615
      %v2166 = vpop.permute.xlu0 %2165
      %2168 = vset.pattern.permute.xlu0 5
      %2169 = vperm.xlu0 %2168, %v616
      %v2170 = vpop.permute.xlu0 %2169
      %2172 = vset.pattern.permute.xlu0 5
      %2173 = vperm.xlu0 %2172, %v617
      %v2174 = vpop.permute.xlu0 %2173
      %2176 = vset.pattern.permute.xlu0 5
      %2177 = vperm.xlu0 %2176, %v618
      %v2178 = vpop.permute.xlu0 %2177
      %2180 = vset.pattern.permute.xlu0 5
      %2181 = vperm.xlu0 %2180, %v619
      %v2182 = vpop.permute.xlu0 %2181
      %2184 = vset.pattern.permute.xlu0 5
      %2185 = vperm.xlu0 %2184, %v620
      %v2186 = vpop.permute.xlu0 %2185
      %2188 = vset.pattern.permute.xlu0 5
      %2189 = vperm.xlu0 %2188, %v621
      %v2190 = vpop.permute.xlu0 %2189
      %2192 = vset.pattern.permute.xlu0 5
      %2193 = vperm.xlu0 %2192, %v622
      %v2194 = vpop.permute.xlu0 %2193
      %2196 = vset.pattern.permute.xlu0 5
      %2197 = vperm.xlu0 %2196, %v623
      %v2198 = vpop.permute.xlu0 %2197
      %2200 = vset.pattern.permute.xlu0 5
      %2201 = vperm.xlu0 %2200, %v624
      %v2202 = vpop.permute.xlu0 %2201
      %2204 = vset.pattern.permute.xlu0 5
      %2205 = vperm.xlu0 %2204, %v625
      %v2206 = vpop.permute.xlu0 %2205
      %2208 = vset.pattern.permute.xlu0 5
      %2209 = vperm.xlu0 %2208, %v626
      %v2210 = vpop.permute.xlu0 %2209
      %2212 = vset.pattern.permute.xlu0 5
      %2213 = vperm.xlu0 %2212, %v627
      %v2214 = vpop.permute.xlu0 %2213
      %2216 = vset.pattern.permute.xlu0 5
      %2217 = vperm.xlu0 %2216, %v628
      %v2218 = vpop.permute.xlu0 %2217
      %2220 = vset.pattern.permute.xlu0 5
      %2221 = vperm.xlu0 %2220, %v629
      %v2222 = vpop.permute.xlu0 %2221
      %2224 = vset.pattern.permute.xlu0 5
      %2225 = vperm.xlu0 %2224, %v630
      %v2226 = vpop.permute.xlu0 %2225
      %2228 = vset.pattern.permute.xlu0 5
      %2229 = vperm.xlu0 %2228, %v631
      %v2230 = vpop.permute.xlu0 %2229
      %v2232 = vadd.f32 %v568, %v2106
      %v2233 = vadd.f32 %v569, %v2110
      %v2234 = vadd.f32 %v570, %v2114
      %v2235 = vadd.f32 %v571, %v2118
      %v2236 = vadd.f32 %v572, %v2122
      %v2237 = vadd.f32 %v573, %v2126
      %v2238 = vadd.f32 %v574, %v2130
      %v2239 = vadd.f32 %v575, %v2134
      %v2240 = vadd.f32 %v576, %v2138
      %v2241 = vadd.f32 %v577, %v2142
      %v2242 = vadd.f32 %v578, %v2146
      %v2243 = vadd.f32 %v579, %v2150
      %v2244 = vadd.f32 %v580, %v2154
      %v2245 = vadd.f32 %v581, %v2158
      %v2246 = vadd.f32 %v582, %v2162
      %v2247 = vadd.f32 %v583, %v2166
      %v2248 = vadd.f32 %v584, %v2170
      %v2249 = vadd.f32 %v585, %v2174
      %v2250 = vadd.f32 %v586, %v2178
      %v2251 = vadd.f32 %v587, %v2182
      %v2252 = vadd.f32 %v588, %v2186
      %v2253 = vadd.f32 %v589, %v2190
      %v2254 = vadd.f32 %v590, %v2194
      %v2255 = vadd.f32 %v591, %v2198
      %v2256 = vadd.f32 %v592, %v2202
      %v2257 = vadd.f32 %v593, %v2206
      %v2258 = vadd.f32 %v594, %v2210
      %v2259 = vadd.f32 %v595, %v2214
      %v2260 = vadd.f32 %v596, %v2218
      %v2261 = vadd.f32 %v597, %v2222
      %v2262 = vadd.f32 %v598, %v2226
      %v2263 = vadd.f32 %v599, %v2230
      %2296 = vrot.lane.b32.xlu0 %v2232, 100
      %v2297 = vpop.permute.xlu0 %2296
      %2298 = vrot.lane.b32.xlu0 %v2233, 100
      %v2299 = vpop.permute.xlu0 %2298
      %2300 = vrot.lane.b32.xlu0 %v2234, 100
      %v2301 = vpop.permute.xlu0 %2300
      %2302 = vrot.lane.b32.xlu0 %v2235, 100
      %v2303 = vpop.permute.xlu0 %2302
      %2304 = vrot.lane.b32.xlu0 %v2236, 100
      %v2305 = vpop.permute.xlu0 %2304
      %2306 = vrot.lane.b32.xlu0 %v2237, 100
      %v2307 = vpop.permute.xlu0 %2306
      %2308 = vrot.lane.b32.xlu0 %v2238, 100
      %v2309 = vpop.permute.xlu0 %2308
      %2310 = vrot.lane.b32.xlu0 %v2239, 100
      %v2311 = vpop.permute.xlu0 %2310
      %2312 = vrot.lane.b32.xlu0 %v2240, 100
      %v2313 = vpop.permute.xlu0 %2312
      %2314 = vrot.lane.b32.xlu0 %v2241, 100
      %v2315 = vpop.permute.xlu0 %2314
      %2316 = vrot.lane.b32.xlu0 %v2242, 100
      %v2317 = vpop.permute.xlu0 %2316
      %2318 = vrot.lane.b32.xlu0 %v2243, 100
      %v2319 = vpop.permute.xlu0 %2318
      %2320 = vrot.lane.b32.xlu0 %v2244, 100
      %v2321 = vpop.permute.xlu0 %2320
      %2322 = vrot.lane.b32.xlu0 %v2245, 100
      %v2323 = vpop.permute.xlu0 %2322
      %2324 = vrot.lane.b32.xlu0 %v2246, 100
      %v2325 = vpop.permute.xlu0 %2324
      %2326 = vrot.lane.b32.xlu0 %v2247, 100
      %v2327 = vpop.permute.xlu0 %2326
      %2328 = vrot.lane.b32.xlu0 %v2248, 100
      %v2329 = vpop.permute.xlu0 %2328
      %2330 = vrot.lane.b32.xlu0 %v2249, 100
      %v2331 = vpop.permute.xlu0 %2330
      %2332 = vrot.lane.b32.xlu0 %v2250, 100
      %v2333 = vpop.permute.xlu0 %2332
      %2334 = vrot.lane.b32.xlu0 %v2251, 100
      %v2335 = vpop.permute.xlu0 %2334
      %2336 = vrot.lane.b32.xlu0 %v2252, 100
      %v2337 = vpop.permute.xlu0 %2336
      %2338 = vrot.lane.b32.xlu0 %v2253, 100
      %v2339 = vpop.permute.xlu0 %2338
      %2340 = vrot.lane.b32.xlu0 %v2254, 100
      %v2341 = vpop.permute.xlu0 %2340
      %2342 = vrot.lane.b32.xlu0 %v2255, 100
      %v2343 = vpop.permute.xlu0 %2342
      %2344 = vrot.lane.b32.xlu0 %v2256, 100
      %v2345 = vpop.permute.xlu0 %2344
      %2346 = vrot.lane.b32.xlu0 %v2257, 100
      %v2347 = vpop.permute.xlu0 %2346
      %2348 = vrot.lane.b32.xlu0 %v2258, 100
      %v2349 = vpop.permute.xlu0 %2348
      %2350 = vrot.lane.b32.xlu0 %v2259, 100
      %v2351 = vpop.permute.xlu0 %2350
      %2352 = vrot.lane.b32.xlu0 %v2260, 100
      %v2353 = vpop.permute.xlu0 %2352
      %2354 = vrot.lane.b32.xlu0 %v2261, 100
      %v2355 = vpop.permute.xlu0 %2354
      %2356 = vrot.lane.b32.xlu0 %v2262, 100
      %v2357 = vpop.permute.xlu0 %2356
      %2358 = vrot.lane.b32.xlu0 %v2263, 100
      %v2359 = vpop.permute.xlu0 %2358
      %v2392 = vmax.f32 %v2072, %v2297
      %v2393 = vmax.f32 %v2073, %v2299
      %v2394 = vmax.f32 %v2074, %v2301
      %v2395 = vmax.f32 %v2075, %v2303
      %v2396 = vmax.f32 %v2076, %v2305
      %v2397 = vmax.f32 %v2077, %v2307
      %v2398 = vmax.f32 %v2078, %v2309
      %v2399 = vmax.f32 %v2079, %v2311
      %v2400 = vmax.f32 %v2080, %v2313
      %v2401 = vmax.f32 %v2081, %v2315
      %v2402 = vmax.f32 %v2082, %v2317
      %v2403 = vmax.f32 %v2083, %v2319
      %v2404 = vmax.f32 %v2084, %v2321
      %v2405 = vmax.f32 %v2085, %v2323
      %v2406 = vmax.f32 %v2086, %v2325
      %v2407 = vmax.f32 %v2087, %v2327
      %v2408 = vmax.f32 %v2088, %v2329
      %v2409 = vmax.f32 %v2089, %v2331
      %v2410 = vmax.f32 %v2090, %v2333
      %v2411 = vmax.f32 %v2091, %v2335
      %v2412 = vmax.f32 %v2092, %v2337
      %v2413 = vmax.f32 %v2093, %v2339
      %v2414 = vmax.f32 %v2094, %v2341
      %v2415 = vmax.f32 %v2095, %v2343
      %v2416 = vmax.f32 %v2096, %v2345
      %v2417 = vmax.f32 %v2097, %v2347
      %v2418 = vmax.f32 %v2098, %v2349
      %v2419 = vmax.f32 %v2099, %v2351
      %v2420 = vmax.f32 %v2100, %v2353
      %v2421 = vmax.f32 %v2101, %v2355
      %v2422 = vmax.f32 %v2102, %v2357
      %v2423 = vmax.f32 %v2103, %v2359
      %2424 = vset.pattern.permute.xlu0 6
      %2425 = vperm.xlu0 %2424, %v600
      %v2426 = vpop.permute.xlu0 %2425
      %2428 = vset.pattern.permute.xlu0 6
      %2429 = vperm.xlu0 %2428, %v601
      %v2430 = vpop.permute.xlu0 %2429
      %2432 = vset.pattern.permute.xlu0 6
      %2433 = vperm.xlu0 %2432, %v602
      %v2434 = vpop.permute.xlu0 %2433
      %2436 = vset.pattern.permute.xlu0 6
      %2437 = vperm.xlu0 %2436, %v603
      %v2438 = vpop.permute.xlu0 %2437
      %2440 = vset.pattern.permute.xlu0 6
      %2441 = vperm.xlu0 %2440, %v604
      %v2442 = vpop.permute.xlu0 %2441
      %2444 = vset.pattern.permute.xlu0 6
      %2445 = vperm.xlu0 %2444, %v605
      %v2446 = vpop.permute.xlu0 %2445
      %2448 = vset.pattern.permute.xlu0 6
      %2449 = vperm.xlu0 %2448, %v606
      %v2450 = vpop.permute.xlu0 %2449
      %2452 = vset.pattern.permute.xlu0 6
      %2453 = vperm.xlu0 %2452, %v607
      %v2454 = vpop.permute.xlu0 %2453
      %2456 = vset.pattern.permute.xlu0 6
      %2457 = vperm.xlu0 %2456, %v608
      %v2458 = vpop.permute.xlu0 %2457
      %2460 = vset.pattern.permute.xlu0 6
      %2461 = vperm.xlu0 %2460, %v609
      %v2462 = vpop.permute.xlu0 %2461
      %2464 = vset.pattern.permute.xlu0 6
      %2465 = vperm.xlu0 %2464, %v610
      %v2466 = vpop.permute.xlu0 %2465
      %2468 = vset.pattern.permute.xlu0 6
      %2469 = vperm.xlu0 %2468, %v611
      %v2470 = vpop.permute.xlu0 %2469
      %2472 = vset.pattern.permute.xlu0 6
      %2473 = vperm.xlu0 %2472, %v612
      %v2474 = vpop.permute.xlu0 %2473
      %2476 = vset.pattern.permute.xlu0 6
      %2477 = vperm.xlu0 %2476, %v613
      %v2478 = vpop.permute.xlu0 %2477
      %2480 = vset.pattern.permute.xlu0 6
      %2481 = vperm.xlu0 %2480, %v614
      %v2482 = vpop.permute.xlu0 %2481
      %2484 = vset.pattern.permute.xlu0 6
      %2485 = vperm.xlu0 %2484, %v615
      %v2486 = vpop.permute.xlu0 %2485
      %2488 = vset.pattern.permute.xlu0 6
      %2489 = vperm.xlu0 %2488, %v616
      %v2490 = vpop.permute.xlu0 %2489
      %2492 = vset.pattern.permute.xlu0 6
      %2493 = vperm.xlu0 %2492, %v617
      %v2494 = vpop.permute.xlu0 %2493
      %2496 = vset.pattern.permute.xlu0 6
      %2497 = vperm.xlu0 %2496, %v618
      %v2498 = vpop.permute.xlu0 %2497
      %2500 = vset.pattern.permute.xlu0 6
      %2501 = vperm.xlu0 %2500, %v619
      %v2502 = vpop.permute.xlu0 %2501
      %2504 = vset.pattern.permute.xlu0 6
      %2505 = vperm.xlu0 %2504, %v620
      %v2506 = vpop.permute.xlu0 %2505
      %2508 = vset.pattern.permute.xlu0 6
      %2509 = vperm.xlu0 %2508, %v621
      %v2510 = vpop.permute.xlu0 %2509
      %2512 = vset.pattern.permute.xlu0 6
      %2513 = vperm.xlu0 %2512, %v622
      %v2514 = vpop.permute.xlu0 %2513
      %2516 = vset.pattern.permute.xlu0 6
      %2517 = vperm.xlu0 %2516, %v623
      %v2518 = vpop.permute.xlu0 %2517
      %2520 = vset.pattern.permute.xlu0 6
      %2521 = vperm.xlu0 %2520, %v624
      %v2522 = vpop.permute.xlu0 %2521
      %2524 = vset.pattern.permute.xlu0 6
      %2525 = vperm.xlu0 %2524, %v625
      %v2526 = vpop.permute.xlu0 %2525
      %2528 = vset.pattern.permute.xlu0 6
      %2529 = vperm.xlu0 %2528, %v626
      %v2530 = vpop.permute.xlu0 %2529
      %2532 = vset.pattern.permute.xlu0 6
      %2533 = vperm.xlu0 %2532, %v627
      %v2534 = vpop.permute.xlu0 %2533
      %2536 = vset.pattern.permute.xlu0 6
      %2537 = vperm.xlu0 %2536, %v628
      %v2538 = vpop.permute.xlu0 %2537
      %2540 = vset.pattern.permute.xlu0 6
      %2541 = vperm.xlu0 %2540, %v629
      %v2542 = vpop.permute.xlu0 %2541
      %2544 = vset.pattern.permute.xlu0 6
      %2545 = vperm.xlu0 %2544, %v630
      %v2546 = vpop.permute.xlu0 %2545
      %2548 = vset.pattern.permute.xlu0 6
      %2549 = vperm.xlu0 %2548, %v631
      %v2550 = vpop.permute.xlu0 %2549
      %v2552 = vadd.f32 %v568, %v2426
      %v2553 = vadd.f32 %v569, %v2430
      %v2554 = vadd.f32 %v570, %v2434
      %v2555 = vadd.f32 %v571, %v2438
      %v2556 = vadd.f32 %v572, %v2442
      %v2557 = vadd.f32 %v573, %v2446
      %v2558 = vadd.f32 %v574, %v2450
      %v2559 = vadd.f32 %v575, %v2454
      %v2560 = vadd.f32 %v576, %v2458
      %v2561 = vadd.f32 %v577, %v2462
      %v2562 = vadd.f32 %v578, %v2466
      %v2563 = vadd.f32 %v579, %v2470
      %v2564 = vadd.f32 %v580, %v2474
      %v2565 = vadd.f32 %v581, %v2478
      %v2566 = vadd.f32 %v582, %v2482
      %v2567 = vadd.f32 %v583, %v2486
      %v2568 = vadd.f32 %v584, %v2490
      %v2569 = vadd.f32 %v585, %v2494
      %v2570 = vadd.f32 %v586, %v2498
      %v2571 = vadd.f32 %v587, %v2502
      %v2572 = vadd.f32 %v588, %v2506
      %v2573 = vadd.f32 %v589, %v2510
      %v2574 = vadd.f32 %v590, %v2514
      %v2575 = vadd.f32 %v591, %v2518
      %v2576 = vadd.f32 %v592, %v2522
      %v2577 = vadd.f32 %v593, %v2526
      %v2578 = vadd.f32 %v594, %v2530
      %v2579 = vadd.f32 %v595, %v2534
      %v2580 = vadd.f32 %v596, %v2538
      %v2581 = vadd.f32 %v597, %v2542
      %v2582 = vadd.f32 %v598, %v2546
      %v2583 = vadd.f32 %v599, %v2550
      %2616 = vrot.lane.b32.xlu0 %v2552, 88
      %v2617 = vpop.permute.xlu0 %2616
      %2618 = vrot.lane.b32.xlu0 %v2553, 88
      %v2619 = vpop.permute.xlu0 %2618
      %2620 = vrot.lane.b32.xlu0 %v2554, 88
      %v2621 = vpop.permute.xlu0 %2620
      %2622 = vrot.lane.b32.xlu0 %v2555, 88
      %v2623 = vpop.permute.xlu0 %2622
      %2624 = vrot.lane.b32.xlu0 %v2556, 88
      %v2625 = vpop.permute.xlu0 %2624
      %2626 = vrot.lane.b32.xlu0 %v2557, 88
      %v2627 = vpop.permute.xlu0 %2626
      %2628 = vrot.lane.b32.xlu0 %v2558, 88
      %v2629 = vpop.permute.xlu0 %2628
      %2630 = vrot.lane.b32.xlu0 %v2559, 88
      %v2631 = vpop.permute.xlu0 %2630
      %2632 = vrot.lane.b32.xlu0 %v2560, 88
      %v2633 = vpop.permute.xlu0 %2632
      %2634 = vrot.lane.b32.xlu0 %v2561, 88
      %v2635 = vpop.permute.xlu0 %2634
      %2636 = vrot.lane.b32.xlu0 %v2562, 88
      %v2637 = vpop.permute.xlu0 %2636
      %2638 = vrot.lane.b32.xlu0 %v2563, 88
      %v2639 = vpop.permute.xlu0 %2638
      %2640 = vrot.lane.b32.xlu0 %v2564, 88
      %v2641 = vpop.permute.xlu0 %2640
      %2642 = vrot.lane.b32.xlu0 %v2565, 88
      %v2643 = vpop.permute.xlu0 %2642
      %2644 = vrot.lane.b32.xlu0 %v2566, 88
      %v2645 = vpop.permute.xlu0 %2644
      %2646 = vrot.lane.b32.xlu0 %v2567, 88
      %v2647 = vpop.permute.xlu0 %2646
      %2648 = vrot.lane.b32.xlu0 %v2568, 88
      %v2649 = vpop.permute.xlu0 %2648
      %2650 = vrot.lane.b32.xlu0 %v2569, 88
      %v2651 = vpop.permute.xlu0 %2650
      %2652 = vrot.lane.b32.xlu0 %v2570, 88
      %v2653 = vpop.permute.xlu0 %2652
      %2654 = vrot.lane.b32.xlu0 %v2571, 88
      %v2655 = vpop.permute.xlu0 %2654
      %2656 = vrot.lane.b32.xlu0 %v2572, 88
      %v2657 = vpop.permute.xlu0 %2656
      %2658 = vrot.lane.b32.xlu0 %v2573, 88
      %v2659 = vpop.permute.xlu0 %2658
      %2660 = vrot.lane.b32.xlu0 %v2574, 88
      %v2661 = vpop.permute.xlu0 %2660
      %2662 = vrot.lane.b32.xlu0 %v2575, 88
      %v2663 = vpop.permute.xlu0 %2662
      %2664 = vrot.lane.b32.xlu0 %v2576, 88
      %v2665 = vpop.permute.xlu0 %2664
      %2666 = vrot.lane.b32.xlu0 %v2577, 88
      %v2667 = vpop.permute.xlu0 %2666
      %2668 = vrot.lane.b32.xlu0 %v2578, 88
      %v2669 = vpop.permute.xlu0 %2668
      %2670 = vrot.lane.b32.xlu0 %v2579, 88
      %v2671 = vpop.permute.xlu0 %2670
      %2672 = vrot.lane.b32.xlu0 %v2580, 88
      %v2673 = vpop.permute.xlu0 %2672
      %2674 = vrot.lane.b32.xlu0 %v2581, 88
      %v2675 = vpop.permute.xlu0 %2674
      %2676 = vrot.lane.b32.xlu0 %v2582, 88
      %v2677 = vpop.permute.xlu0 %2676
      %2678 = vrot.lane.b32.xlu0 %v2583, 88
      %v2679 = vpop.permute.xlu0 %2678
      %v2712 = vmax.f32 %v2392, %v2617
      %v2713 = vmax.f32 %v2393, %v2619
      %v2714 = vmax.f32 %v2394, %v2621
      %v2715 = vmax.f32 %v2395, %v2623
      %v2716 = vmax.f32 %v2396, %v2625
      %v2717 = vmax.f32 %v2397, %v2627
      %v2718 = vmax.f32 %v2398, %v2629
      %v2719 = vmax.f32 %v2399, %v2631
      %v2720 = vmax.f32 %v2400, %v2633
      %v2721 = vmax.f32 %v2401, %v2635
      %v2722 = vmax.f32 %v2402, %v2637
      %v2723 = vmax.f32 %v2403, %v2639
      %v2724 = vmax.f32 %v2404, %v2641
      %v2725 = vmax.f32 %v2405, %v2643
      %v2726 = vmax.f32 %v2406, %v2645
      %v2727 = vmax.f32 %v2407, %v2647
      %v2728 = vmax.f32 %v2408, %v2649
      %v2729 = vmax.f32 %v2409, %v2651
      %v2730 = vmax.f32 %v2410, %v2653
      %v2731 = vmax.f32 %v2411, %v2655
      %v2732 = vmax.f32 %v2412, %v2657
      %v2733 = vmax.f32 %v2413, %v2659
      %v2734 = vmax.f32 %v2414, %v2661
      %v2735 = vmax.f32 %v2415, %v2663
      %v2736 = vmax.f32 %v2416, %v2665
      %v2737 = vmax.f32 %v2417, %v2667
      %v2738 = vmax.f32 %v2418, %v2669
      %v2739 = vmax.f32 %v2419, %v2671
      %v2740 = vmax.f32 %v2420, %v2673
      %v2741 = vmax.f32 %v2421, %v2675
      %v2742 = vmax.f32 %v2422, %v2677
      %v2743 = vmax.f32 %v2423, %v2679
      %2744 = vset.pattern.permute.xlu0 7
      %2745 = vperm.xlu0 %2744, %v600
      %v2746 = vpop.permute.xlu0 %2745
      %2748 = vset.pattern.permute.xlu0 7
      %2749 = vperm.xlu0 %2748, %v601
      %v2750 = vpop.permute.xlu0 %2749
      %2752 = vset.pattern.permute.xlu0 7
      %2753 = vperm.xlu0 %2752, %v602
      %v2754 = vpop.permute.xlu0 %2753
      %2756 = vset.pattern.permute.xlu0 7
      %2757 = vperm.xlu0 %2756, %v603
      %v2758 = vpop.permute.xlu0 %2757
      %2760 = vset.pattern.permute.xlu0 7
      %2761 = vperm.xlu0 %2760, %v604
      %v2762 = vpop.permute.xlu0 %2761
      %2764 = vset.pattern.permute.xlu0 7
      %2765 = vperm.xlu0 %2764, %v605
      %v2766 = vpop.permute.xlu0 %2765
      %2768 = vset.pattern.permute.xlu0 7
      %2769 = vperm.xlu0 %2768, %v606
      %v2770 = vpop.permute.xlu0 %2769
      %2772 = vset.pattern.permute.xlu0 7
      %2773 = vperm.xlu0 %2772, %v607
      %v2774 = vpop.permute.xlu0 %2773
      %2776 = vset.pattern.permute.xlu0 7
      %2777 = vperm.xlu0 %2776, %v608
      %v2778 = vpop.permute.xlu0 %2777
      %2780 = vset.pattern.permute.xlu0 7
      %2781 = vperm.xlu0 %2780, %v609
      %v2782 = vpop.permute.xlu0 %2781
      %2784 = vset.pattern.permute.xlu0 7
      %2785 = vperm.xlu0 %2784, %v610
      %v2786 = vpop.permute.xlu0 %2785
      %2788 = vset.pattern.permute.xlu0 7
      %2789 = vperm.xlu0 %2788, %v611
      %v2790 = vpop.permute.xlu0 %2789
      %2792 = vset.pattern.permute.xlu0 7
      %2793 = vperm.xlu0 %2792, %v612
      %v2794 = vpop.permute.xlu0 %2793
      %2796 = vset.pattern.permute.xlu0 7
      %2797 = vperm.xlu0 %2796, %v613
      %v2798 = vpop.permute.xlu0 %2797
      %2800 = vset.pattern.permute.xlu0 7
      %2801 = vperm.xlu0 %2800, %v614
      %v2802 = vpop.permute.xlu0 %2801
      %2804 = vset.pattern.permute.xlu0 7
      %2805 = vperm.xlu0 %2804, %v615
      %v2806 = vpop.permute.xlu0 %2805
      %2808 = vset.pattern.permute.xlu0 7
      %2809 = vperm.xlu0 %2808, %v616
      %v2810 = vpop.permute.xlu0 %2809
      %2812 = vset.pattern.permute.xlu0 7
      %2813 = vperm.xlu0 %2812, %v617
      %v2814 = vpop.permute.xlu0 %2813
      %2816 = vset.pattern.permute.xlu0 7
      %2817 = vperm.xlu0 %2816, %v618
      %v2818 = vpop.permute.xlu0 %2817
      %2820 = vset.pattern.permute.xlu0 7
      %2821 = vperm.xlu0 %2820, %v619
      %v2822 = vpop.permute.xlu0 %2821
      %2824 = vset.pattern.permute.xlu0 7
      %2825 = vperm.xlu0 %2824, %v620
      %v2826 = vpop.permute.xlu0 %2825
      %2828 = vset.pattern.permute.xlu0 7
      %2829 = vperm.xlu0 %2828, %v621
      %v2830 = vpop.permute.xlu0 %2829
      %2832 = vset.pattern.permute.xlu0 7
      %2833 = vperm.xlu0 %2832, %v622
      %v2834 = vpop.permute.xlu0 %2833
      %2836 = vset.pattern.permute.xlu0 7
      %2837 = vperm.xlu0 %2836, %v623
      %v2838 = vpop.permute.xlu0 %2837
      %2840 = vset.pattern.permute.xlu0 7
      %2841 = vperm.xlu0 %2840, %v624
      %v2842 = vpop.permute.xlu0 %2841
      %2844 = vset.pattern.permute.xlu0 7
      %2845 = vperm.xlu0 %2844, %v625
      %v2846 = vpop.permute.xlu0 %2845
      %2848 = vset.pattern.permute.xlu0 7
      %2849 = vperm.xlu0 %2848, %v626
      %v2850 = vpop.permute.xlu0 %2849
      %2852 = vset.pattern.permute.xlu0 7
      %2853 = vperm.xlu0 %2852, %v627
      %v2854 = vpop.permute.xlu0 %2853
      %2856 = vset.pattern.permute.xlu0 7
      %2857 = vperm.xlu0 %2856, %v628
      %v2858 = vpop.permute.xlu0 %2857
      %2860 = vset.pattern.permute.xlu0 7
      %2861 = vperm.xlu0 %2860, %v629
      %v2862 = vpop.permute.xlu0 %2861
      %2864 = vset.pattern.permute.xlu0 7
      %2865 = vperm.xlu0 %2864, %v630
      %v2866 = vpop.permute.xlu0 %2865
      %2868 = vset.pattern.permute.xlu0 7
      %2869 = vperm.xlu0 %2868, %v631
      %v2870 = vpop.permute.xlu0 %2869
      %v2872 = vadd.f32 %v568, %v2746
      %v2873 = vadd.f32 %v569, %v2750
      %v2874 = vadd.f32 %v570, %v2754
      %v2875 = vadd.f32 %v571, %v2758
      %v2876 = vadd.f32 %v572, %v2762
      %v2877 = vadd.f32 %v573, %v2766
      %v2878 = vadd.f32 %v574, %v2770
      %v2879 = vadd.f32 %v575, %v2774
      %v2880 = vadd.f32 %v576, %v2778
      %v2881 = vadd.f32 %v577, %v2782
      %v2882 = vadd.f32 %v578, %v2786
      %v2883 = vadd.f32 %v579, %v2790
      %v2884 = vadd.f32 %v580, %v2794
      %v2885 = vadd.f32 %v581, %v2798
      %v2886 = vadd.f32 %v582, %v2802
      %v2887 = vadd.f32 %v583, %v2806
      %v2888 = vadd.f32 %v584, %v2810
      %v2889 = vadd.f32 %v585, %v2814
      %v2890 = vadd.f32 %v586, %v2818
      %v2891 = vadd.f32 %v587, %v2822
      %v2892 = vadd.f32 %v588, %v2826
      %v2893 = vadd.f32 %v589, %v2830
      %v2894 = vadd.f32 %v590, %v2834
      %v2895 = vadd.f32 %v591, %v2838
      %v2896 = vadd.f32 %v592, %v2842
      %v2897 = vadd.f32 %v593, %v2846
      %v2898 = vadd.f32 %v594, %v2850
      %v2899 = vadd.f32 %v595, %v2854
      %v2900 = vadd.f32 %v596, %v2858
      %v2901 = vadd.f32 %v597, %v2862
      %v2902 = vadd.f32 %v598, %v2866
      %v2903 = vadd.f32 %v599, %v2870
      %2936 = vrot.lane.b32.xlu0 %v2872, 84
      %v2937 = vpop.permute.xlu0 %2936
      %2938 = vrot.lane.b32.xlu0 %v2873, 84
      %v2939 = vpop.permute.xlu0 %2938
      %2940 = vrot.lane.b32.xlu0 %v2874, 84
      %v2941 = vpop.permute.xlu0 %2940
      %2942 = vrot.lane.b32.xlu0 %v2875, 84
      %v2943 = vpop.permute.xlu0 %2942
      %2944 = vrot.lane.b32.xlu0 %v2876, 84
      %v2945 = vpop.permute.xlu0 %2944
      %2946 = vrot.lane.b32.xlu0 %v2877, 84
      %v2947 = vpop.permute.xlu0 %2946
      %2948 = vrot.lane.b32.xlu0 %v2878, 84
      %v2949 = vpop.permute.xlu0 %2948
      %2950 = vrot.lane.b32.xlu0 %v2879, 84
      %v2951 = vpop.permute.xlu0 %2950
      %2952 = vrot.lane.b32.xlu0 %v2880, 84
      %v2953 = vpop.permute.xlu0 %2952
      %2954 = vrot.lane.b32.xlu0 %v2881, 84
      %v2955 = vpop.permute.xlu0 %2954
      %2956 = vrot.lane.b32.xlu0 %v2882, 84
      %v2957 = vpop.permute.xlu0 %2956
      %2958 = vrot.lane.b32.xlu0 %v2883, 84
      %v2959 = vpop.permute.xlu0 %2958
      %2960 = vrot.lane.b32.xlu0 %v2884, 84
      %v2961 = vpop.permute.xlu0 %2960
      %2962 = vrot.lane.b32.xlu0 %v2885, 84
      %v2963 = vpop.permute.xlu0 %2962
      %2964 = vrot.lane.b32.xlu0 %v2886, 84
      %v2965 = vpop.permute.xlu0 %2964
      %2966 = vrot.lane.b32.xlu0 %v2887, 84
      %v2967 = vpop.permute.xlu0 %2966
      %2968 = vrot.lane.b32.xlu0 %v2888, 84
      %v2969 = vpop.permute.xlu0 %2968
      %2970 = vrot.lane.b32.xlu0 %v2889, 84
      %v2971 = vpop.permute.xlu0 %2970
      %2972 = vrot.lane.b32.xlu0 %v2890, 84
      %v2973 = vpop.permute.xlu0 %2972
      %2974 = vrot.lane.b32.xlu0 %v2891, 84
      %v2975 = vpop.permute.xlu0 %2974
      %2976 = vrot.lane.b32.xlu0 %v2892, 84
      %v2977 = vpop.permute.xlu0 %2976
      %2978 = vrot.lane.b32.xlu0 %v2893, 84
      %v2979 = vpop.permute.xlu0 %2978
      %2980 = vrot.lane.b32.xlu0 %v2894, 84
      %v2981 = vpop.permute.xlu0 %2980
      %2982 = vrot.lane.b32.xlu0 %v2895, 84
      %v2983 = vpop.permute.xlu0 %2982
      %2984 = vrot.lane.b32.xlu0 %v2896, 84
      %v2985 = vpop.permute.xlu0 %2984
      %2986 = vrot.lane.b32.xlu0 %v2897, 84
      %v2987 = vpop.permute.xlu0 %2986
      %2988 = vrot.lane.b32.xlu0 %v2898, 84
      %v2989 = vpop.permute.xlu0 %2988
      %2990 = vrot.lane.b32.xlu0 %v2899, 84
      %v2991 = vpop.permute.xlu0 %2990
      %2992 = vrot.lane.b32.xlu0 %v2900, 84
      %v2993 = vpop.permute.xlu0 %2992
      %2994 = vrot.lane.b32.xlu0 %v2901, 84
      %v2995 = vpop.permute.xlu0 %2994
      %2996 = vrot.lane.b32.xlu0 %v2902, 84
      %v2997 = vpop.permute.xlu0 %2996
      %2998 = vrot.lane.b32.xlu0 %v2903, 84
      %v2999 = vpop.permute.xlu0 %2998
      %v3032 = vmax.f32 %v2712, %v2937
      %v3033 = vmax.f32 %v2713, %v2939
      %v3034 = vmax.f32 %v2714, %v2941
      %v3035 = vmax.f32 %v2715, %v2943
      %v3036 = vmax.f32 %v2716, %v2945
      %v3037 = vmax.f32 %v2717, %v2947
      %v3038 = vmax.f32 %v2718, %v2949
      %v3039 = vmax.f32 %v2719, %v2951
      %v3040 = vmax.f32 %v2720, %v2953
      %v3041 = vmax.f32 %v2721, %v2955
      %v3042 = vmax.f32 %v2722, %v2957
      %v3043 = vmax.f32 %v2723, %v2959
      %v3044 = vmax.f32 %v2724, %v2961
      %v3045 = vmax.f32 %v2725, %v2963
      %v3046 = vmax.f32 %v2726, %v2965
      %v3047 = vmax.f32 %v2727, %v2967
      %v3048 = vmax.f32 %v2728, %v2969
      %v3049 = vmax.f32 %v2729, %v2971
      %v3050 = vmax.f32 %v2730, %v2973
      %v3051 = vmax.f32 %v2731, %v2975
      %v3052 = vmax.f32 %v2732, %v2977
      %v3053 = vmax.f32 %v2733, %v2979
      %v3054 = vmax.f32 %v2734, %v2981
      %v3055 = vmax.f32 %v2735, %v2983
      %v3056 = vmax.f32 %v2736, %v2985
      %v3057 = vmax.f32 %v2737, %v2987
      %v3058 = vmax.f32 %v2738, %v2989
      %v3059 = vmax.f32 %v2739, %v2991
      %v3060 = vmax.f32 %v2740, %v2993
      %v3061 = vmax.f32 %v2741, %v2995
      %v3062 = vmax.f32 %v2742, %v2997
      %v3063 = vmax.f32 %v2743, %v2999
      %3064 = vset.pattern.permute.xlu0 8
      %3065 = vperm.xlu0 %3064, %v600
      %v3066 = vpop.permute.xlu0 %3065
      %3068 = vset.pattern.permute.xlu0 8
      %3069 = vperm.xlu0 %3068, %v601
      %v3070 = vpop.permute.xlu0 %3069
      %3072 = vset.pattern.permute.xlu0 8
      %3073 = vperm.xlu0 %3072, %v602
      %v3074 = vpop.permute.xlu0 %3073
      %3076 = vset.pattern.permute.xlu0 8
      %3077 = vperm.xlu0 %3076, %v603
      %v3078 = vpop.permute.xlu0 %3077
      %3080 = vset.pattern.permute.xlu0 8
      %3081 = vperm.xlu0 %3080, %v604
      %v3082 = vpop.permute.xlu0 %3081
      %3084 = vset.pattern.permute.xlu0 8
      %3085 = vperm.xlu0 %3084, %v605
      %v3086 = vpop.permute.xlu0 %3085
      %3088 = vset.pattern.permute.xlu0 8
      %3089 = vperm.xlu0 %3088, %v606
      %v3090 = vpop.permute.xlu0 %3089
      %3092 = vset.pattern.permute.xlu0 8
      %3093 = vperm.xlu0 %3092, %v607
      %v3094 = vpop.permute.xlu0 %3093
      %3096 = vset.pattern.permute.xlu0 8
      %3097 = vperm.xlu0 %3096, %v608
      %v3098 = vpop.permute.xlu0 %3097
      %3100 = vset.pattern.permute.xlu0 8
      %3101 = vperm.xlu0 %3100, %v609
      %v3102 = vpop.permute.xlu0 %3101
      %3104 = vset.pattern.permute.xlu0 8
      %3105 = vperm.xlu0 %3104, %v610
      %v3106 = vpop.permute.xlu0 %3105
      %3108 = vset.pattern.permute.xlu0 8
      %3109 = vperm.xlu0 %3108, %v611
      %v3110 = vpop.permute.xlu0 %3109
      %3112 = vset.pattern.permute.xlu0 8
      %3113 = vperm.xlu0 %3112, %v612
      %v3114 = vpop.permute.xlu0 %3113
      %3116 = vset.pattern.permute.xlu0 8
      %3117 = vperm.xlu0 %3116, %v613
      %v3118 = vpop.permute.xlu0 %3117
      %3120 = vset.pattern.permute.xlu0 8
      %3121 = vperm.xlu0 %3120, %v614
      %v3122 = vpop.permute.xlu0 %3121
      %3124 = vset.pattern.permute.xlu0 8
      %3125 = vperm.xlu0 %3124, %v615
      %v3126 = vpop.permute.xlu0 %3125
      %3128 = vset.pattern.permute.xlu0 8
      %3129 = vperm.xlu0 %3128, %v616
      %v3130 = vpop.permute.xlu0 %3129
      %3132 = vset.pattern.permute.xlu0 8
      %3133 = vperm.xlu0 %3132, %v617
      %v3134 = vpop.permute.xlu0 %3133
      %3136 = vset.pattern.permute.xlu0 8
      %3137 = vperm.xlu0 %3136, %v618
      %v3138 = vpop.permute.xlu0 %3137
      %3140 = vset.pattern.permute.xlu0 8
      %3141 = vperm.xlu0 %3140, %v619
      %v3142 = vpop.permute.xlu0 %3141
      %3144 = vset.pattern.permute.xlu0 8
      %3145 = vperm.xlu0 %3144, %v620
      %v3146 = vpop.permute.xlu0 %3145
      %3148 = vset.pattern.permute.xlu0 8
      %3149 = vperm.xlu0 %3148, %v621
      %v3150 = vpop.permute.xlu0 %3149
      %3152 = vset.pattern.permute.xlu0 8
      %3153 = vperm.xlu0 %3152, %v622
      %v3154 = vpop.permute.xlu0 %3153
      %3156 = vset.pattern.permute.xlu0 8
      %3157 = vperm.xlu0 %3156, %v623
      %v3158 = vpop.permute.xlu0 %3157
      %3160 = vset.pattern.permute.xlu0 8
      %3161 = vperm.xlu0 %3160, %v624
      %v3162 = vpop.permute.xlu0 %3161
      %3164 = vset.pattern.permute.xlu0 8
      %3165 = vperm.xlu0 %3164, %v625
      %v3166 = vpop.permute.xlu0 %3165
      %3168 = vset.pattern.permute.xlu0 8
      %3169 = vperm.xlu0 %3168, %v626
      %v3170 = vpop.permute.xlu0 %3169
      %3172 = vset.pattern.permute.xlu0 8
      %3173 = vperm.xlu0 %3172, %v627
      %v3174 = vpop.permute.xlu0 %3173
      %3176 = vset.pattern.permute.xlu0 8
      %3177 = vperm.xlu0 %3176, %v628
      %v3178 = vpop.permute.xlu0 %3177
      %3180 = vset.pattern.permute.xlu0 8
      %3181 = vperm.xlu0 %3180, %v629
      %v3182 = vpop.permute.xlu0 %3181
      %3184 = vset.pattern.permute.xlu0 8
      %3185 = vperm.xlu0 %3184, %v630
      %v3186 = vpop.permute.xlu0 %3185
      %3188 = vset.pattern.permute.xlu0 8
      %3189 = vperm.xlu0 %3188, %v631
      %v3190 = vpop.permute.xlu0 %3189
      %v3192 = vadd.f32 %v568, %v3066
      %v3193 = vadd.f32 %v569, %v3070
      %v3194 = vadd.f32 %v570, %v3074
      %v3195 = vadd.f32 %v571, %v3078
      %v3196 = vadd.f32 %v572, %v3082
      %v3197 = vadd.f32 %v573, %v3086
      %v3198 = vadd.f32 %v574, %v3090
      %v3199 = vadd.f32 %v575, %v3094
      %v3200 = vadd.f32 %v576, %v3098
      %v3201 = vadd.f32 %v577, %v3102
      %v3202 = vadd.f32 %v578, %v3106
      %v3203 = vadd.f32 %v579, %v3110
      %v3204 = vadd.f32 %v580, %v3114
      %v3205 = vadd.f32 %v581, %v3118
      %v3206 = vadd.f32 %v582, %v3122
      %v3207 = vadd.f32 %v583, %v3126
      %v3208 = vadd.f32 %v584, %v3130
      %v3209 = vadd.f32 %v585, %v3134
      %v3210 = vadd.f32 %v586, %v3138
      %v3211 = vadd.f32 %v587, %v3142
      %v3212 = vadd.f32 %v588, %v3146
      %v3213 = vadd.f32 %v589, %v3150
      %v3214 = vadd.f32 %v590, %v3154
      %v3215 = vadd.f32 %v591, %v3158
      %v3216 = vadd.f32 %v592, %v3162
      %v3217 = vadd.f32 %v593, %v3166
      %v3218 = vadd.f32 %v594, %v3170
      %v3219 = vadd.f32 %v595, %v3174
      %v3220 = vadd.f32 %v596, %v3178
      %v3221 = vadd.f32 %v597, %v3182
      %v3222 = vadd.f32 %v598, %v3186
      %v3223 = vadd.f32 %v599, %v3190
      %3256 = vrot.lane.b32.xlu0 %v3192, 80
      %v3257 = vpop.permute.xlu0 %3256
      %3258 = vrot.lane.b32.xlu0 %v3193, 80
      %v3259 = vpop.permute.xlu0 %3258
      %3260 = vrot.lane.b32.xlu0 %v3194, 80
      %v3261 = vpop.permute.xlu0 %3260
      %3262 = vrot.lane.b32.xlu0 %v3195, 80
      %v3263 = vpop.permute.xlu0 %3262
      %3264 = vrot.lane.b32.xlu0 %v3196, 80
      %v3265 = vpop.permute.xlu0 %3264
      %3266 = vrot.lane.b32.xlu0 %v3197, 80
      %v3267 = vpop.permute.xlu0 %3266
      %3268 = vrot.lane.b32.xlu0 %v3198, 80
      %v3269 = vpop.permute.xlu0 %3268
      %3270 = vrot.lane.b32.xlu0 %v3199, 80
      %v3271 = vpop.permute.xlu0 %3270
      %3272 = vrot.lane.b32.xlu0 %v3200, 80
      %v3273 = vpop.permute.xlu0 %3272
      %3274 = vrot.lane.b32.xlu0 %v3201, 80
      %v3275 = vpop.permute.xlu0 %3274
      %3276 = vrot.lane.b32.xlu0 %v3202, 80
      %v3277 = vpop.permute.xlu0 %3276
      %3278 = vrot.lane.b32.xlu0 %v3203, 80
      %v3279 = vpop.permute.xlu0 %3278
      %3280 = vrot.lane.b32.xlu0 %v3204, 80
      %v3281 = vpop.permute.xlu0 %3280
      %3282 = vrot.lane.b32.xlu0 %v3205, 80
      %v3283 = vpop.permute.xlu0 %3282
      %3284 = vrot.lane.b32.xlu0 %v3206, 80
      %v3285 = vpop.permute.xlu0 %3284
      %3286 = vrot.lane.b32.xlu0 %v3207, 80
      %v3287 = vpop.permute.xlu0 %3286
      %3288 = vrot.lane.b32.xlu0 %v3208, 80
      %v3289 = vpop.permute.xlu0 %3288
      %3290 = vrot.lane.b32.xlu0 %v3209, 80
      %v3291 = vpop.permute.xlu0 %3290
      %3292 = vrot.lane.b32.xlu0 %v3210, 80
      %v3293 = vpop.permute.xlu0 %3292
      %3294 = vrot.lane.b32.xlu0 %v3211, 80
      %v3295 = vpop.permute.xlu0 %3294
      %3296 = vrot.lane.b32.xlu0 %v3212, 80
      %v3297 = vpop.permute.xlu0 %3296
      %3298 = vrot.lane.b32.xlu0 %v3213, 80
      %v3299 = vpop.permute.xlu0 %3298
      %3300 = vrot.lane.b32.xlu0 %v3214, 80
      %v3301 = vpop.permute.xlu0 %3300
      %3302 = vrot.lane.b32.xlu0 %v3215, 80
      %v3303 = vpop.permute.xlu0 %3302
      %3304 = vrot.lane.b32.xlu0 %v3216, 80
      %v3305 = vpop.permute.xlu0 %3304
      %3306 = vrot.lane.b32.xlu0 %v3217, 80
      %v3307 = vpop.permute.xlu0 %3306
      %3308 = vrot.lane.b32.xlu0 %v3218, 80
      %v3309 = vpop.permute.xlu0 %3308
      %3310 = vrot.lane.b32.xlu0 %v3219, 80
      %v3311 = vpop.permute.xlu0 %3310
      %3312 = vrot.lane.b32.xlu0 %v3220, 80
      %v3313 = vpop.permute.xlu0 %3312
      %3314 = vrot.lane.b32.xlu0 %v3221, 80
      %v3315 = vpop.permute.xlu0 %3314
      %3316 = vrot.lane.b32.xlu0 %v3222, 80
      %v3317 = vpop.permute.xlu0 %3316
      %3318 = vrot.lane.b32.xlu0 %v3223, 80
      %v3319 = vpop.permute.xlu0 %3318
      %v3352 = vmax.f32 %v3032, %v3257
      %v3353 = vmax.f32 %v3033, %v3259
      %v3354 = vmax.f32 %v3034, %v3261
      %v3355 = vmax.f32 %v3035, %v3263
      %v3356 = vmax.f32 %v3036, %v3265
      %v3357 = vmax.f32 %v3037, %v3267
      %v3358 = vmax.f32 %v3038, %v3269
      %v3359 = vmax.f32 %v3039, %v3271
      %v3360 = vmax.f32 %v3040, %v3273
      %v3361 = vmax.f32 %v3041, %v3275
      %v3362 = vmax.f32 %v3042, %v3277
      %v3363 = vmax.f32 %v3043, %v3279
      %v3364 = vmax.f32 %v3044, %v3281
      %v3365 = vmax.f32 %v3045, %v3283
      %v3366 = vmax.f32 %v3046, %v3285
      %v3367 = vmax.f32 %v3047, %v3287
      %v3368 = vmax.f32 %v3048, %v3289
      %v3369 = vmax.f32 %v3049, %v3291
      %v3370 = vmax.f32 %v3050, %v3293
      %v3371 = vmax.f32 %v3051, %v3295
      %v3372 = vmax.f32 %v3052, %v3297
      %v3373 = vmax.f32 %v3053, %v3299
      %v3374 = vmax.f32 %v3054, %v3301
      %v3375 = vmax.f32 %v3055, %v3303
      %v3376 = vmax.f32 %v3056, %v3305
      %v3377 = vmax.f32 %v3057, %v3307
      %v3378 = vmax.f32 %v3058, %v3309
      %v3379 = vmax.f32 %v3059, %v3311
      %v3380 = vmax.f32 %v3060, %v3313
      %v3381 = vmax.f32 %v3061, %v3315
      %v3382 = vmax.f32 %v3062, %v3317
      %v3383 = vmax.f32 %v3063, %v3319
      %v3384 = vld [vmem:[%s3] sm:$0xf]
      %3417 = vrot.lane.b32.xlu0 %v3352, 104
      %v3418 = vpop.permute.xlu0 %3417
      %3419 = vrot.lane.b32.xlu0 %v3353, 104
      %v3420 = vpop.permute.xlu0 %3419
      %3421 = vrot.lane.b32.xlu0 %v3354, 104
      %v3422 = vpop.permute.xlu0 %3421
      %3423 = vrot.lane.b32.xlu0 %v3355, 104
      %v3424 = vpop.permute.xlu0 %3423
      %3425 = vrot.lane.b32.xlu0 %v3356, 104
      %v3426 = vpop.permute.xlu0 %3425
      %3427 = vrot.lane.b32.xlu0 %v3357, 104
      %v3428 = vpop.permute.xlu0 %3427
      %3429 = vrot.lane.b32.xlu0 %v3358, 104
      %v3430 = vpop.permute.xlu0 %3429
      %3431 = vrot.lane.b32.xlu0 %v3359, 104
      %v3432 = vpop.permute.xlu0 %3431
      %3433 = vrot.lane.b32.xlu0 %v3360, 104
      %v3434 = vpop.permute.xlu0 %3433
      %3435 = vrot.lane.b32.xlu0 %v3361, 104
      %v3436 = vpop.permute.xlu0 %3435
      %3437 = vrot.lane.b32.xlu0 %v3362, 104
      %v3438 = vpop.permute.xlu0 %3437
      %3439 = vrot.lane.b32.xlu0 %v3363, 104
      %v3440 = vpop.permute.xlu0 %3439
      %3441 = vrot.lane.b32.xlu0 %v3364, 104
      %v3442 = vpop.permute.xlu0 %3441
      %3443 = vrot.lane.b32.xlu0 %v3365, 104
      %v3444 = vpop.permute.xlu0 %3443
      %3445 = vrot.lane.b32.xlu0 %v3366, 104
      %v3446 = vpop.permute.xlu0 %3445
      %3447 = vrot.lane.b32.xlu0 %v3367, 104
      %v3448 = vpop.permute.xlu0 %3447
      %3449 = vrot.lane.b32.xlu0 %v3368, 104
      %v3450 = vpop.permute.xlu0 %3449
      %3451 = vrot.lane.b32.xlu0 %v3369, 104
      %v3452 = vpop.permute.xlu0 %3451
      %3453 = vrot.lane.b32.xlu0 %v3370, 104
      %v3454 = vpop.permute.xlu0 %3453
      %3455 = vrot.lane.b32.xlu0 %v3371, 104
      %v3456 = vpop.permute.xlu0 %3455
      %3457 = vrot.lane.b32.xlu0 %v3372, 104
      %v3458 = vpop.permute.xlu0 %3457
      %3459 = vrot.lane.b32.xlu0 %v3373, 104
      %v3460 = vpop.permute.xlu0 %3459
      %3461 = vrot.lane.b32.xlu0 %v3374, 104
      %v3462 = vpop.permute.xlu0 %3461
      %3463 = vrot.lane.b32.xlu0 %v3375, 104
      %v3464 = vpop.permute.xlu0 %3463
      %3465 = vrot.lane.b32.xlu0 %v3376, 104
      %v3466 = vpop.permute.xlu0 %3465
      %3467 = vrot.lane.b32.xlu0 %v3377, 104
      %v3468 = vpop.permute.xlu0 %3467
      %3469 = vrot.lane.b32.xlu0 %v3378, 104
      %v3470 = vpop.permute.xlu0 %3469
      %3471 = vrot.lane.b32.xlu0 %v3379, 104
      %v3472 = vpop.permute.xlu0 %3471
      %3473 = vrot.lane.b32.xlu0 %v3380, 104
      %v3474 = vpop.permute.xlu0 %3473
      %3475 = vrot.lane.b32.xlu0 %v3381, 104
      %v3476 = vpop.permute.xlu0 %3475
      %3477 = vrot.lane.b32.xlu0 %v3382, 104
      %v3478 = vpop.permute.xlu0 %3477
      %3479 = vrot.lane.b32.xlu0 %v3383, 104
      %v3480 = vpop.permute.xlu0 %3479
      %vm3481 = vcmask 31744
      %v3482 = vsel %vm3481, %v3418, 0
      %v3484 = vsel %vm3481, %v3420, 0
      %v3486 = vsel %vm3481, %v3422, 0
      %v3488 = vsel %vm3481, %v3424, 0
      %v3490 = vsel %vm3481, %v3426, 0
      %v3492 = vsel %vm3481, %v3428, 0
      %v3494 = vsel %vm3481, %v3430, 0
      %v3496 = vsel %vm3481, %v3432, 0
      %v3498 = vsel %vm3481, %v3434, 0
      %v3500 = vsel %vm3481, %v3436, 0
      %v3502 = vsel %vm3481, %v3438, 0
      %v3504 = vsel %vm3481, %v3440, 0
      %v3506 = vsel %vm3481, %v3442, 0
      %v3508 = vsel %vm3481, %v3444, 0
      %v3510 = vsel %vm3481, %v3446, 0
      %v3512 = vsel %vm3481, %v3448, 0
      %v3514 = vsel %vm3481, %v3450, 0
      %v3516 = vsel %vm3481, %v3452, 0
      %v3518 = vsel %vm3481, %v3454, 0
      %v3520 = vsel %vm3481, %v3456, 0
      %v3522 = vsel %vm3481, %v3458, 0
      %v3524 = vsel %vm3481, %v3460, 0
      %v3526 = vsel %vm3481, %v3462, 0
      %v3528 = vsel %vm3481, %v3464, 0
      %v3530 = vsel %vm3481, %v3466, 0
      %v3532 = vsel %vm3481, %v3468, 0
      %v3534 = vsel %vm3481, %v3470, 0
      %v3536 = vsel %vm3481, %v3472, 0
      %v3538 = vsel %vm3481, %v3474, 0
      %v3540 = vsel %vm3481, %v3476, 0
      %v3542 = vsel %vm3481, %v3478, 0
      %v3544 = vsel %vm3481, %v3480, 0
      %vm3546 = vcmask 1043456
      %v3548 = vsel %vm3546, %v3384, 0
      %3550 = vmatpush.msra.mxu0 0.0
      %3551 = vmatpush.msra.mxu0 0.0
      %3552 = vmatpush.msra.mxu0 0.0
      %3553 = vmatpush.msra.mxu0 0.0
      %3554 = vmatpush.msra.mxu0 0.0
      %3555 = vmatpush.msra.mxu0 0.0
      %3556 = vmatpush.msra.mxu0 0.0
      %3557 = vmatpush.msra.mxu0 0.0
      %3558 = vmatpush.msra.mxu0 0.0
      %3559 = vmatpush.msra.mxu0 0.0
      %3560 = vmatpush.msra.mxu0 0.0
      %3561 = vmatpush.msra.mxu0 0.0
      %3562 = vmatpush.msra.mxu0 0.0
      %3563 = vmatpush.msra.mxu0 0.0
      %3564 = vmatpush.msra.mxu0 0.0
      %3565 = vmatpush.msra.mxu0 %v3548
      %3566 = vmatmul.f32.gmra.mxu0 %v3482
      %v3567 = vpop.f32.mrf.mxu0
      %v3568 = vadd.f32 0.0, %v3567
      %3569 = vmatmul.f32.gmra.mxu0 %v3484
      %v3570 = vpop.f32.mrf.mxu0
      %v3571 = vadd.f32 0.0, %v3570
      %3572 = vmatmul.f32.gmra.mxu0 %v3486
      %v3573 = vpop.f32.mrf.mxu0
      %v3574 = vadd.f32 0.0, %v3573
      %3575 = vmatmul.f32.gmra.mxu0 %v3488
      %v3576 = vpop.f32.mrf.mxu0
      %v3577 = vadd.f32 0.0, %v3576
      %3578 = vmatmul.f32.gmra.mxu0 %v3490
      %v3579 = vpop.f32.mrf.mxu0
      %v3580 = vadd.f32 0.0, %v3579
      %3581 = vmatmul.f32.gmra.mxu0 %v3492
      %v3582 = vpop.f32.mrf.mxu0
      %v3583 = vadd.f32 0.0, %v3582
      %3584 = vmatmul.f32.gmra.mxu0 %v3494
      %v3585 = vpop.f32.mrf.mxu0
      %v3586 = vadd.f32 0.0, %v3585
      %3587 = vmatmul.f32.gmra.mxu0 %v3496
      %v3588 = vpop.f32.mrf.mxu0
      %v3589 = vadd.f32 0.0, %v3588
      %3590 = vmatmul.f32.gmra.mxu0 %v3498
      %v3591 = vpop.f32.mrf.mxu0
      %v3592 = vadd.f32 0.0, %v3591
      %3593 = vmatmul.f32.gmra.mxu0 %v3500
      %v3594 = vpop.f32.mrf.mxu0
      %v3595 = vadd.f32 0.0, %v3594
      %3596 = vmatmul.f32.gmra.mxu0 %v3502
      %v3597 = vpop.f32.mrf.mxu0
      %v3598 = vadd.f32 0.0, %v3597
      %3599 = vmatmul.f32.gmra.mxu0 %v3504
      %v3600 = vpop.f32.mrf.mxu0
      %v3601 = vadd.f32 0.0, %v3600
      %3602 = vmatmul.f32.gmra.mxu0 %v3506
      %v3603 = vpop.f32.mrf.mxu0
      %v3604 = vadd.f32 0.0, %v3603
      %3605 = vmatmul.f32.gmra.mxu0 %v3508
      %v3606 = vpop.f32.mrf.mxu0
      %v3607 = vadd.f32 0.0, %v3606
      %3608 = vmatmul.f32.gmra.mxu0 %v3510
      %v3609 = vpop.f32.mrf.mxu0
      %v3610 = vadd.f32 0.0, %v3609
      %3611 = vmatmul.f32.gmra.mxu0 %v3512
      %v3612 = vpop.f32.mrf.mxu0
      %v3613 = vadd.f32 0.0, %v3612
      %3614 = vmatmul.f32.gmra.mxu0 %v3514
      %v3615 = vpop.f32.mrf.mxu0
      %v3616 = vadd.f32 0.0, %v3615
      %3617 = vmatmul.f32.gmra.mxu0 %v3516
      %v3618 = vpop.f32.mrf.mxu0
      %v3619 = vadd.f32 0.0, %v3618
      %3620 = vmatmul.f32.gmra.mxu0 %v3518
      %v3621 = vpop.f32.mrf.mxu0
      %v3622 = vadd.f32 0.0, %v3621
      %3623 = vmatmul.f32.gmra.mxu0 %v3520
      %v3624 = vpop.f32.mrf.mxu0
      %v3625 = vadd.f32 0.0, %v3624
      %3626 = vmatmul.f32.gmra.mxu0 %v3522
      %v3627 = vpop.f32.mrf.mxu0
      %v3628 = vadd.f32 0.0, %v3627
      %3629 = vmatmul.f32.gmra.mxu0 %v3524
      %v3630 = vpop.f32.mrf.mxu0
      %v3631 = vadd.f32 0.0, %v3630
      %3632 = vmatmul.f32.gmra.mxu0 %v3526
      %v3633 = vpop.f32.mrf.mxu0
      %v3634 = vadd.f32 0.0, %v3633
      %3635 = vmatmul.f32.gmra.mxu0 %v3528
      %v3636 = vpop.f32.mrf.mxu0
      %v3637 = vadd.f32 0.0, %v3636
      %3638 = vmatmul.f32.gmra.mxu0 %v3530
      %v3639 = vpop.f32.mrf.mxu0
      %v3640 = vadd.f32 0.0, %v3639
      %3641 = vmatmul.f32.gmra.mxu0 %v3532
      %v3642 = vpop.f32.mrf.mxu0
      %v3643 = vadd.f32 0.0, %v3642
      %3644 = vmatmul.f32.gmra.mxu0 %v3534
      %v3645 = vpop.f32.mrf.mxu0
      %v3646 = vadd.f32 0.0, %v3645
      %3647 = vmatmul.f32.gmra.mxu0 %v3536
      %v3648 = vpop.f32.mrf.mxu0
      %v3649 = vadd.f32 0.0, %v3648
      %3650 = vmatmul.f32.gmra.mxu0 %v3538
      %v3651 = vpop.f32.mrf.mxu0
      %v3652 = vadd.f32 0.0, %v3651
      %3653 = vmatmul.f32.gmra.mxu0 %v3540
      %v3654 = vpop.f32.mrf.mxu0
      %v3655 = vadd.f32 0.0, %v3654
      %3656 = vmatmul.f32.gmra.mxu0 %v3542
      %v3657 = vpop.f32.mrf.mxu0
      %v3658 = vadd.f32 0.0, %v3657
      %3659 = vmatmul.f32.gmra.mxu0 %v3544
      %v3660 = vpop.f32.mrf.mxu0
      %v3661 = vadd.f32 0.0, %v3660
      %3662 = vdwg.mxu0
      %3695 = vrot.lane.b32.xlu0 %v3568, 32
      %v3696 = vpop.permute.xlu0 %3695
      %3697 = vrot.lane.b32.xlu0 %v3571, 32
      %v3698 = vpop.permute.xlu0 %3697
      %3699 = vrot.lane.b32.xlu0 %v3574, 32
      %v3700 = vpop.permute.xlu0 %3699
      %3701 = vrot.lane.b32.xlu0 %v3577, 32
      %v3702 = vpop.permute.xlu0 %3701
      %3703 = vrot.lane.b32.xlu0 %v3580, 32
      %v3704 = vpop.permute.xlu0 %3703
      %3705 = vrot.lane.b32.xlu0 %v3583, 32
      %v3706 = vpop.permute.xlu0 %3705
      %3707 = vrot.lane.b32.xlu0 %v3586, 32
      %v3708 = vpop.permute.xlu0 %3707
      %3709 = vrot.lane.b32.xlu0 %v3589, 32
      %v3710 = vpop.permute.xlu0 %3709
      %3711 = vrot.lane.b32.xlu0 %v3592, 32
      %v3712 = vpop.permute.xlu0 %3711
      %3713 = vrot.lane.b32.xlu0 %v3595, 32
      %v3714 = vpop.permute.xlu0 %3713
      %3715 = vrot.lane.b32.xlu0 %v3598, 32
      %v3716 = vpop.permute.xlu0 %3715
      %3717 = vrot.lane.b32.xlu0 %v3601, 32
      %v3718 = vpop.permute.xlu0 %3717
      %3719 = vrot.lane.b32.xlu0 %v3604, 32
      %v3720 = vpop.permute.xlu0 %3719
      %3721 = vrot.lane.b32.xlu0 %v3607, 32
      %v3722 = vpop.permute.xlu0 %3721
      %3723 = vrot.lane.b32.xlu0 %v3610, 32
      %v3724 = vpop.permute.xlu0 %3723
      %3725 = vrot.lane.b32.xlu0 %v3613, 32
      %v3726 = vpop.permute.xlu0 %3725
      %3727 = vrot.lane.b32.xlu0 %v3616, 32
      %v3728 = vpop.permute.xlu0 %3727
      %3729 = vrot.lane.b32.xlu0 %v3619, 32
      %v3730 = vpop.permute.xlu0 %3729
      %3731 = vrot.lane.b32.xlu0 %v3622, 32
      %v3732 = vpop.permute.xlu0 %3731
      %3733 = vrot.lane.b32.xlu0 %v3625, 32
      %v3734 = vpop.permute.xlu0 %3733
      %3735 = vrot.lane.b32.xlu0 %v3628, 32
      %v3736 = vpop.permute.xlu0 %3735
      %3737 = vrot.lane.b32.xlu0 %v3631, 32
      %v3738 = vpop.permute.xlu0 %3737
      %3739 = vrot.lane.b32.xlu0 %v3634, 32
      %v3740 = vpop.permute.xlu0 %3739
      %3741 = vrot.lane.b32.xlu0 %v3637, 32
      %v3742 = vpop.permute.xlu0 %3741
      %3743 = vrot.lane.b32.xlu0 %v3640, 32
      %v3744 = vpop.permute.xlu0 %3743
      %3745 = vrot.lane.b32.xlu0 %v3643, 32
      %v3746 = vpop.permute.xlu0 %3745
      %3747 = vrot.lane.b32.xlu0 %v3646, 32
      %v3748 = vpop.permute.xlu0 %3747
      %3749 = vrot.lane.b32.xlu0 %v3649, 32
      %v3750 = vpop.permute.xlu0 %3749
      %3751 = vrot.lane.b32.xlu0 %v3652, 32
      %v3752 = vpop.permute.xlu0 %3751
      %3753 = vrot.lane.b32.xlu0 %v3655, 32
      %v3754 = vpop.permute.xlu0 %3753
      %3755 = vrot.lane.b32.xlu0 %v3658, 32
      %v3756 = vpop.permute.xlu0 %3755
      %3757 = vrot.lane.b32.xlu0 %v3661, 32
      %v3758 = vpop.permute.xlu0 %3757
      %vm3791 = vcmask 261120
      %v3792 = vsel %vm3791, %v489, %v3696
      %v3793 = vsel %vm3791, %v491, %v3698
      %v3794 = vsel %vm3791, %v494, %v3700
      %v3795 = vsel %vm3791, %v496, %v3702
      %v3796 = vsel %vm3791, %v499, %v3704
      %v3797 = vsel %vm3791, %v501, %v3706
      %v3798 = vsel %vm3791, %v504, %v3708
      %v3799 = vsel %vm3791, %v506, %v3710
      %v3800 = vsel %vm3791, %v509, %v3712
      %v3801 = vsel %vm3791, %v511, %v3714
      %v3802 = vsel %vm3791, %v514, %v3716
      %v3803 = vsel %vm3791, %v516, %v3718
      %v3804 = vsel %vm3791, %v519, %v3720
      %v3805 = vsel %vm3791, %v521, %v3722
      %v3806 = vsel %vm3791, %v524, %v3724
      %v3807 = vsel %vm3791, %v526, %v3726
      %v3808 = vsel %vm3791, %v529, %v3728
      %v3809 = vsel %vm3791, %v531, %v3730
      %v3810 = vsel %vm3791, %v534, %v3732
      %v3811 = vsel %vm3791, %v536, %v3734
      %v3812 = vsel %vm3791, %v539, %v3736
      %v3813 = vsel %vm3791, %v541, %v3738
      %v3814 = vsel %vm3791, %v544, %v3740
      %v3815 = vsel %vm3791, %v546, %v3742
      %v3816 = vsel %vm3791, %v549, %v3744
      %v3817 = vsel %vm3791, %v551, %v3746
      %v3818 = vsel %vm3791, %v554, %v3748
      %v3819 = vsel %vm3791, %v556, %v3750
      %v3820 = vsel %vm3791, %v559, %v3752
      %v3821 = vsel %vm3791, %v561, %v3754
      %v3822 = vsel %vm3791, %v564, %v3756
      %v3823 = vsel %vm3791, %v566, %v3758
      %vm3824 = vcmask 326656
      %3825 = vst.msk [vmem:[%s255] sm:$0xff] %vm3824, %v3792
      %3826 = vst.msk [vmem:[%s255 + $0x8] sm:$0xff] %vm3824, %v3793
      %3827 = vst.msk [vmem:[%s255 + $0x10] sm:$0xff] %vm3824, %v3794
      %3828 = vst.msk [vmem:[%s255 + $0x18] sm:$0xff] %vm3824, %v3795
      %3829 = vst.msk [vmem:[%s255 + $0x20] sm:$0xff] %vm3824, %v3796
      %3830 = vst.msk [vmem:[%s255 + $0x28] sm:$0xff] %vm3824, %v3797
      %3831 = vst.msk [vmem:[%s255 + $0x30] sm:$0xff] %vm3824, %v3798
      %3832 = vst.msk [vmem:[%s255 + $0x38] sm:$0xff] %vm3824, %v3799
      %3833 = vst.msk [vmem:[%s255 + $0x40] sm:$0xff] %vm3824, %v3800
      %3834 = vst.msk [vmem:[%s255 + $0x48] sm:$0xff] %vm3824, %v3801
      %3835 = vst.msk [vmem:[%s255 + $0x50] sm:$0xff] %vm3824, %v3802
      %3836 = vst.msk [vmem:[%s255 + $0x58] sm:$0xff] %vm3824, %v3803
      %3837 = vst.msk [vmem:[%s255 + $0x60] sm:$0xff] %vm3824, %v3804
      %3838 = vst.msk [vmem:[%s255 + $0x68] sm:$0xff] %vm3824, %v3805
      %3839 = vst.msk [vmem:[%s255 + $0x70] sm:$0xff] %vm3824, %v3806
      %3840 = vst.msk [vmem:[%s255 + $0x78] sm:$0xff] %vm3824, %v3807
      %3841 = vst.msk [vmem:[%s255 + $0x80] sm:$0xff] %vm3824, %v3808
      %3842 = vst.msk [vmem:[%s255 + $0x88] sm:$0xff] %vm3824, %v3809
      %3843 = vst.msk [vmem:[%s255 + $0x90] sm:$0xff] %vm3824, %v3810
      %3844 = vst.msk [vmem:[%s255 + $0x98] sm:$0xff] %vm3824, %v3811
      %3845 = vst.msk [vmem:[%s255 + $0xa0] sm:$0xff] %vm3824, %v3812
      %3846 = vst.msk [vmem:[%s255 + $0xa8] sm:$0xff] %vm3824, %v3813
      %3847 = vst.msk [vmem:[%s255 + $0xb0] sm:$0xff] %vm3824, %v3814
      %3848 = vst.msk [vmem:[%s255 + $0xb8] sm:$0xff] %vm3824, %v3815
      %3849 = vst.msk [vmem:[%s255 + $0xc0] sm:$0xff] %vm3824, %v3816
      %3850 = vst.msk [vmem:[%s255 + $0xc8] sm:$0xff] %vm3824, %v3817
      %3851 = vst.msk [vmem:[%s255 + $0xd0] sm:$0xff] %vm3824, %v3818
      %3852 = vst.msk [vmem:[%s255 + $0xd8] sm:$0xff] %vm3824, %v3819
      %3853 = vst.msk [vmem:[%s255 + $0xe0] sm:$0xff] %vm3824, %v3820
      %3854 = vst.msk [vmem:[%s255 + $0xe8] sm:$0xff] %vm3824, %v3821
      %3855 = vst.msk [vmem:[%s255 + $0xf0] sm:$0xff] %vm3824, %v3822
      %3856 = vst.msk [vmem:[%s255 + $0xf8] sm:$0xff] %vm3824, %v3823
      %v3857 = vsel %vm3824, %v3792, 0.0
      %v3858 = vsel %vm3824, %v3793, 0.0
      %v3859 = vadd.f32 %v3857, %v3858
      %v3860 = vsel %vm3824, %v3794, 0.0
      %v3861 = vadd.f32 %v3859, %v3860
      %v3862 = vsel %vm3824, %v3795, 0.0
      %v3863 = vadd.f32 %v3861, %v3862
      %v3864 = vsel %vm3824, %v3796, 0.0
      %v3865 = vadd.f32 %v3863, %v3864
      %v3866 = vsel %vm3824, %v3797, 0.0
      %v3867 = vadd.f32 %v3865, %v3866
      %v3868 = vsel %vm3824, %v3798, 0.0
      %v3869 = vadd.f32 %v3867, %v3868
      %v3870 = vsel %vm3824, %v3799, 0.0
      %v3871 = vadd.f32 %v3869, %v3870
      %v3872 = vsel %vm3824, %v3800, 0.0
      %v3873 = vadd.f32 %v3871, %v3872
      %v3874 = vsel %vm3824, %v3801, 0.0
      %v3875 = vadd.f32 %v3873, %v3874
      %v3876 = vsel %vm3824, %v3802, 0.0
      %v3877 = vadd.f32 %v3875, %v3876
      %v3878 = vsel %vm3824, %v3803, 0.0
      %v3879 = vadd.f32 %v3877, %v3878
      %v3880 = vsel %vm3824, %v3804, 0.0
      %v3881 = vadd.f32 %v3879, %v3880
      %v3882 = vsel %vm3824, %v3805, 0.0
      %v3883 = vadd.f32 %v3881, %v3882
      %v3884 = vsel %vm3824, %v3806, 0.0
      %v3885 = vadd.f32 %v3883, %v3884
      %v3886 = vsel %vm3824, %v3807, 0.0
      %v3887 = vadd.f32 %v3885, %v3886
      %v3888 = vsel %vm3824, %v3808, 0.0
      %v3889 = vadd.f32 %v3887, %v3888
      %v3890 = vsel %vm3824, %v3809, 0.0
      %v3891 = vadd.f32 %v3889, %v3890
      %v3892 = vsel %vm3824, %v3810, 0.0
      %v3893 = vadd.f32 %v3891, %v3892
      %v3894 = vsel %vm3824, %v3811, 0.0
      %v3895 = vadd.f32 %v3893, %v3894
      %v3896 = vsel %vm3824, %v3812, 0.0
      %v3897 = vadd.f32 %v3895, %v3896
      %v3898 = vsel %vm3824, %v3813, 0.0
      %v3899 = vadd.f32 %v3897, %v3898
      %v3900 = vsel %vm3824, %v3814, 0.0
      %v3901 = vadd.f32 %v3899, %v3900
      %v3902 = vsel %vm3824, %v3815, 0.0
      %v3903 = vadd.f32 %v3901, %v3902
      %v3904 = vsel %vm3824, %v3816, 0.0
      %v3905 = vadd.f32 %v3903, %v3904
      %v3906 = vsel %vm3824, %v3817, 0.0
      %v3907 = vadd.f32 %v3905, %v3906
      %v3908 = vsel %vm3824, %v3818, 0.0
      %v3909 = vadd.f32 %v3907, %v3908
      %v3910 = vsel %vm3824, %v3819, 0.0
      %v3911 = vadd.f32 %v3909, %v3910
      %v3912 = vsel %vm3824, %v3820, 0.0
      %v3913 = vadd.f32 %v3911, %v3912
      %v3914 = vsel %vm3824, %v3821, 0.0
      %v3915 = vadd.f32 %v3913, %v3914
      %v3916 = vsel %vm3824, %v3822, 0.0
      %v3917 = vadd.f32 %v3915, %v3916
      %v3918 = vsel %vm3824, %v3823, 0.0
      %v3919 = vadd.f32 %v3917, %v3918
      %v3920 = vrot.slane %v3919, 4
      %v3921 = vadd.f32 %v3919, %v3920
      %v3922 = vrot.slane %v3921, 2
      %v3923 = vadd.f32 %v3921, %v3922
      %v3924 = vrot.slane %v3923, 1
      %v3925 = vadd.f32 %v3923, %v3924
      %v3926 = vmul.f32 %v3792, %v3792
      %v3927 = vmul.f32 %v3793, %v3793
      %v3928 = vmul.f32 %v3794, %v3794
      %v3929 = vmul.f32 %v3795, %v3795
      %v3930 = vmul.f32 %v3796, %v3796
      %v3931 = vmul.f32 %v3797, %v3797
      %v3932 = vmul.f32 %v3798, %v3798
      %v3933 = vmul.f32 %v3799, %v3799
      %v3934 = vmul.f32 %v3800, %v3800
      %v3935 = vmul.f32 %v3801, %v3801
      %v3936 = vmul.f32 %v3802, %v3802
      %v3937 = vmul.f32 %v3803, %v3803
      %v3938 = vmul.f32 %v3804, %v3804
      %v3939 = vmul.f32 %v3805, %v3805
      %v3940 = vmul.f32 %v3806, %v3806
      %v3941 = vmul.f32 %v3807, %v3807
      %v3942 = vmul.f32 %v3808, %v3808
      %v3943 = vmul.f32 %v3809, %v3809
      %v3944 = vmul.f32 %v3810, %v3810
      %v3945 = vmul.f32 %v3811, %v3811
      %v3946 = vmul.f32 %v3812, %v3812
      %v3947 = vmul.f32 %v3813, %v3813
      %v3948 = vmul.f32 %v3814, %v3814
      %v3949 = vmul.f32 %v3815, %v3815
      %v3950 = vmul.f32 %v3816, %v3816
      %v3951 = vmul.f32 %v3817, %v3817
      %v3952 = vmul.f32 %v3818, %v3818
      %v3953 = vmul.f32 %v3819, %v3819
      %v3954 = vmul.f32 %v3820, %v3820
      %v3955 = vmul.f32 %v3821, %v3821
      %v3956 = vmul.f32 %v3822, %v3822
      %v3957 = vmul.f32 %v3823, %v3823
      %v3958 = vsel %vm3824, %v3926, 0.0
      %v3959 = vsel %vm3824, %v3927, 0.0
      %v3960 = vadd.f32 %v3958, %v3959
      %v3961 = vsel %vm3824, %v3928, 0.0
      %v3962 = vadd.f32 %v3960, %v3961
      %v3963 = vsel %vm3824, %v3929, 0.0
      %v3964 = vadd.f32 %v3962, %v3963
      %v3965 = vsel %vm3824, %v3930, 0.0
      %v3966 = vadd.f32 %v3964, %v3965
      %v3967 = vsel %vm3824, %v3931, 0.0
      %v3968 = vadd.f32 %v3966, %v3967
      %v3969 = vsel %vm3824, %v3932, 0.0
      %v3970 = vadd.f32 %v3968, %v3969
      %v3971 = vsel %vm3824, %v3933, 0.0
      %v3972 = vadd.f32 %v3970, %v3971
      %v3973 = vsel %vm3824, %v3934, 0.0
      %v3974 = vadd.f32 %v3972, %v3973
      %v3975 = vsel %vm3824, %v3935, 0.0
      %v3976 = vadd.f32 %v3974, %v3975
      %v3977 = vsel %vm3824, %v3936, 0.0
      %v3978 = vadd.f32 %v3976, %v3977
      %v3979 = vsel %vm3824, %v3937, 0.0
      %v3980 = vadd.f32 %v3978, %v3979
      %v3981 = vsel %vm3824, %v3938, 0.0
      %v3982 = vadd.f32 %v3980, %v3981
      %v3983 = vsel %vm3824, %v3939, 0.0
      %v3984 = vadd.f32 %v3982, %v3983
      %v3985 = vsel %vm3824, %v3940, 0.0
      %v3986 = vadd.f32 %v3984, %v3985
      %v3987 = vsel %vm3824, %v3941, 0.0
      %v3988 = vadd.f32 %v3986, %v3987
      %v3989 = vsel %vm3824, %v3942, 0.0
      %v3990 = vadd.f32 %v3988, %v3989
      %v3991 = vsel %vm3824, %v3943, 0.0
      %v3992 = vadd.f32 %v3990, %v3991
      %v3993 = vsel %vm3824, %v3944, 0.0
      %v3994 = vadd.f32 %v3992, %v3993
      %v3995 = vsel %vm3824, %v3945, 0.0
      %v3996 = vadd.f32 %v3994, %v3995
      %v3997 = vsel %vm3824, %v3946, 0.0
      %v3998 = vadd.f32 %v3996, %v3997
      %v3999 = vsel %vm3824, %v3947, 0.0
      %v4000 = vadd.f32 %v3998, %v3999
      %v4001 = vsel %vm3824, %v3948, 0.0
      %v4002 = vadd.f32 %v4000, %v4001
      %v4003 = vsel %vm3824, %v3949, 0.0
      %v4004 = vadd.f32 %v4002, %v4003
      %v4005 = vsel %vm3824, %v3950, 0.0
      %v4006 = vadd.f32 %v4004, %v4005
      %v4007 = vsel %vm3824, %v3951, 0.0
      %v4008 = vadd.f32 %v4006, %v4007
      %v4009 = vsel %vm3824, %v3952, 0.0
      %v4010 = vadd.f32 %v4008, %v4009
      %v4011 = vsel %vm3824, %v3953, 0.0
      %v4012 = vadd.f32 %v4010, %v4011
      %v4013 = vsel %vm3824, %v3954, 0.0
      %v4014 = vadd.f32 %v4012, %v4013
      %v4015 = vsel %vm3824, %v3955, 0.0
      %v4016 = vadd.f32 %v4014, %v4015
      %v4017 = vsel %vm3824, %v3956, 0.0
      %v4018 = vadd.f32 %v4016, %v4017
      %v4019 = vsel %vm3824, %v3957, 0.0
      %v4020 = vadd.f32 %v4018, %v4019
      %v4021 = vrot.slane %v4020, 4
      %v4022 = vadd.f32 %v4020, %v4021
      %v4023 = vrot.slane %v4022, 2
      %v4024 = vadd.f32 %v4022, %v4023
      %v4025 = vrot.slane %v4024, 1
      %v4026 = vadd.f32 %v4024, %v4025
      %v4027 = vlaneseq
      %v4028 = vshrl.u32 %v4027, 7
      %vm4029 = vcmp.eq.s32.totalorder %v4028, 0
      %vm4030 = vcmp.eq.s32.totalorder %v4028, 1
      %v4031 = vsel %vm4030, 1, 0
      %vm4032 = vcmp.eq.s32.totalorder %v4031, 1
      %v4033 = vsel %vm4032, %v4026, 0.0
      %v4034 = vsel %vm4029, 1, 0
      %vm4035 = vcmp.eq.s32.totalorder %v4034, 1
      %v4036 = vsel %vm4035, %v3925, %v4033
      %4037 = vst.msk [vmem:[%s260] sm:$0xff] %vm3824, %v4036
      %s4038 = smul.u32 32, %s17
      %p4039 = scmp.lt.s32.totalorder %s4038, 63
      %s4040 = scalar_select %p4039, %s4038, 63
      %s4041 = smul.addr %s4040, 8
      %s4042 = scalar_lea.vmem %s4, %s4041
      %p4043 = scmp.lt.s32.totalorder %s17, 1
      %s4044 = scalar_select %p4043, %s17, 1
      %s4045 = smul.addr %s4044, 8
      %s4046 = scalar_lea.vmem %s5, %s4045
      // Predicated region
      $region37: #{darts_cell_forward.2} parent=35 // pred_check
        %p4047 = pneg %p129
      $region38: #{darts_cell_forward.2} parent=35 // pred_check_branch
        %4049 = sbr.rel (%p4047) target = $region40
      $region39: #{darts_cell_forward.2} parent=35 // pred_region
        %s4050 = smul.u32 32, %s17
      $region40: #{darts_cell_forward.2} parent=35 // pred_fallthru
        _
      // Predicated region
      $region41: #{darts_cell_forward.2} parent=35 // pred_check
        %p4051 = pneg %p155
      $region42: #{darts_cell_forward.2} parent=35 // pred_check_branch
        %4053 = sbr.rel (%p4051) target = $region44
      $region43: #{darts_cell_forward.2} parent=35 // pred_region
        _
      $region44: #{darts_cell_forward.2} parent=35 // pred_fallthru
        _
    $region36: #{darts_cell_forward.2} parent=5 // pred_fallthru
      _
    %p4054 = scmp.le.s32.totalorder 2, %s12
    // Predicated region
    $region45: #{darts_cell_forward.2} parent=5 // pred_check
      %p4055 = pneg %p4054
    $region46: #{darts_cell_forward.2} parent=5 // pred_check_branch
      %4057 = sbr.rel (%p4055) target = $region48
    $region47: #{darts_cell_forward.2} parent=5 // pred_region
      %s4058 = ssub.s32 %s12, 2
      // Predicated region
      $region49: #{darts_cell_forward.2} parent=47 // pred_check
        %p4059 = pneg %p135
      $region50: #{darts_cell_forward.2} parent=47 // pred_check_branch
        %4061 = sbr.rel (%p4059) target = $region52
      $region51: #{darts_cell_forward.2} parent=47 // pred_region
        %s4062 = smul.u32 32, %s18
        %p4063 = scmp.lt.s32.totalorder %s4062, 63
        %s4064 = scalar_select %p4063, %s4062, 63
        %s4065 = smul.addr %s4064, 8
        %s4066 = scalar_lea.vmem %s4, %s4065
      $region52: #{darts_cell_forward.2} parent=47 // pred_fallthru
        _
      // Predicated region
      $region53: #{darts_cell_forward.2} parent=47 // pred_check
        %p4067 = pneg %p161
      $region54: #{darts_cell_forward.2} parent=47 // pred_check_branch
        %4069 = sbr.rel (%p4067) target = $region56
      $region55: #{darts_cell_forward.2} parent=47 // pred_region
        %p4070 = scmp.lt.s32.totalorder %s18, 1
        %s4071 = scalar_select %p4070, %s18, 1
        %s4072 = smul.addr %s4071, 8
        %s4073 = scalar_lea.vmem %s5, %s4072
      $region56: #{darts_cell_forward.2} parent=47 // pred_fallthru
        _
    $region48: #{darts_cell_forward.2} parent=5 // pred_fallthru
      _
  $region6: #{darts_cell_forward.2} parent=0 // loop_footer
    %s16 = sadd.s32 1, %s12
  $region7: #{darts_cell_forward.2} parent=0 // loop_footer_branch
    %11 = sbr.rel target = $region3
  $region8: #{darts_cell_forward.2} parent=0 // loop_exit
    _

</llo_original>
